<compile_context>
chip_gen: v5e
topology: v5e:2x2
jax: 0.10.0
libtpu: 0.0.40
codegen_flags: <defaults>
</compile_context>

<pallas_src>
import functools
import math

import numpy as np

import jax
import jax.numpy as jnp
from jax.experimental import pallas as pl
from jax.experimental.pallas import tpu as pltpu

EPS = 1e-8

# ----- config (mirrors the module's defaults, at small demo sizes) -----
B = 2                        # batch
L = 16                       # sequence length after dropping BOS/EOS (power of 2)
H = 32                       # esm_h_dim
K1 = 8                       # conv1 / prob_conv1 out channels
K2 = 8                       # conv2 / prob_conv2 out channels
QUANTILES = (0.025, 0.25, 0.5, 0.75, 0.975)
N_STATS = len(QUANTILES) + 1            # mean + quantiles
S_PAD = 8                    # stats rows padded to one sublane tile
M1 = 18
M2 = 9
ESM_SCORES_DIM = 3
TASK_NAMES = ("main", "aux")
N_TASKS = len(TASK_NAMES)
N_AA = 20
USE_REL_EMBEDDINGS = True
USE_REL_PROB_MATRICES = False
FEAT_DIM = (K1 + K2) * N_STATS * 2 + 2 * ESM_SCORES_DIM + 1   # 199
N_TAIL = 2 * ESM_SCORES_DIM + 1
N_SORT_COLS = H + N_AA + 2 * K2          # 68 lanes -> single vreg column group
WIDE = S_PAD * M1                        # 144

_HI = jax.lax.Precision.HIGHEST


# ---------------------------------------------------------------------------
# Row rotation: pltpu.roll (XLU) with auto-detected direction, concat fallback
# ---------------------------------------------------------------------------
_ROLL_MODE = "concat"     # safe default; upgraded by _init_roll_mode()


def _init_roll_mode(n_rows, n_cols):
    """One-time eager probe of pltpu.roll semantics on the sort layout."""
    global _ROLL_MODE
    try:
        def probe(x_ref, o_ref):
            o_ref[...] = pltpu.roll(x_ref[...], 1, axis=0)

        x = jnp.broadcast_to(
            jnp.arange(n_rows, dtype=jnp.float32)[:, None], (n_rows, n_cols))
        out = np.asarray(
            pl.pallas_call(
                probe,
                out_shape=jax.ShapeDtypeStruct((n_rows, n_cols), jnp.float32),
            )(x))
        if out[0, 0] == float(n_rows - 1) and out[1, 0] == 0.0:
            _ROLL_MODE = "np"        # pltpu.roll matches jnp.roll direction
        elif out[0, 0] == 1.0 and out[n_rows - 1, 0] == 0.0:
            _ROLL_MODE = "rev"       # opposite direction
        else:
            _ROLL_MODE = "concat"
    except Exception:                # pltpu.roll unavailable for this layout
        _ROLL_MODE = "concat"


def _shift_up(x, s):
    """result[i] = x[(i + s) % n] along axis 0 (rows)."""
    n = x.shape[0]
    s = s % n
    if s == 0:
        return x
    if _ROLL_MODE == "np":
        return pltpu.roll(x, n - s, axis=0)
    if _ROLL_MODE == "rev":
        return pltpu.roll(x, s, axis=0)
    return jnp.concatenate([x[s:], x[:s]], axis=0)   # known-correct fallback


def _bitonic_sort_rows(x):
    """Ascending per-column sort of x (n, C) along the row axis; n power of 2.

    Compare-exchange on the VPU (min/max/select); partner gathers are sublane
    rotations on the XLU, which is idle while the VALU does the exchanges.
    """
    n = x.shape[0]
    row = jax.lax.broadcasted_iota(jnp.int32, (n, 1), 0)
    k = 2
    while k <= n:
        j = k // 2
        while j >= 1:
            fwd = _shift_up(x, j)        # x[i + j]
            bwd = _shift_up(x, n - j)    # x[i - j]
            low = (row & j) == 0         # this row holds the lower pair element
            part = jnp.where(low, fwd, bwd)          # partner value x[i ^ j]
            keep_min = ((row & k) == 0) == low       # ascending sub-sequence
            x = jnp.where(keep_min, jnp.minimum(x, part), jnp.maximum(x, part))
            j //= 2
        k *= 2
    return x


# ---------------------------------------------------------------------------
# GELU (erf form, matches torch F.gelu); kernel uses an exp-only erf approx
# ---------------------------------------------------------------------------
_ERF_P = 0.3275911
_ERF_A = (0.254829592, -0.284496736, 1.421413741, -1.453152027, 1.061405429)


def _erf_approx(x):
    # Abramowitz & Stegun 7.1.26, |err| <= 1.5e-7; built only from exp/abs/
    # where so it lowers cleanly inside Mosaic (EUP + VPU).
    a1, a2, a3, a4, a5 = _ERF_A
    ax = jnp.abs(x)
    t = 1.0 / (1.0 + _ERF_P * ax)
    poly = ((((a5 * t + a4) * t + a3) * t + a2) * t + a1) * t
    y = 1.0 - poly * jnp.exp(-ax * ax)
    return jnp.where(x >= 0, y, -y)


def _gelu_kernel(x):
    return 0.5 * x * (1.0 + _erf_approx(x * (1.0 / math.sqrt(2.0))))


def _gelu_exact(x):
    return 0.5 * x * (1.0 + jax.lax.erf(x * (1.0 / math.sqrt(2.0))))


def _dot(a, b):
    return jnp.dot(a, b, precision=_HI, preferred_element_type=jnp.float32)


# ---------------------------------------------------------------------------
# Fused forward kernel: one grid step == one batch element
# ---------------------------------------------------------------------------
def _fused_kernel(offs, seqin_ref, wt_ref, tail_ref, slab_ref, out_ref):
    def cst(name):
        off, r, c = offs[name]
        return slab_ref[off:off + r, 0:c]

    # relative features (wt tile pre-masked by the use_rel_* flags wrapper-side)
    # TODO(synk): torch.nanmean/nanquantile NaN skipping has no clean equivalent
    # here; inputs are assumed finite (no padded/NaN positions).
    x = seqin_ref[...] - wt_ref[...]                              # (L, 52)

    # One matmul builds [identity passthrough | conv2 | prob_conv2] -> no
    # in-kernel lane concat, and the conv dot is fused with the "concat".
    comb = _dot(x, cst("extw")) + cst("extb")                     # (L, 68)

    # ONE fused bitonic sort for both stat paths (review item 1)
    xs = _bitonic_sort_rows(comb)                                 # (L, 68)

    # mean + linearly interpolated quantiles == one constant selector matmul
    stats = _dot(cst("sbig"), xs)                                 # (S_PAD, 68)

    # conv1/prob_conv1 + PyTorch's channel-major/stat-minor flatten + fc1 are
    # folded wrapper-side into vcat; diagonal-block extraction uses a constant
    # 0/1 mask multiply + XLU row-sum (review item 3c).
    p = _dot(stats, cst("vcat"))                                  # (S_PAD, 144)
    rowsum = jnp.sum(p * cst("mask"), axis=0, keepdims=True)      # (1, 144)

    # fc1 -> GELU -> fc2 -> GELU -> stacked per-task heads (dropout = identity
    # at eval).  [fold | tail] handled by one stacked matmul (review item 3b).
    h1_in = jnp.concatenate([rowsum, tail_ref[0]], axis=1)        # (1, 151)
    h1 = _gelu_kernel(_dot(h1_in, cst("wh1")) + cst("fc1b"))      # (1, M1)
    h2 = _gelu_kernel(_dot(h1, cst("fc2w")) + cst("fc2b"))        # (1, M2)
    out_ref[0] = _dot(h2, cst("taskw")) + cst("taskb")            # (1, N_TASKS)


# ---------------------------------------------------------------------------
# Wrapper-side constant / weight packing (tiny, plain JAX, outside the kernel)
# ---------------------------------------------------------------------------
def _pack_constants(params, seq_len):
    """Fold convs + flatten into constant matmuls; pack everything in one slab."""
    hn = H + N_AA                                                  # 52

    # [identity | block-diag(conv2, prob_conv2)] 1x1-conv extension
    convw = jnp.concatenate([
        jnp.concatenate([params["conv2_w"],
                         jnp.zeros((H, K2), jnp.float32)], axis=1),
        jnp.concatenate([jnp.zeros((N_AA, K2), jnp.float32),
                         params["prob_conv2_w"]], axis=1)], axis=0)
    extw = jnp.concatenate([jnp.eye(hn, dtype=jnp.float32), convw], axis=1)
    extb = jnp.concatenate([jnp.zeros((1, hn), jnp.float32),
                            params["conv2_b"], params["prob_conv2_b"]], axis=1)

    # mean + torch-'linear' quantile selector over the sorted position axis
    sbig = np.zeros((S_PAD, seq_len), np.float32)
    sbig[0, :] = 1.0 / seq_len                      # nanmean == mean (finite)
    for qi, q in enumerate(QUANTILES):
        pos = q * (seq_len - 1)
        lo = int(math.floor(pos))
        hi = min(lo + 1, seq_len - 1)
        w = pos - lo
        sbig[1 + qi, lo] += 1.0 - w
        sbig[1 + qi, hi] += w
    sbig = jnp.asarray(sbig)

    # Fold conv1/prob_conv1 and the (channel-major, stat-minor) flatten into
    # per-stat fc1 weight slices; stack them along lanes (vcat) and fold the
    # conv biases directly into the fc1 bias.
    fc1_w = params["fc1_w"]
    conv1_w, prob_conv1_w = params["conv1_w"], params["prob_conv1_w"]
    v_blocks = []
    bias_fold = jnp.zeros((1, M1), jnp.float32)
    for s in range(N_STATS):
        idx_a = np.arange(K1) * N_STATS + s
        idx_b = K1 * N_STATS + np.arange(K2) * N_STATS + s
        idx_c = (K1 + K2) * N_STATS + np.arange(K1) * N_STATS + s
        idx_d = (2 * K1 + K2) * N_STATS + np.arange(K2) * N_STATS + s
        wa = fc1_w[jnp.asarray(idx_a)]                     # (K1, M1)
        wb = fc1_w[jnp.asarray(idx_b)]                     # (K2, M1)
        wc = fc1_w[jnp.asarray(idx_c)]                     # (K1, M1)
        wd = fc1_w[jnp.asarray(idx_d)]                     # (K2, M1)
        v_blocks.append(
            jnp.concatenate([conv1_w @ wa, prob_conv1_w @ wc, wb, wd], axis=0))
        bias_fold = bias_fold + params["conv1_b"] @ wa + params["prob_conv1_b"] @ wc
    vcat = jnp.concatenate(
        v_blocks
        + [jnp.zeros((N_SORT_COLS, (S_PAD - N_STATS) * M1), jnp.float32)],
        axis=1)                                                    # (68, 144)

    mask = jnp.asarray((np.arange(WIDE)[None, :] // M1
                        == np.arange(S_PAD)[:, None]).astype(np.float32))
    wfold = (np.arange(WIDE)[:, None] % M1
             == np.arange(M1)[None, :]).astype(np.float32)
    wtail = fc1_w[2 * (K1 + K2) * N_STATS:, :]                     # (7, M1)
    wh1 = jnp.concatenate([jnp.asarray(wfold), wtail], axis=0)     # (151, M1)
    fc1b = params["fc1_b"] + bias_fold

    named = [
        ("mask", mask), ("vcat", vcat), ("extw", extw), ("extb", extb),
        ("sbig", sbig), ("wh1", wh1), ("fc1b", fc1b),
        ("fc2w", params["fc2_w"]), ("fc2b", params["fc2_b"]),
        ("taskw", params["task_w"]), ("taskb", params["task_b"]),
    ]
    offs, rows, off = {}, [], 0
    for name, a in named:
        a = jnp.asarray(a, jnp.float32)
        r, c = a.shape
        offs[name] = (off, r, c)
        pad_r = (-r) % 8                       # keep every slice 8-row aligned
        rows.append(jnp.pad(a, ((0, pad_r), (0, WIDE - c))))
        off += r + pad_r
    slab = jnp.concatenate(rows, axis=0)       # single constants slab
    return slab, offs


# ---------------------------------------------------------------------------
# Parameter init (deterministic, synthetic — matches the module's shapes)
# ---------------------------------------------------------------------------
def init_params(key):
    keys = jax.random.split(key, 16)
    s = 0.05
    return {
        # frozen wild-type features normally produced by the ESM model
        "embedding_wt": jax.random.normal(keys[0], (1, L, H), jnp.float32),
        "logprob_wt": jax.nn.log_softmax(
            jax.random.normal(keys[1], (1, L, N_AA), jnp.float32), axis=-1),
        # Conv1d(H->K1,1), Conv1d(H->K2,1), Conv1d(20->K1,1), Conv1d(20->K2,1)
        "conv1_w": s * jax.random.normal(keys[2], (H, K1), jnp.float32),
        "conv1_b": s * jax.random.normal(keys[3], (1, K1), jnp.float32),
        "conv2_w": s * jax.random.normal(keys[4], (H, K2), jnp.float32),
        "conv2_b": s * jax.random.normal(keys[5], (1, K2), jnp.float32),
        "prob_conv1_w": s * jax.random.normal(keys[6], (N_AA, K1), jnp.float32),
        "prob_conv1_b": s * jax.random.normal(keys[7], (1, K1), jnp.float32),
        "prob_conv2_w": s * jax.random.normal(keys[8], (N_AA, K2), jnp.float32),
        "prob_conv2_b": s * jax.random.normal(keys[9], (1, K2), jnp.float32),
        # fc1 / fc2
        "fc1_w": s * jax.random.normal(keys[10], (FEAT_DIM, M1), jnp.float32),
        "fc1_b": s * jax.random.normal(keys[11], (1, M1), jnp.float32),
        "fc2_w": s * jax.random.normal(keys[12], (M1, M2), jnp.float32),
        "fc2_b": s * jax.random.normal(keys[13], (1, M2), jnp.float32),
        # stacked per-task Linear(m2,1) + extra per-task bias (zeros at init)
        "task_w": s * jax.random.normal(keys[14], (M2, N_TASKS), jnp.float32),
        "task_b": s * jax.random.normal(keys[15], (1, N_TASKS), jnp.float32)
                  + jnp.zeros((1, N_TASKS), jnp.float32),
    }


# ---------------------------------------------------------------------------
# Fused forward (== _compute_forward_outputs; dropout is identity at inference)
# ---------------------------------------------------------------------------
def forward(params, embeddings, logprobs, num_mutations, esm_scores):
    bsz, seq_len, h = embeddings.shape
    n_aa = logprobs.shape[-1]
    # TODO(synk): in-kernel bitonic sort assumes a power-of-two sequence length;
    # variable-length proteins would need +inf padding and a length-aware sbig.
    assert seq_len & (seq_len - 1) == 0

    seqin2d = jnp.concatenate([embeddings, logprobs], axis=-1).reshape(
        bsz * seq_len, h + n_aa)
    embwt = params["embedding_wt"].reshape(seq_len, h)
    lpwt = params["logprob_wt"].reshape(seq_len, n_aa)
    wt2d = jnp.concatenate(
        [embwt if USE_REL_EMBEDDINGS else jnp.zeros_like(embwt),
         lpwt if USE_REL_PROB_MATRICES else jnp.zeros_like(lpwt)], axis=1)

    # scalar tail features exactly as the module concatenates them
    tail = jnp.concatenate(
        [num_mutations, esm_scores, esm_scores / (num_mutations + EPS)], axis=1)
    tail3 = tail.reshape(bsz, 1, N_TAIL)

    slab, offs = _pack_constants(params, seq_len)
    kernel = functools.partial(_fused_kernel, offs)

    # Grid over batch ("parallel"): O(B) DMA/MXU work, wt + constants stay
    # resident across steps, and v7x shards batch across its two TensorCores.
    # TODO(synk): at real ESM dims (L~1024, H~1280) additionally tile the
    # (H+20) contraction and set vmem_limit_bytes for v7x's 64 MiB VMEM.
    out = pl.pallas_call(
        kernel,
        out_shape=jax.ShapeDtypeStruct((bsz, 1, N_TASKS), jnp.float32),
        grid=(bsz,),
        in_specs=[
            pl.BlockSpec((seq_len, h + n_aa), lambda b: (b, 0)),   # per-batch rows
            pl.BlockSpec((seq_len, h + n_aa), lambda b: (0, 0)),   # wt (resident)
            pl.BlockSpec((1, 1, N_TAIL), lambda b: (b, 0, 0)),
            pl.BlockSpec(slab.shape, lambda b: (0, 0)),            # constants slab
        ],
        out_specs=pl.BlockSpec((1, 1, N_TASKS), lambda b: (b, 0, 0)),
        compiler_params=pltpu.CompilerParams(
            dimension_semantics=("parallel",)),
    )(seqin2d, wt2d, tail3, slab)

    out2d = out.reshape(bsz, N_TASKS)
    return {task: out2d[:, i:i + 1] for i, task in enumerate(TASK_NAMES)}


# ---------------------------------------------------------------------------
# Pure-JAX reference (mirrors the PyTorch module, inference mode)
# ---------------------------------------------------------------------------
def reference_forward(params, embeddings, logprobs, num_mutations, esm_scores):
    bsz, seq_len, _ = embeddings.shape
    emb = embeddings - params["embedding_wt"] if USE_REL_EMBEDDINGS else embeddings
    lp = logprobs - params["logprob_wt"] if USE_REL_PROB_MATRICES else logprobs

    def stats(x):  # (B, L, C) -> (B, C, n_stats), torch compute_stats layout
        xs = jnp.sort(x, axis=1)
        rows = [jnp.mean(x, axis=1)]
        for q in QUANTILES:
            pos = q * (seq_len - 1)
            lo = int(math.floor(pos))
            hi = min(lo + 1, seq_len - 1)
            w = pos - lo
            rows.append(xs[:, lo, :] * (1.0 - w) + xs[:, hi, :] * w)
        return jnp.stack(rows, axis=-1)

    def conv(x, w, b):  # 1x1 Conv1d in NLC layout
        return jnp.einsum("blc,ck->blk", x, w) + b

    st1 = stats(emb)
    x_conv1 = (jnp.einsum("bcs,ck->bks", st1, params["conv1_w"])
               + params["conv1_b"][..., None]).reshape(bsz, -1)
    st2 = stats(conv(emb, params["conv2_w"], params["conv2_b"])).reshape(bsz, -1)
    pst = stats(lp)
    p_conv1 = (jnp.einsum("bcs,ck->bks", pst, params["prob_conv1_w"])
               + params["prob_conv1_b"][..., None]).reshape(bsz, -1)
    pst2 = stats(conv(lp, params["prob_conv2_w"], params["prob_conv2_b"])).reshape(bsz, -1)

    comb = jnp.concatenate(
        [x_conv1, st2, p_conv1, pst2,
         num_mutations, esm_scores, esm_scores / (num_mutations + EPS)], axis=1)
    assert comb.shape[1] == FEAT_DIM
    h1 = _gelu_exact(comb @ params["fc1_w"] + params["fc1_b"])
    h2 = _gelu_exact(h1 @ params["fc2_w"] + params["fc2_b"])
    out = h2 @ params["task_w"] + params["task_b"]
    return {task: out[:, i:i + 1] for i, task in enumerate(TASK_NAMES)}


if __name__ == "__main__":
    # Detect pltpu.roll support/direction once, eagerly, before any jit tracing.
    _init_roll_mode(L, N_SORT_COLS)

    key = jax.random.PRNGKey(0)
    kp, ke, kl, km, ks = jax.random.split(key, 5)
    params = init_params(kp)

    # TODO(synk): the frozen half-precision ESM transformer, the
    # pseudolikelihood_ratio esm-score computation and num_mutations counting
    # are external to this module's trainable forward path; their outputs are
    # synthesized here as kernel inputs.
    embeddings = jax.random.normal(ke, (B, L, H), jnp.float32)
    logprobs = jax.nn.log_softmax(
        jax.random.normal(kl, (B, L, N_AA), jnp.float32), axis=-1)
    num_mutations = jax.random.randint(km, (B, 1), 1, 6).astype(jnp.float32)
    esm_scores = jax.random.normal(ks, (B, ESM_SCORES_DIM), jnp.float32)

    fwd = jax.jit(forward)
    outs = fwd(params, embeddings, logprobs, num_mutations, esm_scores)
    outs = jax.tree_util.tree_map(jax.block_until_ready, outs)

    with jax.default_matmul_precision("highest"):
        refs = jax.jit(reference_forward)(
            params, embeddings, logprobs, num_mutations, esm_scores)
    refs = jax.tree_util.tree_map(jax.block_until_ready, refs)

    for name in TASK_NAMES:
        assert outs[name].shape == (B, 1)
        assert bool(jnp.all(jnp.isfinite(outs[name])))
        assert bool(jnp.allclose(outs[name], refs[name], atol=3e-3, rtol=3e-2)), (
            name, outs[name], refs[name])
    print("KERNEL_OK")
</pallas_src>

<mosaic_0001>
module attributes {stable_mosaic.version = 11 : i64} {
  func.func @probe(%arg0: memref<16x68xf32, #tpu.memory_space<vmem>>, %arg1: memref<16x68xf32, #tpu.memory_space<vmem>>) attributes {dimension_semantics = [], scalar_prefetch = 0 : i64, scratch_operands = 0 : i64, tpu.core_type = #tpu.core_type<tc>} {
    %c0 = arith.constant 0 : index
    %c0_0 = arith.constant 0 : index
    %0 = vector.load %arg0[%c0, %c0_0] : memref<16x68xf32, #tpu.memory_space<vmem>>, vector<16x68xf32>
    %c1_i32 = arith.constant 1 : i32
    %1 = tpu.dynamic_rotate %0 by %c1_i32 dim 0 : vector<16x68xf32>, i32 -> vector<16x68xf32>
    %c0_1 = arith.constant 0 : index
    %c0_2 = arith.constant 0 : index
    %2 = vector.load %arg1[%c0_1, %c0_2] : memref<16x68xf32, #tpu.memory_space<vmem>>, vector<16x68xf32>
    tpu.vector_store %arg1[%c0_1, %c0_2], %1 {strides = array<i32>} : memref<16x68xf32, #tpu.memory_space<vmem>>, vector<16x68xf32>,
    return
  }
}

module attributes {stable_mosaic.version = 11 : i64} {
  func.func @_fused_kernel(%arg0: i32, %arg1: memref<16x52xf32, #tpu.memory_space<vmem>>, %arg2: memref<16x52xf32, #tpu.memory_space<vmem>>, %arg3: memref<1x1x7xf32, #tpu.memory_space<vmem>>, %arg4: memref<368x144xf32, #tpu.memory_space<vmem>>, %arg5: memref<1x1x2xf32, #tpu.memory_space<vmem>>) attributes {dimension_semantics = [#tpu.dimension_semantics<parallel>], iteration_bounds = array<i64: 2>, scalar_prefetch = 0 : i64, scratch_operands = 0 : i64, tpu.core_type = #tpu.core_type<tc>, window_params = [{transform_indices = @transform_0, window_bounds = array<i64: 16, 52>}, {pipeline_mode = #tpu.pipeline_mode<synchronous>, transform_indices = @transform_1, window_bounds = array<i64: 16, 52>}, {transform_indices = @transform_2, window_bounds = array<i64: 1, 1, 7>}, {pipeline_mode = #tpu.pipeline_mode<synchronous>, transform_indices = @transform_3, window_bounds = array<i64: 368, 144>}, {transform_indices = @transform_4, window_bounds = array<i64: 1, 1, 2>}]} {
    %c0 = arith.constant 0 : index
    %c0_0 = arith.constant 0 : index
    %0 = vector.load %arg1[%c0, %c0_0] : memref<16x52xf32, #tpu.memory_space<vmem>>, vector<16x52xf32>
    %c0_1 = arith.constant 0 : index
    %c0_2 = arith.constant 0 : index
    %1 = vector.load %arg2[%c0_1, %c0_2] : memref<16x52xf32, #tpu.memory_space<vmem>>, vector<16x52xf32>
    %2 = arith.subf %0, %1 : vector<16x52xf32>
    %c80 = arith.constant 80 : index
    %c0_3 = arith.constant 0 : index
    %3 = vector.load %arg4[%c80, %c0_3] : memref<368x144xf32, #tpu.memory_space<vmem>>, vector<52x68xf32>
    %cst = arith.constant dense<0.000000e+00> : vector<16x68xf32>
    %4 = tpu.matmul %2, %3, %cst {dimension_numbers = #tpu.dot_dimension_numbers<[1], [0], [0], [1], [0, 0, 1, 1], [], []>, precision = #tpu.contract_precision<fp32>} : vector<16x52xf32>, vector<52x68xf32>, vector<16x68xf32> -> vector<16x68xf32>
    %c136 = arith.constant 136 : index
    %c0_4 = arith.constant 0 : index
    %5 = vector.load %arg4[%c136, %c0_4] : memref<368x144xf32, #tpu.memory_space<vmem>>, vector<1x68xf32>
    %6 = vector.broadcast %5 : vector<1x68xf32> to vector<16x68xf32>
    %7 = arith.addf %4, %6 : vector<16x68xf32>
    %8 = tpu.iota {dimensions = array<i32: 0>} : vector<16x1xi32>
    %9 = vector.extract_strided_slice %7 {offsets = [1, 0], sizes = [15, 68], strides = [1, 1]} : vector<16x68xf32> to vector<15x68xf32>
    %10 = vector.extract_strided_slice %7 {offsets = [0, 0], sizes = [1, 68], strides = [1, 1]} : vector<16x68xf32> to vector<1x68xf32>
    %11 = tpu.concatenate %9, %10 in 0 : vector<15x68xf32>, vector<1x68xf32> -> vector<16x68xf32>
    %12 = vector.extract_strided_slice %7 {offsets = [15, 0], sizes = [1, 68], strides = [1, 1]} : vector<16x68xf32> to vector<1x68xf32>
    %13 = vector.extract_strided_slice %7 {offsets = [0, 0], sizes = [15, 68], strides = [1, 1]} : vector<16x68xf32> to vector<15x68xf32>
    %14 = tpu.concatenate %12, %13 in 0 : vector<1x68xf32>, vector<15x68xf32> -> vector<16x68xf32>
    %c1_i32 = arith.constant 1 : i32
    %15 = vector.broadcast %c1_i32 : i32 to vector<16x1xi32>
    %16 = arith.andi %8, %15 : vector<16x1xi32>
    %c0_i32 = arith.constant 0 : i32
    %17 = vector.broadcast %c0_i32 : i32 to vector<16x1xi32>
    %18 = arith.cmpi eq, %16, %17 : vector<16x1xi32>
    %19 = vector.shape_cast %18 : vector<16x1xi1> to vector<16x1xi1>
    %20 = vector.broadcast %19 : vector<16x1xi1> to vector<16x68xi1>
    %21 = arith.select %20, %11, %14 : vector<16x68xi1>, vector<16x68xf32>
    %c2_i32 = arith.constant 2 : i32
    %22 = vector.broadcast %c2_i32 : i32 to vector<16x1xi32>
    %23 = arith.andi %8, %22 : vector<16x1xi32>
    %c0_i32_5 = arith.constant 0 : i32
    %24 = vector.broadcast %c0_i32_5 : i32 to vector<16x1xi32>
    %25 = arith.cmpi eq, %23, %24 : vector<16x1xi32>
    %26 = arith.xori %25, %18 : vector<16x1xi1>
    %cst_6 = arith.constant dense<true> : vector<16x1xi1>
    %27 = arith.xori %26, %cst_6 : vector<16x1xi1>
    %28 = arith.minimumf %7, %21 : vector<16x68xf32>
    %29 = arith.maximumf %7, %21 : vector<16x68xf32>
    %30 = vector.shape_cast %27 : vector<16x1xi1> to vector<16x1xi1>
    %31 = vector.broadcast %30 : vector<16x1xi1> to vector<16x68xi1>
    %32 = arith.select %31, %28, %29 : vector<16x68xi1>, vector<16x68xf32>
    %33 = vector.extract_strided_slice %32 {offsets = [2, 0], sizes = [14, 68], strides = [1, 1]} : vector<16x68xf32> to vector<14x68xf32>
    %34 = vector.extract_strided_slice %32 {offsets = [0, 0], sizes = [2, 68], strides = [1, 1]} : vector<16x68xf32> to vector<2x68xf32>
    %35 = tpu.concatenate %33, %34 in 0 : vector<14x68xf32>, vector<2x68xf32> -> vector<16x68xf32>
    %36 = vector.extract_strided_slice %32 {offsets = [14, 0], sizes = [2, 68], strides = [1, 1]} : vector<16x68xf32> to vector<2x68xf32>
    %37 = vector.extract_strided_slice %32 {offsets = [0, 0], sizes = [14, 68], strides = [1, 1]} : vector<16x68xf32> to vector<14x68xf32>
    %38 = tpu.concatenate %36, %37 in 0 : vector<2x68xf32>, vector<14x68xf32> -> vector<16x68xf32>
    %c2_i32_7 = arith.constant 2 : i32
    %39 = vector.broadcast %c2_i32_7 : i32 to vector<16x1xi32>
    %40 = arith.andi %8, %39 : vector<16x1xi32>
    %c0_i32_8 = arith.constant 0 : i32
    %41 = vector.broadcast %c0_i32_8 : i32 to vector<16x1xi32>
    %42 = arith.cmpi eq, %40, %41 : vector<16x1xi32>
    %43 = vector.shape_cast %42 : vector<16x1xi1> to vector<16x1xi1>
    %44 = vector.broadcast %43 : vector<16x1xi1> to vector<16x68xi1>
    %45 = arith.select %44, %35, %38 : vector<16x68xi1>, vector<16x68xf32>
    %c4_i32 = arith.constant 4 : i32
    %46 = vector.broadcast %c4_i32 : i32 to vector<16x1xi32>
    %47 = arith.andi %8, %46 : vector<16x1xi32>
    %c0_i32_9 = arith.constant 0 : i32
    %48 = vector.broadcast %c0_i32_9 : i32 to vector<16x1xi32>
    %49 = arith.cmpi eq, %47, %48 : vector<16x1xi32>
    %50 = arith.xori %49, %42 : vector<16x1xi1>
    %cst_10 = arith.constant dense<true> : vector<16x1xi1>
    %51 = arith.xori %50, %cst_10 : vector<16x1xi1>
    %52 = arith.minimumf %32, %45 : vector<16x68xf32>
    %53 = arith.maximumf %32, %45 : vector<16x68xf32>
    %54 = vector.shape_cast %51 : vector<16x1xi1> to vector<16x1xi1>
    %55 = vector.broadcast %54 : vector<16x1xi1> to vector<16x68xi1>
    %56 = arith.select %55, %52, %53 : vector<16x68xi1>, vector<16x68xf32>
    %57 = vector.extract_strided_slice %56 {offsets = [1, 0], sizes = [15, 68], strides = [1, 1]} : vector<16x68xf32> to vector<15x68xf32>
    %58 = vector.extract_strided_slice %56 {offsets = [0, 0], sizes = [1, 68], strides = [1, 1]} : vector<16x68xf32> to vector<1x68xf32>
    %59 = tpu.concatenate %57, %58 in 0 : vector<15x68xf32>, vector<1x68xf32> -> vector<16x68xf32>
    %60 = vector.extract_strided_slice %56 {offsets = [15, 0], sizes = [1, 68], strides = [1, 1]} : vector<16x68xf32> to vector<1x68xf32>
    %61 = vector.extract_strided_slice %56 {offsets = [0, 0], sizes = [15, 68], strides = [1, 1]} : vector<16x68xf32> to vector<15x68xf32>
    %62 = tpu.concatenate %60, %61 in 0 : vector<1x68xf32>, vector<15x68xf32> -> vector<16x68xf32>
    %c1_i32_11 = arith.constant 1 : i32
    %63 = vector.broadcast %c1_i32_11 : i32 to vector<16x1xi32>
    %64 = arith.andi %8, %63 : vector<16x1xi32>
    %c0_i32_12 = arith.constant 0 : i32
    %65 = vector.broadcast %c0_i32_12 : i32 to vector<16x1xi32>
    %66 = arith.cmpi eq, %64, %65 : vector<16x1xi32>
    %67 = vector.shape_cast %66 : vector<16x1xi1> to vector<16x1xi1>
    %68 = vector.broadcast %67 : vector<16x1xi1> to vector<16x68xi1>
    %69 = arith.select %68, %59, %62 : vector<16x68xi1>, vector<16x68xf32>
    %c4_i32_13 = arith.constant 4 : i32
    %70 = vector.broadcast %c4_i32_13 : i32 to vector<16x1xi32>
    %71 = arith.andi %8, %70 : vector<16x1xi32>
    %c0_i32_14 = arith.constant 0 : i32
    %72 = vector.broadcast %c0_i32_14 : i32 to vector<16x1xi32>
    %73 = arith.cmpi eq, %71, %72 : vector<16x1xi32>
    %74 = arith.xori %73, %66 : vector<16x1xi1>
    %cst_15 = arith.constant dense<true> : vector<16x1xi1>
    %75 = arith.xori %74, %cst_15 : vector<16x1xi1>
    %76 = arith.minimumf %56, %69 : vector<16x68xf32>
    %77 = arith.maximumf %56, %69 : vector<16x68xf32>
    %78 = vector.shape_cast %75 : vector<16x1xi1> to vector<16x1xi1>
    %79 = vector.broadcast %78 : vector<16x1xi1> to vector<16x68xi1>
    %80 = arith.select %79, %76, %77 : vector<16x68xi1>, vector<16x68xf32>
    %81 = vector.extract_strided_slice %80 {offsets = [4, 0], sizes = [12, 68], strides = [1, 1]} : vector<16x68xf32> to vector<12x68xf32>
    %82 = vector.extract_strided_slice %80 {offsets = [0, 0], sizes = [4, 68], strides = [1, 1]} : vector<16x68xf32> to vector<4x68xf32>
    %83 = tpu.concatenate %81, %82 in 0 : vector<12x68xf32>, vector<4x68xf32> -> vector<16x68xf32>
    %84 = vector.extract_strided_slice %80 {offsets = [12, 0], sizes = [4, 68], strides = [1, 1]} : vector<16x68xf32> to vector<4x68xf32>
    %85 = vector.extract_strided_slice %80 {offsets = [0, 0], sizes = [12, 68], strides = [1, 1]} : vector<16x68xf32> to vector<12x68xf32>
    %86 = tpu.concatenate %84, %85 in 0 : vector<4x68xf32>, vector<12x68xf32> -> vector<16x68xf32>
    %c4_i32_16 = arith.constant 4 : i32
    %87 = vector.broadcast %c4_i32_16 : i32 to vector<16x1xi32>
    %88 = arith.andi %8, %87 : vector<16x1xi32>
    %c0_i32_17 = arith.constant 0 : i32
    %89 = vector.broadcast %c0_i32_17 : i32 to vector<16x1xi32>
    %90 = arith.cmpi eq, %88, %89 : vector<16x1xi32>
    %91 = vector.shape_cast %90 : vector<16x1xi1> to vector<16x1xi1>
    %92 = vector.broadcast %91 : vector<16x1xi1> to vector<16x68xi1>
    %93 = arith.select %92, %83, %86 : vector<16x68xi1>, vector<16x68xf32>
    %c8_i32 = arith.constant 8 : i32
    %94 = vector.broadcast %c8_i32 : i32 to vector<16x1xi32>
    %95 = arith.andi %8, %94 : vector<16x1xi32>
    %c0_i32_18 = arith.constant 0 : i32
    %96 = vector.broadcast %c0_i32_18 : i32 to vector<16x1xi32>
    %97 = arith.cmpi eq, %95, %96 : vector<16x1xi32>
    %98 = arith.xori %97, %90 : vector<16x1xi1>
    %cst_19 = arith.constant dense<true> : vector<16x1xi1>
    %99 = arith.xori %98, %cst_19 : vector<16x1xi1>
    %100 = arith.minimumf %80, %93 : vector<16x68xf32>
    %101 = arith.maximumf %80, %93 : vector<16x68xf32>
    %102 = vector.shape_cast %99 : vector<16x1xi1> to vector<16x1xi1>
    %103 = vector.broadcast %102 : vector<16x1xi1> to vector<16x68xi1>
    %104 = arith.select %103, %100, %101 : vector<16x68xi1>, vector<16x68xf32>
    %105 = vector.extract_strided_slice %104 {offsets = [2, 0], sizes = [14, 68], strides = [1, 1]} : vector<16x68xf32> to vector<14x68xf32>
    %106 = vector.extract_strided_slice %104 {offsets = [0, 0], sizes = [2, 68], strides = [1, 1]} : vector<16x68xf32> to vector<2x68xf32>
    %107 = tpu.concatenate %105, %106 in 0 : vector<14x68xf32>, vector<2x68xf32> -> vector<16x68xf32>
    %108 = vector.extract_strided_slice %104 {offsets = [14, 0], sizes = [2, 68], strides = [1, 1]} : vector<16x68xf32> to vector<2x68xf32>
    %109 = vector.extract_strided_slice %104 {offsets = [0, 0], sizes = [14, 68], strides = [1, 1]} : vector<16x68xf32> to vector<14x68xf32>
    %110 = tpu.concatenate %108, %109 in 0 : vector<2x68xf32>, vector<14x68xf32> -> vector<16x68xf32>
    %c2_i32_20 = arith.constant 2 : i32
    %111 = vector.broadcast %c2_i32_20 : i32 to vector<16x1xi32>
    %112 = arith.andi %8, %111 : vector<16x1xi32>
    %c0_i32_21 = arith.constant 0 : i32
    %113 = vector.broadcast %c0_i32_21 : i32 to vector<16x1xi32>
    %114 = arith.cmpi eq, %112, %113 : vector<16x1xi32>
    %115 = vector.shape_cast %114 : vector<16x1xi1> to vector<16x1xi1>
    %116 = vector.broadcast %115 : vector<16x1xi1> to vector<16x68xi1>
    %117 = arith.select %116, %107, %110 : vector<16x68xi1>, vector<16x68xf32>
    %c8_i32_22 = arith.constant 8 : i32
    %118 = vector.broadcast %c8_i32_22 : i32 to vector<16x1xi32>
    %119 = arith.andi %8, %118 : vector<16x1xi32>
    %c0_i32_23 = arith.constant 0 : i32
    %120 = vector.broadcast %c0_i32_23 : i32 to vector<16x1xi32>
    %121 = arith.cmpi eq, %119, %120 : vector<16x1xi32>
    %122 = arith.xori %121, %114 : vector<16x1xi1>
    %cst_24 = arith.constant dense<true> : vector<16x1xi1>
    %123 = arith.xori %122, %cst_24 : vector<16x1xi1>
    %124 = arith.minimumf %104, %117 : vector<16x68xf32>
    %125 = arith.maximumf %104, %117 : vector<16x68xf32>
    %126 = vector.shape_cast %123 : vector<16x1xi1> to vector<16x1xi1>
    %127 = vector.broadcast %126 : vector<16x1xi1> to vector<16x68xi1>
    %128 = arith.select %127, %124, %125 : vector<16x68xi1>, vector<16x68xf32>
    %129 = vector.extract_strided_slice %128 {offsets = [1, 0], sizes = [15, 68], strides = [1, 1]} : vector<16x68xf32> to vector<15x68xf32>
    %130 = vector.extract_strided_slice %128 {offsets = [0, 0], sizes = [1, 68], strides = [1, 1]} : vector<16x68xf32> to vector<1x68xf32>
    %131 = tpu.concatenate %129, %130 in 0 : vector<15x68xf32>, vector<1x68xf32> -> vector<16x68xf32>
    %132 = vector.extract_strided_slice %128 {offsets = [15, 0], sizes = [1, 68], strides = [1, 1]} : vector<16x68xf32> to vector<1x68xf32>
    %133 = vector.extract_strided_slice %128 {offsets = [0, 0], sizes = [15, 68], strides = [1, 1]} : vector<16x68xf32> to vector<15x68xf32>
    %134 = tpu.concatenate %132, %133 in 0 : vector<1x68xf32>, vector<15x68xf32> -> vector<16x68xf32>
    %c1_i32_25 = arith.constant 1 : i32
    %135 = vector.broadcast %c1_i32_25 : i32 to vector<16x1xi32>
    %136 = arith.andi %8, %135 : vector<16x1xi32>
    %c0_i32_26 = arith.constant 0 : i32
    %137 = vector.broadcast %c0_i32_26 : i32 to vector<16x1xi32>
    %138 = arith.cmpi eq, %136, %137 : vector<16x1xi32>
    %139 = vector.shape_cast %138 : vector<16x1xi1> to vector<16x1xi1>
    %140 = vector.broadcast %139 : vector<16x1xi1> to vector<16x68xi1>
    %141 = arith.select %140, %131, %134 : vector<16x68xi1>, vector<16x68xf32>
    %c8_i32_27 = arith.constant 8 : i32
    %142 = vector.broadcast %c8_i32_27 : i32 to vector<16x1xi32>
    %143 = arith.andi %8, %142 : vector<16x1xi32>
    %c0_i32_28 = arith.constant 0 : i32
    %144 = vector.broadcast %c0_i32_28 : i32 to vector<16x1xi32>
    %145 = arith.cmpi eq, %143, %144 : vector<16x1xi32>
    %146 = arith.xori %145, %138 : vector<16x1xi1>
    %cst_29 = arith.constant dense<true> : vector<16x1xi1>
    %147 = arith.xori %146, %cst_29 : vector<16x1xi1>
    %148 = arith.minimumf %128, %141 : vector<16x68xf32>
    %149 = arith.maximumf %128, %141 : vector<16x68xf32>
    %150 = vector.shape_cast %147 : vector<16x1xi1> to vector<16x1xi1>
    %151 = vector.broadcast %150 : vector<16x1xi1> to vector<16x68xi1>
    %152 = arith.select %151, %148, %149 : vector<16x68xi1>, vector<16x68xf32>
    %153 = vector.extract_strided_slice %152 {offsets = [8, 0], sizes = [8, 68], strides = [1, 1]} : vector<16x68xf32> to vector<8x68xf32>
    %154 = vector.extract_strided_slice %152 {offsets = [0, 0], sizes = [8, 68], strides = [1, 1]} : vector<16x68xf32> to vector<8x68xf32>
    %155 = tpu.concatenate %153, %154 in 0 : vector<8x68xf32>, vector<8x68xf32> -> vector<16x68xf32>
    %156 = vector.extract_strided_slice %152 {offsets = [8, 0], sizes = [8, 68], strides = [1, 1]} : vector<16x68xf32> to vector<8x68xf32>
    %157 = vector.extract_strided_slice %152 {offsets = [0, 0], sizes = [8, 68], strides = [1, 1]} : vector<16x68xf32> to vector<8x68xf32>
    %158 = tpu.concatenate %156, %157 in 0 : vector<8x68xf32>, vector<8x68xf32> -> vector<16x68xf32>
    %c8_i32_30 = arith.constant 8 : i32
    %159 = vector.broadcast %c8_i32_30 : i32 to vector<16x1xi32>
    %160 = arith.andi %8, %159 : vector<16x1xi32>
    %c0_i32_31 = arith.constant 0 : i32
    %161 = vector.broadcast %c0_i32_31 : i32 to vector<16x1xi32>
    %162 = arith.cmpi eq, %160, %161 : vector<16x1xi32>
    %163 = vector.shape_cast %162 : vector<16x1xi1> to vector<16x1xi1>
    %164 = vector.broadcast %163 : vector<16x1xi1> to vector<16x68xi1>
    %165 = arith.select %164, %155, %158 : vector<16x68xi1>, vector<16x68xf32>
    %c16_i32 = arith.constant 16 : i32
    %166 = vector.broadcast %c16_i32 : i32 to vector<16x1xi32>
    %167 = arith.andi %8, %166 : vector<16x1xi32>
    %c0_i32_32 = arith.constant 0 : i32
    %168 = vector.broadcast %c0_i32_32 : i32 to vector<16x1xi32>
    %169 = arith.cmpi eq, %167, %168 : vector<16x1xi32>
    %170 = arith.xori %169, %162 : vector<16x1xi1>
    %cst_33 = arith.constant dense<true> : vector<16x1xi1>
    %171 = arith.xori %170, %cst_33 : vector<16x1xi1>
    %172 = arith.minimumf %152, %165 : vector<16x68xf32>
    %173 = arith.maximumf %152, %165 : vector<16x68xf32>
    %174 = vector.shape_cast %171 : vector<16x1xi1> to vector<16x1xi1>
    %175 = vector.broadcast %174 : vector<16x1xi1> to vector<16x68xi1>
    %176 = arith.select %175, %172, %173 : vector<16x68xi1>, vector<16x68xf32>
    %177 = vector.extract_strided_slice %176 {offsets = [4, 0], sizes = [12, 68], strides = [1, 1]} : vector<16x68xf32> to vector<12x68xf32>
    %178 = vector.extract_strided_slice %176 {offsets = [0, 0], sizes = [4, 68], strides = [1, 1]} : vector<16x68xf32> to vector<4x68xf32>
    %179 = tpu.concatenate %177, %178 in 0 : vector<12x68xf32>, vector<4x68xf32> -> vector<16x68xf32>
    %180 = vector.extract_strided_slice %176 {offsets = [12, 0], sizes = [4, 68], strides = [1, 1]} : vector<16x68xf32> to vector<4x68xf32>
    %181 = vector.extract_strided_slice %176 {offsets = [0, 0], sizes = [12, 68], strides = [1, 1]} : vector<16x68xf32> to vector<12x68xf32>
    %182 = tpu.concatenate %180, %181 in 0 : vector<4x68xf32>, vector<12x68xf32> -> vector<16x68xf32>
    %c4_i32_34 = arith.constant 4 : i32
    %183 = vector.broadcast %c4_i32_34 : i32 to vector<16x1xi32>
    %184 = arith.andi %8, %183 : vector<16x1xi32>
    %c0_i32_35 = arith.constant 0 : i32
    %185 = vector.broadcast %c0_i32_35 : i32 to vector<16x1xi32>
    %186 = arith.cmpi eq, %184, %185 : vector<16x1xi32>
    %187 = vector.shape_cast %186 : vector<16x1xi1> to vector<16x1xi1>
    %188 = vector.broadcast %187 : vector<16x1xi1> to vector<16x68xi1>
    %189 = arith.select %188, %179, %182 : vector<16x68xi1>, vector<16x68xf32>
    %c16_i32_36 = arith.constant 16 : i32
    %190 = vector.broadcast %c16_i32_36 : i32 to vector<16x1xi32>
    %191 = arith.andi %8, %190 : vector<16x1xi32>
    %c0_i32_37 = arith.constant 0 : i32
    %192 = vector.broadcast %c0_i32_37 : i32 to vector<16x1xi32>
    %193 = arith.cmpi eq, %191, %192 : vector<16x1xi32>
    %194 = arith.xori %193, %186 : vector<16x1xi1>
    %cst_38 = arith.constant dense<true> : vector<16x1xi1>
    %195 = arith.xori %194, %cst_38 : vector<16x1xi1>
    %196 = arith.minimumf %176, %189 : vector<16x68xf32>
    %197 = arith.maximumf %176, %189 : vector<16x68xf32>
    %198 = vector.shape_cast %195 : vector<16x1xi1> to vector<16x1xi1>
    %199 = vector.broadcast %198 : vector<16x1xi1> to vector<16x68xi1>
    %200 = arith.select %199, %196, %197 : vector<16x68xi1>, vector<16x68xf32>
    %201 = vector.extract_strided_slice %200 {offsets = [2, 0], sizes = [14, 68], strides = [1, 1]} : vector<16x68xf32> to vector<14x68xf32>
    %202 = vector.extract_strided_slice %200 {offsets = [0, 0], sizes = [2, 68], strides = [1, 1]} : vector<16x68xf32> to vector<2x68xf32>
    %203 = tpu.concatenate %201, %202 in 0 : vector<14x68xf32>, vector<2x68xf32> -> vector<16x68xf32>
    %204 = vector.extract_strided_slice %200 {offsets = [14, 0], sizes = [2, 68], strides = [1, 1]} : vector<16x68xf32> to vector<2x68xf32>
    %205 = vector.extract_strided_slice %200 {offsets = [0, 0], sizes = [14, 68], strides = [1, 1]} : vector<16x68xf32> to vector<14x68xf32>
    %206 = tpu.concatenate %204, %205 in 0 : vector<2x68xf32>, vector<14x68xf32> -> vector<16x68xf32>
    %c2_i32_39 = arith.constant 2 : i32
    %207 = vector.broadcast %c2_i32_39 : i32 to vector<16x1xi32>
    %208 = arith.andi %8, %207 : vector<16x1xi32>
    %c0_i32_40 = arith.constant 0 : i32
    %209 = vector.broadcast %c0_i32_40 : i32 to vector<16x1xi32>
    %210 = arith.cmpi eq, %208, %209 : vector<16x1xi32>
    %211 = vector.shape_cast %210 : vector<16x1xi1> to vector<16x1xi1>
    %212 = vector.broadcast %211 : vector<16x1xi1> to vector<16x68xi1>
    %213 = arith.select %212, %203, %206 : vector<16x68xi1>, vector<16x68xf32>
    %c16_i32_41 = arith.constant 16 : i32
    %214 = vector.broadcast %c16_i32_41 : i32 to vector<16x1xi32>
    %215 = arith.andi %8, %214 : vector<16x1xi32>
    %c0_i32_42 = arith.constant 0 : i32
    %216 = vector.broadcast %c0_i32_42 : i32 to vector<16x1xi32>
    %217 = arith.cmpi eq, %215, %216 : vector<16x1xi32>
    %218 = arith.xori %217, %210 : vector<16x1xi1>
    %cst_43 = arith.constant dense<true> : vector<16x1xi1>
    %219 = arith.xori %218, %cst_43 : vector<16x1xi1>
    %220 = arith.minimumf %200, %213 : vector<16x68xf32>
    %221 = arith.maximumf %200, %213 : vector<16x68xf32>
    %222 = vector.shape_cast %219 : vector<16x1xi1> to vector<16x1xi1>
    %223 = vector.broadcast %222 : vector<16x1xi1> to vector<16x68xi1>
    %224 = arith.select %223, %220, %221 : vector<16x68xi1>, vector<16x68xf32>
    %225 = vector.extract_strided_slice %224 {offsets = [1, 0], sizes = [15, 68], strides = [1, 1]} : vector<16x68xf32> to vector<15x68xf32>
    %226 = vector.extract_strided_slice %224 {offsets = [0, 0], sizes = [1, 68], strides = [1, 1]} : vector<16x68xf32> to vector<1x68xf32>
    %227 = tpu.concatenate %225, %226 in 0 : vector<15x68xf32>, vector<1x68xf32> -> vector<16x68xf32>
    %228 = vector.extract_strided_slice %224 {offsets = [15, 0], sizes = [1, 68], strides = [1, 1]} : vector<16x68xf32> to vector<1x68xf32>
    %229 = vector.extract_strided_slice %224 {offsets = [0, 0], sizes = [15, 68], strides = [1, 1]} : vector<16x68xf32> to vector<15x68xf32>
    %230 = tpu.concatenate %228, %229 in 0 : vector<1x68xf32>, vector<15x68xf32> -> vector<16x68xf32>
    %c1_i32_44 = arith.constant 1 : i32
    %231 = vector.broadcast %c1_i32_44 : i32 to vector<16x1xi32>
    %232 = arith.andi %8, %231 : vector<16x1xi32>
    %c0_i32_45 = arith.constant 0 : i32
    %233 = vector.broadcast %c0_i32_45 : i32 to vector<16x1xi32>
    %234 = arith.cmpi eq, %232, %233 : vector<16x1xi32>
    %235 = vector.shape_cast %234 : vector<16x1xi1> to vector<16x1xi1>
    %236 = vector.broadcast %235 : vector<16x1xi1> to vector<16x68xi1>
    %237 = arith.select %236, %227, %230 : vector<16x68xi1>, vector<16x68xf32>
    %c16_i32_46 = arith.constant 16 : i32
    %238 = vector.broadcast %c16_i32_46 : i32 to vector<16x1xi32>
    %239 = arith.andi %8, %238 : vector<16x1xi32>
    %c0_i32_47 = arith.constant 0 : i32
    %240 = vector.broadcast %c0_i32_47 : i32 to vector<16x1xi32>
    %241 = arith.cmpi eq, %239, %240 : vector<16x1xi32>
    %242 = arith.xori %241, %234 : vector<16x1xi1>
    %cst_48 = arith.constant dense<true> : vector<16x1xi1>
    %243 = arith.xori %242, %cst_48 : vector<16x1xi1>
    %244 = arith.minimumf %224, %237 : vector<16x68xf32>
    %245 = arith.maximumf %224, %237 : vector<16x68xf32>
    %246 = vector.shape_cast %243 : vector<16x1xi1> to vector<16x1xi1>
    %247 = vector.broadcast %246 : vector<16x1xi1> to vector<16x68xi1>
    %248 = arith.select %247, %244, %245 : vector<16x68xi1>, vector<16x68xf32>
    %c144 = arith.constant 144 : index
    %c0_49 = arith.constant 0 : index
    %249 = vector.load %arg4[%c144, %c0_49] : memref<368x144xf32, #tpu.memory_space<vmem>>, vector<8x16xf32>
    %cst_50 = arith.constant dense<0.000000e+00> : vector<8x68xf32>
    %250 = tpu.matmul %249, %248, %cst_50 {dimension_numbers = #tpu.dot_dimension_numbers<[1], [0], [0], [1], [0, 0, 1, 1], [], []>, precision = #tpu.contract_precision<fp32>} : vector<8x16xf32>, vector<16x68xf32>, vector<8x68xf32> -> vector<8x68xf32>
    %c8 = arith.constant 8 : index
    %c0_51 = arith.constant 0 : index
    %251 = vector.load %arg4[%c8, %c0_51] : memref<368x144xf32, #tpu.memory_space<vmem>>, vector<68x144xf32>
    %cst_52 = arith.constant dense<0.000000e+00> : vector<8x144xf32>
    %252 = tpu.matmul %250, %251, %cst_52 {dimension_numbers = #tpu.dot_dimension_numbers<[1], [0], [0], [1], [0, 0, 1, 1], [], []>, precision = #tpu.contract_precision<fp32>} : vector<8x68xf32>, vector<68x144xf32>, vector<8x144xf32> -> vector<8x144xf32>
    %c0_53 = arith.constant 0 : index
    %c0_54 = arith.constant 0 : index
    %253 = vector.load %arg4[%c0_53, %c0_54] : memref<368x144xf32, #tpu.memory_space<vmem>>, vector<8x144xf32>
    %254 = arith.mulf %252, %253 : vector<8x144xf32>
    %cst_55 = arith.constant dense<0.000000e+00> : vector<144xf32>
    %255 = vector.multi_reduction <add>, %254, %cst_55 [0] : vector<8x144xf32> to vector<144xf32>
    %256 = vector.shape_cast %255 : vector<144xf32> to vector<1x144xf32>
    %c0_56 = arith.constant 0 : index
    %c0_57 = arith.constant 0 : index
    %c0_58 = arith.constant 0 : index
    %257 = vector.load %arg3[%c0_56, %c0_57, %c0_58] : memref<1x1x7xf32, #tpu.memory_space<vmem>>, vector<1x1x7xf32>
    %258 = vector.shape_cast %257 : vector<1x1x7xf32> to vector<1x7xf32>
    %259 = tpu.concatenate %256, %258 in 1 : vector<1x144xf32>, vector<1x7xf32> -> vector<1x151xf32>
    %c152 = arith.constant 152 : index
    %c0_59 = arith.constant 0 : index
    %260 = vector.load %arg4[%c152, %c0_59] : memref<368x144xf32, #tpu.memory_space<vmem>>, vector<151x18xf32>
    %cst_60 = arith.constant dense<0.000000e+00> : vector<1x18xf32>
    %261 = tpu.matmul %259, %260, %cst_60 {dimension_numbers = #tpu.dot_dimension_numbers<[1], [0], [0], [1], [0, 0, 1, 1], [], []>, precision = #tpu.contract_precision<fp32>} : vector<1x151xf32>, vector<151x18xf32>, vector<1x18xf32> -> vector<1x18xf32>
    %c304 = arith.constant 304 : index
    %c0_61 = arith.constant 0 : index
    %262 = vector.load %arg4[%c304, %c0_61] : memref<368x144xf32, #tpu.memory_space<vmem>>, vector<1x18xf32>
    %263 = arith.addf %261, %262 : vector<1x18xf32>
    %cst_62 = arith.constant 5.000000e-01 : f32
    %264 = vector.broadcast %cst_62 : f32 to vector<1x18xf32>
    %265 = arith.mulf %264, %263 : vector<1x18xf32>
    %cst_63 = arith.constant 0.707106769 : f32
    %266 = vector.broadcast %cst_63 : f32 to vector<1x18xf32>
    %267 = arith.mulf %263, %266 : vector<1x18xf32>
    %268 = math.absf %267 : vector<1x18xf32>
    %cst_64 = arith.constant 0.327591091 : f32
    %269 = vector.broadcast %cst_64 : f32 to vector<1x18xf32>
    %270 = arith.mulf %269, %268 : vector<1x18xf32>
    %cst_65 = arith.constant 1.000000e+00 : f32
    %271 = vector.broadcast %cst_65 : f32 to vector<1x18xf32>
    %272 = arith.addf %271, %270 : vector<1x18xf32>
    %cst_66 = arith.constant 1.000000e+00 : f32
    %273 = vector.broadcast %cst_66 : f32 to vector<1x18xf32>
    %274 = arith.divf %273, %272 : vector<1x18xf32>
    %cst_67 = arith.constant 1.06140542 : f32
    %275 = vector.broadcast %cst_67 : f32 to vector<1x18xf32>
    %276 = arith.mulf %275, %274 : vector<1x18xf32>
    %cst_68 = arith.constant -1.45315206 : f32
    %277 = vector.broadcast %cst_68 : f32 to vector<1x18xf32>
    %278 = arith.addf %276, %277 : vector<1x18xf32>
    %279 = arith.mulf %278, %274 : vector<1x18xf32>
    %cst_69 = arith.constant 1.42141378 : f32
    %280 = vector.broadcast %cst_69 : f32 to vector<1x18xf32>
    %281 = arith.addf %279, %280 : vector<1x18xf32>
    %282 = arith.mulf %281, %274 : vector<1x18xf32>
    %cst_70 = arith.constant -0.284496725 : f32
    %283 = vector.broadcast %cst_70 : f32 to vector<1x18xf32>
    %284 = arith.addf %282, %283 : vector<1x18xf32>
    %285 = arith.mulf %284, %274 : vector<1x18xf32>
    %cst_71 = arith.constant 0.254829586 : f32
    %286 = vector.broadcast %cst_71 : f32 to vector<1x18xf32>
    %287 = arith.addf %285, %286 : vector<1x18xf32>
    %288 = arith.mulf %287, %274 : vector<1x18xf32>
    %cst_72 = arith.constant 0.000000e+00 : f32
    %289 = vector.broadcast %cst_72 : f32 to vector<1x18xf32>
    %290 = arith.subf %289, %268 : vector<1x18xf32>
    %291 = arith.mulf %290, %268 : vector<1x18xf32>
    %292 = math.exp %291 : vector<1x18xf32>
    %293 = arith.mulf %288, %292 : vector<1x18xf32>
    %cst_73 = arith.constant 1.000000e+00 : f32
    %294 = vector.broadcast %cst_73 : f32 to vector<1x18xf32>
    %295 = arith.subf %294, %293 : vector<1x18xf32>
    %cst_74 = arith.constant 0.000000e+00 : f32
    %296 = vector.broadcast %cst_74 : f32 to vector<1x18xf32>
    %297 = arith.cmpf oge, %267, %296 : vector<1x18xf32>
    %cst_75 = arith.constant 0.000000e+00 : f32
    %298 = vector.broadcast %cst_75 : f32 to vector<1x18xf32>
    %299 = arith.subf %298, %295 : vector<1x18xf32>
    %300 = arith.select %297, %295, %299 : vector<1x18xi1>, vector<1x18xf32>
    %cst_76 = arith.constant 1.000000e+00 : f32
    %301 = vector.broadcast %cst_76 : f32 to vector<1x18xf32>
    %302 = arith.addf %301, %300 : vector<1x18xf32>
    %303 = arith.mulf %265, %302 : vector<1x18xf32>
    %c312 = arith.constant 312 : index
    %c0_77 = arith.constant 0 : index
    %304 = vector.load %arg4[%c312, %c0_77] : memref<368x144xf32, #tpu.memory_space<vmem>>, vector<18x9xf32>
    %cst_78 = arith.constant dense<0.000000e+00> : vector<1x9xf32>
    %305 = tpu.matmul %303, %304, %cst_78 {dimension_numbers = #tpu.dot_dimension_numbers<[1], [0], [0], [1], [0, 0, 1, 1], [], []>, precision = #tpu.contract_precision<fp32>} : vector<1x18xf32>, vector<18x9xf32>, vector<1x9xf32> -> vector<1x9xf32>
    %c336 = arith.constant 336 : index
    %c0_79 = arith.constant 0 : index
    %306 = vector.load %arg4[%c336, %c0_79] : memref<368x144xf32, #tpu.memory_space<vmem>>, vector<1x9xf32>
    %307 = arith.addf %305, %306 : vector<1x9xf32>
    %cst_80 = arith.constant 5.000000e-01 : f32
    %308 = vector.broadcast %cst_80 : f32 to vector<1x9xf32>
    %309 = arith.mulf %308, %307 : vector<1x9xf32>
    %cst_81 = arith.constant 0.707106769 : f32
    %310 = vector.broadcast %cst_81 : f32 to vector<1x9xf32>
    %311 = arith.mulf %307, %310 : vector<1x9xf32>
    %312 = math.absf %311 : vector<1x9xf32>
    %cst_82 = arith.constant 0.327591091 : f32
    %313 = vector.broadcast %cst_82 : f32 to vector<1x9xf32>
    %314 = arith.mulf %313, %312 : vector<1x9xf32>
    %cst_83 = arith.constant 1.000000e+00 : f32
    %315 = vector.broadcast %cst_83 : f32 to vector<1x9xf32>
    %316 = arith.addf %315, %314 : vector<1x9xf32>
    %cst_84 = arith.constant 1.000000e+00 : f32
    %317 = vector.broadcast %cst_84 : f32 to vector<1x9xf32>
    %318 = arith.divf %317, %316 : vector<1x9xf32>
    %cst_85 = arith.constant 1.06140542 : f32
    %319 = vector.broadcast %cst_85 : f32 to vector<1x9xf32>
    %320 = arith.mulf %319, %318 : vector<1x9xf32>
    %cst_86 = arith.constant -1.45315206 : f32
    %321 = vector.broadcast %cst_86 : f32 to vector<1x9xf32>
    %322 = arith.addf %320, %321 : vector<1x9xf32>
    %323 = arith.mulf %322, %318 : vector<1x9xf32>
    %cst_87 = arith.constant 1.42141378 : f32
    %324 = vector.broadcast %cst_87 : f32 to vector<1x9xf32>
    %325 = arith.addf %323, %324 : vector<1x9xf32>
    %326 = arith.mulf %325, %318 : vector<1x9xf32>
    %cst_88 = arith.constant -0.284496725 : f32
    %327 = vector.broadcast %cst_88 : f32 to vector<1x9xf32>
    %328 = arith.addf %326, %327 : vector<1x9xf32>
    %329 = arith.mulf %328, %318 : vector<1x9xf32>
    %cst_89 = arith.constant 0.254829586 : f32
    %330 = vector.broadcast %cst_89 : f32 to vector<1x9xf32>
    %331 = arith.addf %329, %330 : vector<1x9xf32>
    %332 = arith.mulf %331, %318 : vector<1x9xf32>
    %cst_90 = arith.constant 0.000000e+00 : f32
    %333 = vector.broadcast %cst_90 : f32 to vector<1x9xf32>
    %334 = arith.subf %333, %312 : vector<1x9xf32>
    %335 = arith.mulf %334, %312 : vector<1x9xf32>
    %336 = math.exp %335 : vector<1x9xf32>
    %337 = arith.mulf %332, %336 : vector<1x9xf32>
    %cst_91 = arith.constant 1.000000e+00 : f32
    %338 = vector.broadcast %cst_91 : f32 to vector<1x9xf32>
    %339 = arith.subf %338, %337 : vector<1x9xf32>
    %cst_92 = arith.constant 0.000000e+00 : f32
    %340 = vector.broadcast %cst_92 : f32 to vector<1x9xf32>
    %341 = arith.cmpf oge, %311, %340 : vector<1x9xf32>
    %cst_93 = arith.constant 0.000000e+00 : f32
    %342 = vector.broadcast %cst_93 : f32 to vector<1x9xf32>
    %343 = arith.subf %342, %339 : vector<1x9xf32>
    %344 = arith.select %341, %339, %343 : vector<1x9xi1>, vector<1x9xf32>
    %cst_94 = arith.constant 1.000000e+00 : f32
    %345 = vector.broadcast %cst_94 : f32 to vector<1x9xf32>
    %346 = arith.addf %345, %344 : vector<1x9xf32>
    %347 = arith.mulf %309, %346 : vector<1x9xf32>
    %c344 = arith.constant 344 : index
    %c0_95 = arith.constant 0 : index
    %348 = vector.load %arg4[%c344, %c0_95] : memref<368x144xf32, #tpu.memory_space<vmem>>, vector<9x2xf32>
    %cst_96 = arith.constant dense<0.000000e+00> : vector<1x2xf32>
    %349 = tpu.matmul %347, %348, %cst_96 {dimension_numbers = #tpu.dot_dimension_numbers<[1], [0], [0], [1], [0, 0, 1, 1], [], []>, precision = #tpu.contract_precision<fp32>} : vector<1x9xf32>, vector<9x2xf32>, vector<1x2xf32> -> vector<1x2xf32>
    %c360 = arith.constant 360 : index
    %c0_97 = arith.constant 0 : index
    %350 = vector.load %arg4[%c360, %c0_97] : memref<368x144xf32, #tpu.memory_space<vmem>>, vector<1x2xf32>
    %351 = arith.addf %349, %350 : vector<1x2xf32>
    %c0_98 = arith.constant 0 : index
    %c0_99 = arith.constant 0 : index
    %c0_100 = arith.constant 0 : index
    %352 = vector.load %arg5[%c0_98, %c0_99, %c0_100] : memref<1x1x2xf32, #tpu.memory_space<vmem>>, vector<1x1x2xf32>
    %353 = vector.shape_cast %352 : vector<1x1x2xf32> to vector<1x2xf32>
    %354 = vector.shape_cast %351 : vector<1x2xf32> to vector<1x1x2xf32>
    tpu.vector_store %arg5[%c0_98, %c0_99, %c0_100], %354 {strides = array<i32>} : memref<1x1x2xf32, #tpu.memory_space<vmem>>, vector<1x1x2xf32>,
    return
  }
  func.func @transform_0(%arg0: i32) -> (i32, i32) {
    %c0_i32 = arith.constant 0 : i32
    %c0_i32_0 = arith.constant 0 : i32
    return %arg0, %c0_i32 : i32, i32
  }
  func.func @transform_1(%arg0: i32) -> (i32, i32) {
    %c0_i32 = arith.constant 0 : i32
    %c0_i32_0 = arith.constant 0 : i32
    %c0_i32_1 = arith.constant 0 : i32
    return %c0_i32, %c0_i32_0 : i32, i32
  }
  func.func @transform_2(%arg0: i32) -> (i32, i32, i32) {
    %c0_i32 = arith.constant 0 : i32
    %c0_i32_0 = arith.constant 0 : i32
    %c0_i32_1 = arith.constant 0 : i32
    return %arg0, %c0_i32, %c0_i32_0 : i32, i32, i32
  }
  func.func @transform_3(%arg0: i32) -> (i32, i32) {
    %c0_i32 = arith.constant 0 : i32
    %c0_i32_0 = arith.constant 0 : i32
    %c0_i32_1 = arith.constant 0 : i32
    return %c0_i32, %c0_i32_0 : i32, i32
  }
  func.func @transform_4(%arg0: i32) -> (i32, i32, i32) {
    %c0_i32 = arith.constant 0 : i32
    %c0_i32_0 = arith.constant 0 : i32
    %c0_i32_1 = arith.constant 0 : i32
    return %arg0, %c0_i32, %c0_i32_0 : i32, i32, i32
  }
}

</mosaic_0001>

<llo_original>
// kernel: tpu_custom_call.1
$region0: #{tpu_custom_call.1}
  #allocation0 [shape = 'u32[]', space=smem, size = 0x4, offset = 0x4, fixed_abs, tag = 'smem constant byte address 0x4 - core index']
  #allocation1 [shape = 'u32[72,128]{1,0:T(1,128)}', space=vmem, size = 0x9000, scoped, tag = 'internal scratch']
  %s0 = inlined_call_operand.hbm [shape: f32[16,68], index: 0, kind: input, shape index: {}]
  %s1 = inlined_call_operand.hbm [shape: f32[16,68], index: 1, kind: output, shape index: {}]
  %s2 = sld [smem:[#allocation0]]
  $region18: #{tpu_custom_call.1} parent=0
    _
  %s4 = ssub.s32 1, %s2
  %s5 = scalar_select 0, %s4, %s2
  $region1: #{tpu_custom_call.1} parent=0
    #allocation2 [shape = 'u8[8192]{0}', space=vmem, size = 0x2000, scoped, tag = 'input window, operand 0, single buffered']
    #allocation3 [shape = 's32[1]{0}', space=sflag, size = 0x4, scoped, tag = 'scoped memory for tpu_custom_call.1']
    #allocation4 [shape = 's32[1]{0}', space=sflag, size = 0x4, scoped, tag = 'scoped memory for tpu_custom_call.1']
    #allocation5 [shape = 'u8[8192]{0}', space=vmem, size = 0x2000, scoped, tag = 'output window, operand 0, single buffered']
    %6 = vsyncpa [#allocation3], 0
    %7 = vsyncpa [#allocation4], 0
    // Predicated region
    $region2: #{tpu_custom_call.1} parent=1 // pred_check
      _
    $region3: #{tpu_custom_call.1} parent=1 // pred_check_branch
      %9 = sbr.rel (0) target = $region5
    $region4: #{tpu_custom_call.1} parent=1 // pred_region
      %11 = vsyncadd [#allocation3], 0
      %s12 = sshll.u32 %s0, 4
      %s13 = int_to_ptr.hbm [resolvable:$true] %s12
      %s14 = sshll.u32 [#allocation2], 4
      %s15 = int_to_ptr.vmem [resolvable:$true] %s14
      %20 = dma.hbm_to_vmem [thread:$0]  %s13, 256, %s15, [#allocation3], 128, 128, 8
    $region5: #{tpu_custom_call.1} parent=1 // pred_fallthru
      _
    // Predicated region
    $region6: #{tpu_custom_call.1} parent=1 // pred_check
      _
    $region7: #{tpu_custom_call.1} parent=1 // pred_check_branch
      %22 = sbr.rel (0) target = $region9
    $region8: #{tpu_custom_call.1} parent=1 // pred_region
      %24 = dma.done [#allocation3], 256
    $region9: #{tpu_custom_call.1} parent=1 // pred_fallthru
      _
    %v25 = vld [vmem:[#allocation2] sm:$0xff]
    %v26 = vld [vmem:[#allocation2 + $0x8] sm:$0xff]
    %v27 = vrot.slane %v25, 7
    %v28 = vrot.slane %v26, 7
    %v29 = vlaneseq
    %v30 = vshrl.u32 %v29, 7
    %vm31 = vcmp.lt.s32.totalorder %v30, 1
    %v32 = vsel %vm31, %v27, %v28
    %v33 = vsel %vm31, %v28, %v27
    %vm34 = vcmask 556032
    %35 = vst.msk [vmem:[#allocation5] sm:$0xff] %vm34, %v33
    %36 = vst.msk [vmem:[#allocation5 + $0x8] sm:$0xff] %vm34, %v32
    // Predicated region
    $region10: #{tpu_custom_call.1} parent=1 // pred_check
      _
    $region11: #{tpu_custom_call.1} parent=1 // pred_check_branch
      %38 = sbr.rel (0) target = $region13
    $region12: #{tpu_custom_call.1} parent=1 // pred_region
      %40 = vsyncadd [#allocation4], 0
      %s41 = sshll.u32 [#allocation5], 4
      %s42 = int_to_ptr.vmem [resolvable:$true] %s41
      %s43 = sshll.u32 %s1, 4
      %s44 = int_to_ptr.hbm [resolvable:$true] %s43
      %49 = dma.vmem_to_hbm [thread:$0]  %s42, 256, %s44, [#allocation4], 128, 128, 8
    $region13: #{tpu_custom_call.1} parent=1 // pred_fallthru
      _
    // Predicated region
    $region14: #{tpu_custom_call.1} parent=1 // pred_check
      _
    $region15: #{tpu_custom_call.1} parent=1 // pred_check_branch
      %51 = sbr.rel (0) target = $region17
    $region16: #{tpu_custom_call.1} parent=1 // pred_region
      %53 = dma.done [#allocation4], 256
    $region17: #{tpu_custom_call.1} parent=1 // pred_fallthru
      _
    %54 = vsyncpa [#allocation3], 1
    %55 = vsyncpa [#allocation4], 1

// kernel: forward.1
$region0: #{forward.1}
  #allocation0 [shape = 'u32[]', space=smem, size = 0x4, offset = 0x4, fixed_abs, tag = 'smem constant byte address 0x4 - core index']
  #allocation1 [shape = 'u32[72,128]{1,0:T(1,128)}', space=vmem, size = 0x9000, scoped, tag = 'internal scratch']
  %s0 = inlined_call_operand.vmem [shape: f32[32,52], index: 0, kind: input, shape index: {}]
  %s1 = inlined_call_operand.vmem [shape: f32[16,52], index: 1, kind: input, shape index: {}]
  %s2 = inlined_call_operand.vmem [shape: f32[2,1,7], index: 2, kind: input, shape index: {}]
  %s3 = inlined_call_operand.vmem [shape: f32[368,144], index: 3, kind: input, shape index: {}]
  %s4 = inlined_call_operand.vmem [shape: f32[2,1,2], index: 4, kind: output, shape index: {}]
  %s5 = sld [smem:[#allocation0]]
  $region49: #{forward.1} parent=0
    _
  %s7 = ssub.s32 1, %s5
  %s8 = scalar_select 0, %s7, %s5
  loop: start=0, step=1, limit=4
  $region2: #{forward.1} parent=0 // loop_pre_header
    _
  $region3: #{forward.1} parent=0 // loop_header
    %s10 = sphi 0, %s14
    %p11 = scmp.ge.s32.totalorder %s10, 4
    %s20 = sphi 0, %s22
    %s23 = sphi 0, %s20
    %s24 = sphi 0, %s23
    %s40 = sphi 0, %s24
    %s44 = sphi 0, %s44
    %s46 = sphi 0, %s44
    %s47 = sphi 0, %s46
    %s61 = sphi 0, %s47
    %s67 = sphi 0, %s69
    %s70 = sphi 0, %s67
    %s71 = sphi 0, %s70
    %s87 = sphi 0, %s71
    %s91 = sphi 0, %s91
    %s93 = sphi 0, %s91
    %s94 = sphi 0, %s93
    %s108 = sphi 0, %s94
    %s114 = sphi 0, %s116
    %s117 = sphi 0, %s114
    %s118 = sphi 0, %s117
    %s134 = sphi 0, %s118
  $region4: #{forward.1} parent=0 // loop_header_branch
    %13 = sbr.rel (%p11) target = $region8
  $region5: #{forward.1} parent=0 // loop_body
    %s15 = ssub.s32 %s10, 1
    %s16 = ssub.s32 %s10, 2
    %s17 = sadd.s32 %s10, 1
    %s18 = ssub.s32 %s10, %s17
    %p19 = scmp.eq.s32.totalorder %s18, 0
    %s21 = sadd.s32 %s20, 1
    %s22 = scalar_select %p19, %s20, %s21
    %p25 = pneg %p19
    %p26 = scmp.eq.s32.totalorder %s10, 1
    %p27 = por %p25, %p26
    %p28 = scmp.ne.s32.totalorder %s20, %s23
    %p29 = scmp.eq.s32.totalorder %s10, 0
    %p30 = por %p28, %p29
    %p31 = scmp.ne.s32.totalorder %s20, %s23
    %p32 = scmp.eq.s32.totalorder %s15, 1
    %p33 = por %p31, %p32
    %p34 = scmp.ne.s32.totalorder %s23, %s24
    %p35 = scmp.eq.s32.totalorder %s15, 0
    %p36 = por %p34, %p35
    %p37 = scmp.ne.s32.totalorder %s23, %s24
    %p38 = scmp.eq.s32.totalorder %s16, 1
    %p39 = por %p37, %p38
    %p41 = scmp.ne.s32.totalorder %s24, %s40
    %p42 = scmp.eq.s32.totalorder %s16, 0
    %p43 = por %p41, %p42
    %s45 = sadd.s32 %s44, 1
    %p48 = scmp.eq.s32.totalorder %s10, 1
    %p49 = scmp.ne.s32.totalorder %s44, %s46
    %p50 = scmp.eq.s32.totalorder %s10, 0
    %p51 = por %p49, %p50
    %p52 = scmp.ne.s32.totalorder %s44, %s46
    %p53 = scmp.eq.s32.totalorder %s15, 1
    %p54 = por %p52, %p53
    %p55 = scmp.ne.s32.totalorder %s46, %s47
    %p56 = scmp.eq.s32.totalorder %s15, 0
    %p57 = por %p55, %p56
    %p58 = scmp.ne.s32.totalorder %s46, %s47
    %p59 = scmp.eq.s32.totalorder %s16, 1
    %p60 = por %p58, %p59
    %p62 = scmp.ne.s32.totalorder %s47, %s61
    %p63 = scmp.eq.s32.totalorder %s16, 0
    %p64 = por %p62, %p63
    %s65 = ssub.s32 %s10, %s17
    %p66 = scmp.eq.s32.totalorder %s65, 0
    %s68 = sadd.s32 %s67, 1
    %s69 = scalar_select %p66, %s67, %s68
    %p72 = pneg %p66
    %p73 = scmp.eq.s32.totalorder %s10, 1
    %p74 = por %p72, %p73
    %p75 = scmp.ne.s32.totalorder %s67, %s70
    %p76 = scmp.eq.s32.totalorder %s10, 0
    %p77 = por %p75, %p76
    %p78 = scmp.ne.s32.totalorder %s67, %s70
    %p79 = scmp.eq.s32.totalorder %s15, 1
    %p80 = por %p78, %p79
    %p81 = scmp.ne.s32.totalorder %s70, %s71
    %p82 = scmp.eq.s32.totalorder %s15, 0
    %p83 = por %p81, %p82
    %p84 = scmp.ne.s32.totalorder %s70, %s71
    %p85 = scmp.eq.s32.totalorder %s16, 1
    %p86 = por %p84, %p85
    %p88 = scmp.ne.s32.totalorder %s71, %s87
    %p89 = scmp.eq.s32.totalorder %s16, 0
    %p90 = por %p88, %p89
    %s92 = sadd.s32 %s91, 1
    %p95 = scmp.eq.s32.totalorder %s10, 1
    %p96 = scmp.ne.s32.totalorder %s91, %s93
    %p97 = scmp.eq.s32.totalorder %s10, 0
    %p98 = por %p96, %p97
    %p99 = scmp.ne.s32.totalorder %s91, %s93
    %p100 = scmp.eq.s32.totalorder %s15, 1
    %p101 = por %p99, %p100
    %p102 = scmp.ne.s32.totalorder %s93, %s94
    %p103 = scmp.eq.s32.totalorder %s15, 0
    %p104 = por %p102, %p103
    %p105 = scmp.ne.s32.totalorder %s93, %s94
    %p106 = scmp.eq.s32.totalorder %s16, 1
    %p107 = por %p105, %p106
    %p109 = scmp.ne.s32.totalorder %s94, %s108
    %p110 = scmp.eq.s32.totalorder %s16, 0
    %p111 = por %p109, %p110
    %s112 = ssub.s32 %s10, %s17
    %p113 = scmp.eq.s32.totalorder %s112, 0
    %s115 = sadd.s32 %s114, 1
    %s116 = scalar_select %p113, %s114, %s115
    %p119 = pneg %p113
    %p120 = scmp.eq.s32.totalorder %s10, 1
    %p121 = por %p119, %p120
    %p122 = scmp.ne.s32.totalorder %s114, %s117
    %p123 = scmp.eq.s32.totalorder %s10, 0
    %p124 = por %p122, %p123
    %p125 = scmp.ne.s32.totalorder %s114, %s117
    %p126 = scmp.eq.s32.totalorder %s15, 1
    %p127 = por %p125, %p126
    %p128 = scmp.ne.s32.totalorder %s117, %s118
    %p129 = scmp.eq.s32.totalorder %s15, 0
    %p130 = por %p128, %p129
    %p131 = scmp.ne.s32.totalorder %s117, %s118
    %p132 = scmp.eq.s32.totalorder %s16, 1
    %p133 = por %p131, %p132
    %p135 = scmp.ne.s32.totalorder %s118, %s134
    %p136 = scmp.eq.s32.totalorder %s16, 0
    %p137 = por %p135, %p136
    %p138 = scmp.le.s32.totalorder 1, %s10
    %p139 = scmp.lt.s32.totalorder %s10, 3
    %p140 = pnand %p138, %p139
    %p141 = pneg %p140
    // Predicated region
    $region9: #{forward.1} parent=5 // pred_check
      _
    $region10: #{forward.1} parent=5 // pred_check_branch
      %143 = sbr.rel (%p140) target = $region12
    $region11: #{forward.1} parent=5 // pred_region
      %s144 = ssub.s32 %s10, 1
      // Predicated region
      $region13: #{forward.1} parent=11 // pred_check
        %p145 = pneg %p57
      $region14: #{forward.1} parent=11 // pred_check_branch
        %147 = sbr.rel (%p145) target = $region16
      $region15: #{forward.1} parent=11 // pred_region
        _
      $region16: #{forward.1} parent=11 // pred_fallthru
        _
      // Predicated region
      $region17: #{forward.1} parent=11 // pred_check
        %p148 = pneg %p104
      $region18: #{forward.1} parent=11 // pred_check_branch
        %150 = sbr.rel (%p148) target = $region20
      $region19: #{forward.1} parent=11 // pred_region
        _
      $region20: #{forward.1} parent=11 // pred_fallthru
        _
    $region12: #{forward.1} parent=5 // pred_fallthru
      _
    %p151 = scmp.lt.s32.totalorder %s10, 2
    // Predicated region
    $region21: #{forward.1} parent=5 // pred_check
      %p152 = pneg %p151
    $region22: #{forward.1} parent=5 // pred_check_branch
      %154 = sbr.rel (%p152) target = $region24
    $region23: #{forward.1} parent=5 // pred_region
      // Predicated region
      $region25: #{forward.1} parent=23 // pred_check
        %p155 = pneg %p30
      $region26: #{forward.1} parent=23 // pred_check_branch
        %157 = sbr.rel (%p155) target = $region28
      $region27: #{forward.1} parent=23 // pred_region
        %s158 = smul.u32 2, %s10
        %p159 = scmp.lt.s32.totalorder %s158, 3
        %s160 = scalar_select %p159, %s158, 3
        %s161 = smul.addr %s160, 8
        %s162 = scalar_lea.vmem %s0, %s161
        %s163 = smul.u32 2, %s10
      $region28: #{forward.1} parent=23 // pred_fallthru
        _
      // Predicated region
      $region29: #{forward.1} parent=23 // pred_check
        %p164 = pneg %p77
      $region30: #{forward.1} parent=23 // pred_check_branch
        %166 = sbr.rel (%p164) target = $region32
      $region31: #{forward.1} parent=23 // pred_region
        %p167 = scmp.lt.s32.totalorder %s10, 1
        %s168 = scalar_select %p167, %s10, 1
        %s169 = scalar_lea.vmem %s2, %s168
      $region32: #{forward.1} parent=23 // pred_fallthru
        _
    $region24: #{forward.1} parent=5 // pred_fallthru
      _
    %p170 = scmp.le.s32.totalorder 1, %s10
    %p171 = scmp.lt.s32.totalorder %s10, 3
    %p172 = pnand %p170, %p171
    %p173 = pneg %p172
    // Predicated region
    $region33: #{forward.1} parent=5 // pred_check
      _
    $region34: #{forward.1} parent=5 // pred_check_branch
      %175 = sbr.rel (%p172) target = $region36
    $region35: #{forward.1} parent=5 // pred_region
      %s176 = ssub.s32 %s10, 1
      %s177 = smul.u32 2, %s15
      %p178 = scmp.lt.s32.totalorder %s177, 3
      %s179 = scalar_select %p178, %s177, 3
      %s180 = smul.addr %s179, 8
      %s181 = scalar_lea.vmem %s0, %s180
      %p182 = pneg %p36
      %p183 = pneg %p33
      %p184 = pneg %p57
      %p185 = pneg %p54
      %p186 = scmp.lt.s32.totalorder %s15, 1
      %s187 = scalar_select %p186, %s15, 1
      %s188 = scalar_lea.vmem %s2, %s187
      %p189 = pneg %p83
      %p190 = pneg %p80
      %p191 = pneg %p104
      %p192 = pneg %p101
      %p193 = pneg %p130
      %p194 = pneg %p127
      %p195 = scmp.lt.s32.totalorder %s15, 1
      %s196 = scalar_select %p195, %s15, 1
      %s197 = scalar_lea.vmem %s4, %s196
      %s198 = smul.u32 2, %s15
      %p199 = scmp.lt.s32.totalorder %s198, 3
      %s200 = scalar_select %p199, %s198, 3
      %s201 = smul.addr %s200, 8
      %s202 = scalar_lea.vmem %s0, %s201
      %s203 = smul.u32 2, %s15
      %p204 = scmp.lt.s32.totalorder %s15, 1
      %s205 = scalar_select %p204, %s15, 1
      %s206 = scalar_lea.vmem %s2, %s205
      %p207 = scmp.lt.s32.totalorder %s15, 1
      %s208 = scalar_select %p207, %s15, 1
      %s209 = scalar_lea.vmem %s4, %s208
      %v210 = vld [vmem:[%s202] sm:$0xff]
      %v211 = vld [vmem:[%s202 + $0x8] sm:$0xff]
      %v212 = vld [vmem:[%s1] sm:$0xff]
      %v213 = vld [vmem:[%s1 + $0x8] sm:$0xff]
      %v214 = vsub.f32 %v210, %v212
      %v215 = vsub.f32 %v211, %v213
      %v216 = vld [vmem:[%s3 + $0xa0] sm:$0xff]
      %v217 = vld [vmem:[%s3 + $0xb0] sm:$0xff]
      %v218 = vld [vmem:[%s3 + $0xc0] sm:$0xff]
      %v219 = vld [vmem:[%s3 + $0xd0] sm:$0xff]
      %v220 = vld [vmem:[%s3 + $0xe0] sm:$0xff]
      %v221 = vld [vmem:[%s3 + $0xf0] sm:$0xff]
      %v222 = vld [vmem:[%s3 + $0x100] sm:$0xf]
      %v223 = vld [vmem:[%s3 + $0x110] ss:$0 sm:$0xff]
      %vm224 = vcmask 424960
      %v226 = vsel %vm224, %v214, 0
      %v229 = vsel %vm224, %v215, 0
      %vm231 = vcmask 1043456
      %v233 = vsel %vm231, %v222, 0
      %235 = vmatpush.msra.mxu0 0.0
      %236 = vmatpush.msra.mxu0 0.0
      %237 = vmatpush.msra.mxu0 0.0
      %238 = vmatpush.msra.mxu0 0.0
      %239 = vmatpush.msra.mxu0 0.0
      %240 = vmatpush.msra.mxu0 0.0
      %241 = vmatpush.msra.mxu0 0.0
      %242 = vmatpush.msra.mxu0 0.0
      %243 = vmatpush.msra.mxu0 0.0
      %v244 = vand.u32 %v233, 4294901760
      %245 = vmatpush.msra.mxu0 %v244
      %v246 = vand.u32 %v221, 4294901760
      %247 = vmatpush.msra.mxu0 %v246
      %v248 = vand.u32 %v220, 4294901760
      %249 = vmatpush.msra.mxu0 %v248
      %v250 = vand.u32 %v219, 4294901760
      %251 = vmatpush.msra.mxu0 %v250
      %v252 = vand.u32 %v218, 4294901760
      %253 = vmatpush.msra.mxu0 %v252
      %v254 = vand.u32 %v217, 4294901760
      %255 = vmatpush.msra.mxu0 %v254
      %v256 = vand.u32 %v216, 4294901760
      %257 = vmatpush.msra.mxu0 %v256
      %v258 = vand.u32 %v226, 4294901760
      %v259 = vsub.f32 %v226, %v258
      %v260 = vand.u32 %v259, 4294901760
      %v261 = vsub.f32 %v259, %v260
      %v262 = vand.u32 %v261, 4294901760
      %263 = vmatmul.f32.gmra.mxu0 %v262
      %v264 = vpop.f32.mrf.mxu0
      %v265 = vadd.f32 %v223, %v264
      %v266 = vand.u32 %v229, 4294901760
      %v267 = vsub.f32 %v229, %v266
      %v268 = vand.u32 %v267, 4294901760
      %v269 = vsub.f32 %v267, %v268
      %v270 = vand.u32 %v269, 4294901760
      %271 = vmatmul.f32.gmra.mxu0 %v270
      %v272 = vpop.f32.mrf.mxu0
      %v273 = vadd.f32 %v223, %v272
      %274 = vdwg.mxu0
      %275 = vmatpush.msra.mxu0 0.0
      %276 = vmatpush.msra.mxu0 0.0
      %277 = vmatpush.msra.mxu0 0.0
      %278 = vmatpush.msra.mxu0 0.0
      %279 = vmatpush.msra.mxu0 0.0
      %280 = vmatpush.msra.mxu0 0.0
      %281 = vmatpush.msra.mxu0 0.0
      %282 = vmatpush.msra.mxu0 0.0
      %283 = vmatpush.msra.mxu0 0.0
      %v284 = vand.u32 %v233, 4294901760
      %v285 = vsub.f32 %v233, %v284
      %v286 = vand.u32 %v285, 4294901760
      %v287 = vsub.f32 %v285, %v286
      %v288 = vand.u32 %v287, 4294901760
      %289 = vmatpush.msra.mxu0 %v288
      %v290 = vand.u32 %v221, 4294901760
      %v291 = vsub.f32 %v221, %v290
      %v292 = vand.u32 %v291, 4294901760
      %v293 = vsub.f32 %v291, %v292
      %v294 = vand.u32 %v293, 4294901760
      %295 = vmatpush.msra.mxu0 %v294
      %v296 = vand.u32 %v220, 4294901760
      %v297 = vsub.f32 %v220, %v296
      %v298 = vand.u32 %v297, 4294901760
      %v299 = vsub.f32 %v297, %v298
      %v300 = vand.u32 %v299, 4294901760
      %301 = vmatpush.msra.mxu0 %v300
      %v302 = vand.u32 %v219, 4294901760
      %v303 = vsub.f32 %v219, %v302
      %v304 = vand.u32 %v303, 4294901760
      %v305 = vsub.f32 %v303, %v304
      %v306 = vand.u32 %v305, 4294901760
      %307 = vmatpush.msra.mxu0 %v306
      %v308 = vand.u32 %v218, 4294901760
      %v309 = vsub.f32 %v218, %v308
      %v310 = vand.u32 %v309, 4294901760
      %v311 = vsub.f32 %v309, %v310
      %v312 = vand.u32 %v311, 4294901760
      %313 = vmatpush.msra.mxu0 %v312
      %v314 = vand.u32 %v217, 4294901760
      %v315 = vsub.f32 %v217, %v314
      %v316 = vand.u32 %v315, 4294901760
      %v317 = vsub.f32 %v315, %v316
      %v318 = vand.u32 %v317, 4294901760
      %319 = vmatpush.msra.mxu0 %v318
      %v320 = vand.u32 %v216, 4294901760
      %v321 = vsub.f32 %v216, %v320
      %v322 = vand.u32 %v321, 4294901760
      %v323 = vsub.f32 %v321, %v322
      %v324 = vand.u32 %v323, 4294901760
      %325 = vmatpush.msra.mxu0 %v324
      %v326 = vand.u32 %v226, 4294901760
      %327 = vmatmul.f32.gmra.mxu0 %v326
      %v328 = vpop.f32.mrf.mxu0
      %v329 = vadd.f32 %v265, %v328
      %v330 = vand.u32 %v229, 4294901760
      %331 = vmatmul.f32.gmra.mxu0 %v330
      %v332 = vpop.f32.mrf.mxu0
      %v333 = vadd.f32 %v273, %v332
      %334 = vdwg.mxu0
      %335 = vmatpush.msra.mxu0 0.0
      %336 = vmatpush.msra.mxu0 0.0
      %337 = vmatpush.msra.mxu0 0.0
      %338 = vmatpush.msra.mxu0 0.0
      %339 = vmatpush.msra.mxu0 0.0
      %340 = vmatpush.msra.mxu0 0.0
      %341 = vmatpush.msra.mxu0 0.0
      %342 = vmatpush.msra.mxu0 0.0
      %343 = vmatpush.msra.mxu0 0.0
      %v344 = vand.u32 %v233, 4294901760
      %v345 = vsub.f32 %v233, %v344
      %346 = vmatpush.msra.mxu0 %v345
      %v347 = vand.u32 %v221, 4294901760
      %v348 = vsub.f32 %v221, %v347
      %349 = vmatpush.msra.mxu0 %v348
      %v350 = vand.u32 %v220, 4294901760
      %v351 = vsub.f32 %v220, %v350
      %352 = vmatpush.msra.mxu0 %v351
      %v353 = vand.u32 %v219, 4294901760
      %v354 = vsub.f32 %v219, %v353
      %355 = vmatpush.msra.mxu0 %v354
      %v356 = vand.u32 %v218, 4294901760
      %v357 = vsub.f32 %v218, %v356
      %358 = vmatpush.msra.mxu0 %v357
      %v359 = vand.u32 %v217, 4294901760
      %v360 = vsub.f32 %v217, %v359
      %361 = vmatpush.msra.mxu0 %v360
      %v362 = vand.u32 %v216, 4294901760
      %v363 = vsub.f32 %v216, %v362
      %364 = vmatpush.msra.mxu0 %v363
      %v365 = vand.u32 %v226, 4294901760
      %v366 = vsub.f32 %v226, %v365
      %367 = vmatmul.f32.gmra.mxu0 %v366
      %v368 = vpop.f32.mrf.mxu0
      %v369 = vadd.f32 %v329, %v368
      %v370 = vand.u32 %v229, 4294901760
      %v371 = vsub.f32 %v229, %v370
      %372 = vmatmul.f32.gmra.mxu0 %v371
      %v373 = vpop.f32.mrf.mxu0
      %v374 = vadd.f32 %v333, %v373
      %375 = vdwg.mxu0
      %376 = vmatpush.msra.mxu0 0.0
      %377 = vmatpush.msra.mxu0 0.0
      %378 = vmatpush.msra.mxu0 0.0
      %379 = vmatpush.msra.mxu0 0.0
      %380 = vmatpush.msra.mxu0 0.0
      %381 = vmatpush.msra.mxu0 0.0
      %382 = vmatpush.msra.mxu0 0.0
      %383 = vmatpush.msra.mxu0 0.0
      %384 = vmatpush.msra.mxu0 0.0
      %v385 = vand.u32 %v233, 4294901760
      %386 = vmatpush.msra.mxu0 %v385
      %v387 = vand.u32 %v221, 4294901760
      %388 = vmatpush.msra.mxu0 %v387
      %v389 = vand.u32 %v220, 4294901760
      %390 = vmatpush.msra.mxu0 %v389
      %v391 = vand.u32 %v219, 4294901760
      %392 = vmatpush.msra.mxu0 %v391
      %v393 = vand.u32 %v218, 4294901760
      %394 = vmatpush.msra.mxu0 %v393
      %v395 = vand.u32 %v217, 4294901760
      %396 = vmatpush.msra.mxu0 %v395
      %v397 = vand.u32 %v216, 4294901760
      %398 = vmatpush.msra.mxu0 %v397
      %v399 = vand.u32 %v226, 4294901760
      %v400 = vsub.f32 %v226, %v399
      %v401 = vand.u32 %v400, 4294901760
      %402 = vmatmul.f32.gmra.mxu0 %v401
      %v403 = vpop.f32.mrf.mxu0
      %v404 = vadd.f32 %v369, %v403
      %v405 = vand.u32 %v229, 4294901760
      %v406 = vsub.f32 %v229, %v405
      %v407 = vand.u32 %v406, 4294901760
      %408 = vmatmul.f32.gmra.mxu0 %v407
      %v409 = vpop.f32.mrf.mxu0
      %v410 = vadd.f32 %v374, %v409
      %411 = vdwg.mxu0
      %412 = vmatpush.msra.mxu0 0.0
      %413 = vmatpush.msra.mxu0 0.0
      %414 = vmatpush.msra.mxu0 0.0
      %415 = vmatpush.msra.mxu0 0.0
      %416 = vmatpush.msra.mxu0 0.0
      %417 = vmatpush.msra.mxu0 0.0
      %418 = vmatpush.msra.mxu0 0.0
      %419 = vmatpush.msra.mxu0 0.0
      %420 = vmatpush.msra.mxu0 0.0
      %v421 = vand.u32 %v233, 4294901760
      %v422 = vsub.f32 %v233, %v421
      %v423 = vand.u32 %v422, 4294901760
      %424 = vmatpush.msra.mxu0 %v423
      %v425 = vand.u32 %v221, 4294901760
      %v426 = vsub.f32 %v221, %v425
      %v427 = vand.u32 %v426, 4294901760
      %428 = vmatpush.msra.mxu0 %v427
      %v429 = vand.u32 %v220, 4294901760
      %v430 = vsub.f32 %v220, %v429
      %v431 = vand.u32 %v430, 4294901760
      %432 = vmatpush.msra.mxu0 %v431
      %v433 = vand.u32 %v219, 4294901760
      %v434 = vsub.f32 %v219, %v433
      %v435 = vand.u32 %v434, 4294901760
      %436 = vmatpush.msra.mxu0 %v435
      %v437 = vand.u32 %v218, 4294901760
      %v438 = vsub.f32 %v218, %v437
      %v439 = vand.u32 %v438, 4294901760
      %440 = vmatpush.msra.mxu0 %v439
      %v441 = vand.u32 %v217, 4294901760
      %v442 = vsub.f32 %v217, %v441
      %v443 = vand.u32 %v442, 4294901760
      %444 = vmatpush.msra.mxu0 %v443
      %v445 = vand.u32 %v216, 4294901760
      %v446 = vsub.f32 %v216, %v445
      %v447 = vand.u32 %v446, 4294901760
      %448 = vmatpush.msra.mxu0 %v447
      %v449 = vand.u32 %v226, 4294901760
      %450 = vmatmul.f32.gmra.mxu0 %v449
      %v451 = vpop.f32.mrf.mxu0
      %v452 = vadd.f32 %v404, %v451
      %v453 = vand.u32 %v229, 4294901760
      %454 = vmatmul.f32.gmra.mxu0 %v453
      %v455 = vpop.f32.mrf.mxu0
      %v456 = vadd.f32 %v410, %v455
      %457 = vdwg.mxu0
      %458 = vmatpush.msra.mxu0 0.0
      %459 = vmatpush.msra.mxu0 0.0
      %460 = vmatpush.msra.mxu0 0.0
      %461 = vmatpush.msra.mxu0 0.0
      %462 = vmatpush.msra.mxu0 0.0
      %463 = vmatpush.msra.mxu0 0.0
      %464 = vmatpush.msra.mxu0 0.0
      %465 = vmatpush.msra.mxu0 0.0
      %466 = vmatpush.msra.mxu0 0.0
      %v467 = vand.u32 %v233, 4294901760
      %468 = vmatpush.msra.mxu0 %v467
      %v469 = vand.u32 %v221, 4294901760
      %470 = vmatpush.msra.mxu0 %v469
      %v471 = vand.u32 %v220, 4294901760
      %472 = vmatpush.msra.mxu0 %v471
      %v473 = vand.u32 %v219, 4294901760
      %474 = vmatpush.msra.mxu0 %v473
      %v475 = vand.u32 %v218, 4294901760
      %476 = vmatpush.msra.mxu0 %v475
      %v477 = vand.u32 %v217, 4294901760
      %478 = vmatpush.msra.mxu0 %v477
      %v479 = vand.u32 %v216, 4294901760
      %480 = vmatpush.msra.mxu0 %v479
      %v481 = vand.u32 %v226, 4294901760
      %482 = vmatmul.f32.gmra.mxu0 %v481
      %v483 = vpop.f32.mrf.mxu0
      %v484 = vadd.f32 %v452, %v483
      %v485 = vand.u32 %v229, 4294901760
      %486 = vmatmul.f32.gmra.mxu0 %v485
      %v487 = vpop.f32.mrf.mxu0
      %v488 = vadd.f32 %v456, %v487
      %489 = vdwg.mxu0
      %v490 = vlaneseq
      %v491 = vshrl.u32 %v490, 7
      %v492 = vadd.s32 %v491, 8
      %vm495 = vcmask 1046528
      %v496 = vrot.slane %v484, 1
      %v497 = vrot.slane %v488, 1
      %v498 = vsel %vm495, %v496, %v497
      %v502 = vsel %vm495, %v497, %v496
      %v503 = vrot.slane %v488, 7
      %vm505 = vcmask 1040384
      %v506 = vrot.slane %v484, 7
      %v507 = vsel %vm505, %v506, %v503
      %v510 = vsel %vm505, %v503, %v506
      %v511 = vand.u32 %v491, 1
      %v512 = vand.u32 %v492, 1
      %vm513 = vcmp.eq.s32.totalorder %v511, 0
      %vm514 = vcmp.eq.s32.totalorder %v512, 0
      %v515 = vsel %vm513, 1, 0
      %v516 = vsel %vm514, 1, 0
      %vm517 = vcmp.eq.s32.totalorder %v515, 1
      %vm518 = vcmp.eq.s32.totalorder %v516, 1
      %v519 = vsel %vm517, %v498, %v510
      %v520 = vsel %vm518, %v502, %v507
      %v521 = vand.u32 %v491, 2
      %v522 = vand.u32 %v492, 2
      %vm523 = vcmp.eq.s32.totalorder %v521, 0
      %vm524 = vcmp.eq.s32.totalorder %v522, 0
      %vm525 = vmxor %vm523, %vm513
      %vm526 = vmxor %vm524, %vm514
      %vm527 = vmxor %vm525, 1
      %vm528 = vmxor %vm526, 1
      %v529 = vmin.f32 %v484, %v519
      %v530 = vmin.f32 %v488, %v520
      %v531 = vmax.f32 %v484, %v519
      %v532 = vmax.f32 %v488, %v520
      %v533 = vsel %vm527, 1, 0
      %v534 = vsel %vm528, 1, 0
      %vm535 = vcmp.eq.s32.totalorder %v533, 1
      %vm536 = vcmp.eq.s32.totalorder %v534, 1
      %v537 = vsel %vm535, %v529, %v531
      %v538 = vsel %vm536, %v530, %v532
      %vm541 = vcmask 1045504
      %v542 = vrot.slane %v537, 2
      %v543 = vrot.slane %v538, 2
      %v544 = vsel %vm541, %v542, %v543
      %v548 = vsel %vm541, %v543, %v542
      %v549 = vrot.slane %v538, 6
      %vm551 = vcmask 1041408
      %v552 = vrot.slane %v537, 6
      %v553 = vsel %vm551, %v552, %v549
      %v556 = vsel %vm551, %v549, %v552
      %v557 = vsel %vm523, 1, 0
      %v558 = vsel %vm524, 1, 0
      %vm559 = vcmp.eq.s32.totalorder %v557, 1
      %vm560 = vcmp.eq.s32.totalorder %v558, 1
      %v561 = vsel %vm559, %v544, %v556
      %v562 = vsel %vm560, %v548, %v553
      %v563 = vand.u32 %v491, 4
      %v564 = vand.u32 %v492, 4
      %vm565 = vcmp.eq.s32.totalorder %v563, 0
      %vm566 = vcmp.eq.s32.totalorder %v564, 0
      %vm567 = vmxor %vm565, %vm523
      %vm568 = vmxor %vm566, %vm524
      %vm569 = vmxor %vm567, 1
      %vm570 = vmxor %vm568, 1
      %v571 = vmin.f32 %v537, %v561
      %v572 = vmin.f32 %v538, %v562
      %v573 = vmax.f32 %v537, %v561
      %v574 = vmax.f32 %v538, %v562
      %v575 = vsel %vm569, 1, 0
      %v576 = vsel %vm570, 1, 0
      %vm577 = vcmp.eq.s32.totalorder %v575, 1
      %vm578 = vcmp.eq.s32.totalorder %v576, 1
      %v579 = vsel %vm577, %v571, %v573
      %v580 = vsel %vm578, %v572, %v574
      %v583 = vrot.slane %v579, 1
      %v584 = vrot.slane %v580, 1
      %v585 = vsel %vm495, %v583, %v584
      %v589 = vsel %vm495, %v584, %v583
      %v590 = vrot.slane %v580, 7
      %v592 = vrot.slane %v579, 7
      %v593 = vsel %vm505, %v592, %v590
      %v596 = vsel %vm505, %v590, %v592
      %v597 = vsel %vm517, %v585, %v596
      %v598 = vsel %vm518, %v589, %v593
      %vm599 = vmxor %vm565, %vm513
      %vm600 = vmxor %vm566, %vm514
      %vm601 = vmxor %vm599, 1
      %vm602 = vmxor %vm600, 1
      %v603 = vmin.f32 %v579, %v597
      %v604 = vmin.f32 %v580, %v598
      %v605 = vmax.f32 %v579, %v597
      %v606 = vmax.f32 %v580, %v598
      %v607 = vsel %vm601, 1, 0
      %v608 = vsel %vm602, 1, 0
      %vm609 = vcmp.eq.s32.totalorder %v607, 1
      %vm610 = vcmp.eq.s32.totalorder %v608, 1
      %v611 = vsel %vm609, %v603, %v605
      %v612 = vsel %vm610, %v604, %v606
      %v615 = vrot.slane %v611, 4
      %v616 = vrot.slane %v612, 4
      %v617 = vsel %vm231, %v615, %v616
      %v621 = vsel %vm231, %v616, %v615
      %v622 = vsel %vm565, 1, 0
      %v623 = vsel %vm566, 1, 0
      %vm624 = vcmp.eq.s32.totalorder %v622, 1
      %vm625 = vcmp.eq.s32.totalorder %v623, 1
      %v626 = vsel %vm624, %v617, %v621
      %v627 = vsel %vm625, %v621, %v617
      %v628 = vand.u32 %v491, 8
      %v629 = vand.u32 %v492, 8
      %vm630 = vcmp.eq.s32.totalorder %v628, 0
      %vm631 = vcmp.eq.s32.totalorder %v629, 0
      %vm632 = vmxor %vm630, %vm565
      %vm633 = vmxor %vm631, %vm566
      %vm634 = vmxor %vm632, 1
      %vm635 = vmxor %vm633, 1
      %v636 = vmin.f32 %v611, %v626
      %v637 = vmin.f32 %v612, %v627
      %v638 = vmax.f32 %v611, %v626
      %v639 = vmax.f32 %v612, %v627
      %v640 = vsel %vm634, 1, 0
      %v641 = vsel %vm635, 1, 0
      %vm642 = vcmp.eq.s32.totalorder %v640, 1
      %vm643 = vcmp.eq.s32.totalorder %v641, 1
      %v644 = vsel %vm642, %v636, %v638
      %v645 = vsel %vm643, %v637, %v639
      %v648 = vrot.slane %v644, 2
      %v649 = vrot.slane %v645, 2
      %v650 = vsel %vm541, %v648, %v649
      %v654 = vsel %vm541, %v649, %v648
      %v655 = vrot.slane %v645, 6
      %v657 = vrot.slane %v644, 6
      %v658 = vsel %vm551, %v657, %v655
      %v661 = vsel %vm551, %v655, %v657
      %v662 = vsel %vm559, %v650, %v661
      %v663 = vsel %vm560, %v654, %v658
      %vm664 = vmxor %vm630, %vm523
      %vm665 = vmxor %vm631, %vm524
      %vm666 = vmxor %vm664, 1
      %vm667 = vmxor %vm665, 1
      %v668 = vmin.f32 %v644, %v662
      %v669 = vmin.f32 %v645, %v663
      %v670 = vmax.f32 %v644, %v662
      %v671 = vmax.f32 %v645, %v663
      %v672 = vsel %vm666, 1, 0
      %v673 = vsel %vm667, 1, 0
      %vm674 = vcmp.eq.s32.totalorder %v672, 1
      %vm675 = vcmp.eq.s32.totalorder %v673, 1
      %v676 = vsel %vm674, %v668, %v670
      %v677 = vsel %vm675, %v669, %v671
      %v680 = vrot.slane %v676, 1
      %v681 = vrot.slane %v677, 1
      %v682 = vsel %vm495, %v680, %v681
      %v686 = vsel %vm495, %v681, %v680
      %v687 = vrot.slane %v677, 7
      %v689 = vrot.slane %v676, 7
      %v690 = vsel %vm505, %v689, %v687
      %v693 = vsel %vm505, %v687, %v689
      %v694 = vsel %vm517, %v682, %v693
      %v695 = vsel %vm518, %v686, %v690
      %vm696 = vmxor %vm630, %vm513
      %vm697 = vmxor %vm631, %vm514
      %vm698 = vmxor %vm696, 1
      %vm699 = vmxor %vm697, 1
      %v700 = vmin.f32 %v676, %v694
      %v701 = vmin.f32 %v677, %v695
      %v702 = vmax.f32 %v676, %v694
      %v703 = vmax.f32 %v677, %v695
      %v704 = vsel %vm698, 1, 0
      %v705 = vsel %vm699, 1, 0
      %vm706 = vcmp.eq.s32.totalorder %v704, 1
      %vm707 = vcmp.eq.s32.totalorder %v705, 1
      %v708 = vsel %vm706, %v700, %v702
      %v709 = vsel %vm707, %v701, %v703
      %v710 = vand.u32 %v491, 16
      %v711 = vand.u32 %v492, 16
      %vm712 = vcmp.eq.s32.totalorder %v710, 0
      %vm713 = vcmp.eq.s32.totalorder %v711, 0
      %vm714 = vmxor %vm712, %vm630
      %vm715 = vmxor %vm713, %vm631
      %vm716 = vmxor %vm714, 1
      %vm717 = vmxor %vm715, 1
      %v718 = vmin.f32 %v708, %v709
      %v719 = vmax.f32 %v708, %v709
      %v720 = vsel %vm716, 1, 0
      %v721 = vsel %vm717, 1, 0
      %vm722 = vcmp.eq.s32.totalorder %v720, 1
      %vm723 = vcmp.eq.s32.totalorder %v721, 1
      %v724 = vsel %vm722, %v718, %v719
      %v725 = vsel %vm723, %v718, %v719
      %v728 = vrot.slane %v724, 4
      %v729 = vrot.slane %v725, 4
      %v730 = vsel %vm231, %v728, %v729
      %v734 = vsel %vm231, %v729, %v728
      %v735 = vsel %vm624, %v730, %v734
      %v736 = vsel %vm625, %v734, %v730
      %vm737 = vmxor %vm712, %vm565
      %vm738 = vmxor %vm713, %vm566
      %vm739 = vmxor %vm737, 1
      %vm740 = vmxor %vm738, 1
      %v741 = vmin.f32 %v724, %v735
      %v742 = vmin.f32 %v725, %v736
      %v743 = vmax.f32 %v724, %v735
      %v744 = vmax.f32 %v725, %v736
      %v745 = vsel %vm739, 1, 0
      %v746 = vsel %vm740, 1, 0
      %vm747 = vcmp.eq.s32.totalorder %v745, 1
      %vm748 = vcmp.eq.s32.totalorder %v746, 1
      %v749 = vsel %vm747, %v741, %v743
      %v750 = vsel %vm748, %v742, %v744
      %v753 = vrot.slane %v749, 2
      %v754 = vrot.slane %v750, 2
      %v755 = vsel %vm541, %v753, %v754
      %v759 = vsel %vm541, %v754, %v753
      %v760 = vrot.slane %v750, 6
      %v762 = vrot.slane %v749, 6
      %v763 = vsel %vm551, %v762, %v760
      %v766 = vsel %vm551, %v760, %v762
      %v767 = vsel %vm559, %v755, %v766
      %v768 = vsel %vm560, %v759, %v763
      %vm769 = vmxor %vm712, %vm523
      %vm770 = vmxor %vm713, %vm524
      %vm771 = vmxor %vm769, 1
      %vm772 = vmxor %vm770, 1
      %v773 = vmin.f32 %v749, %v767
      %v774 = vmin.f32 %v750, %v768
      %v775 = vmax.f32 %v749, %v767
      %v776 = vmax.f32 %v750, %v768
      %v777 = vsel %vm771, 1, 0
      %v778 = vsel %vm772, 1, 0
      %vm779 = vcmp.eq.s32.totalorder %v777, 1
      %vm780 = vcmp.eq.s32.totalorder %v778, 1
      %v781 = vsel %vm779, %v773, %v775
      %v782 = vsel %vm780, %v774, %v776
      %v785 = vrot.slane %v781, 1
      %v786 = vrot.slane %v782, 1
      %v787 = vsel %vm495, %v785, %v786
      %v791 = vsel %vm495, %v786, %v785
      %v792 = vrot.slane %v782, 7
      %v794 = vrot.slane %v781, 7
      %v795 = vsel %vm505, %v794, %v792
      %v798 = vsel %vm505, %v792, %v794
      %v799 = vsel %vm517, %v787, %v798
      %v800 = vsel %vm518, %v791, %v795
      %vm801 = vmxor %vm712, %vm513
      %vm802 = vmxor %vm713, %vm514
      %vm803 = vmxor %vm801, 1
      %vm804 = vmxor %vm802, 1
      %v805 = vmin.f32 %v781, %v799
      %v806 = vmin.f32 %v782, %v800
      %v807 = vmax.f32 %v781, %v799
      %v808 = vmax.f32 %v782, %v800
      %v809 = vsel %vm803, 1, 0
      %v810 = vsel %vm804, 1, 0
      %vm811 = vcmp.eq.s32.totalorder %v809, 1
      %vm812 = vcmp.eq.s32.totalorder %v810, 1
      %v813 = vsel %vm811, %v805, %v807
      %v814 = vsel %vm812, %v806, %v808
      %v815 = vld [vmem:[%s3 + $0x120] sm:$0xff]
      %vm816 = vcmask 130048
      %v818 = vsel %vm816, %v815, 0
      %820 = vmatpush.msra.mxu0 0.0
      %821 = vmatpush.msra.mxu0 0.0
      %822 = vmatpush.msra.mxu0 0.0
      %823 = vmatpush.msra.mxu0 0.0
      %824 = vmatpush.msra.mxu0 0.0
      %825 = vmatpush.msra.mxu0 0.0
      %826 = vmatpush.msra.mxu0 0.0
      %827 = vmatpush.msra.mxu0 0.0
      %828 = vmatpush.msra.mxu0 0.0
      %829 = vmatpush.msra.mxu0 0.0
      %830 = vmatpush.msra.mxu0 0.0
      %831 = vmatpush.msra.mxu0 0.0
      %832 = vmatpush.msra.mxu0 0.0
      %833 = vmatpush.msra.mxu0 0.0
      %v834 = vand.u32 %v814, 4294901760
      %835 = vmatpush.msra.mxu0 %v834
      %v836 = vand.u32 %v813, 4294901760
      %837 = vmatpush.msra.mxu0 %v836
      %v838 = vand.u32 %v818, 4294901760
      %v839 = vsub.f32 %v818, %v838
      %v840 = vand.u32 %v839, 4294901760
      %v841 = vsub.f32 %v839, %v840
      %v842 = vand.u32 %v841, 4294901760
      %843 = vmatmul.f32.gmra.mxu0 %v842
      %v844 = vpop.f32.mrf.mxu0
      %v845 = vadd.f32 0.0, %v844
      %846 = vdwg.mxu0
      %847 = vmatpush.msra.mxu0 0.0
      %848 = vmatpush.msra.mxu0 0.0
      %849 = vmatpush.msra.mxu0 0.0
      %850 = vmatpush.msra.mxu0 0.0
      %851 = vmatpush.msra.mxu0 0.0
      %852 = vmatpush.msra.mxu0 0.0
      %853 = vmatpush.msra.mxu0 0.0
      %854 = vmatpush.msra.mxu0 0.0
      %855 = vmatpush.msra.mxu0 0.0
      %856 = vmatpush.msra.mxu0 0.0
      %857 = vmatpush.msra.mxu0 0.0
      %858 = vmatpush.msra.mxu0 0.0
      %859 = vmatpush.msra.mxu0 0.0
      %860 = vmatpush.msra.mxu0 0.0
      %v861 = vand.u32 %v814, 4294901760
      %v862 = vsub.f32 %v814, %v861
      %v863 = vand.u32 %v862, 4294901760
      %v864 = vsub.f32 %v862, %v863
      %v865 = vand.u32 %v864, 4294901760
      %866 = vmatpush.msra.mxu0 %v865
      %v867 = vand.u32 %v813, 4294901760
      %v868 = vsub.f32 %v813, %v867
      %v869 = vand.u32 %v868, 4294901760
      %v870 = vsub.f32 %v868, %v869
      %v871 = vand.u32 %v870, 4294901760
      %872 = vmatpush.msra.mxu0 %v871
      %v873 = vand.u32 %v818, 4294901760
      %874 = vmatmul.f32.gmra.mxu0 %v873
      %v875 = vpop.f32.mrf.mxu0
      %v876 = vadd.f32 %v845, %v875
      %877 = vdwg.mxu0
      %878 = vmatpush.msra.mxu0 0.0
      %879 = vmatpush.msra.mxu0 0.0
      %880 = vmatpush.msra.mxu0 0.0
      %881 = vmatpush.msra.mxu0 0.0
      %882 = vmatpush.msra.mxu0 0.0
      %883 = vmatpush.msra.mxu0 0.0
      %884 = vmatpush.msra.mxu0 0.0
      %885 = vmatpush.msra.mxu0 0.0
      %886 = vmatpush.msra.mxu0 0.0
      %887 = vmatpush.msra.mxu0 0.0
      %888 = vmatpush.msra.mxu0 0.0
      %889 = vmatpush.msra.mxu0 0.0
      %890 = vmatpush.msra.mxu0 0.0
      %891 = vmatpush.msra.mxu0 0.0
      %v892 = vand.u32 %v814, 4294901760
      %v893 = vsub.f32 %v814, %v892
      %894 = vmatpush.msra.mxu0 %v893
      %v895 = vand.u32 %v813, 4294901760
      %v896 = vsub.f32 %v813, %v895
      %897 = vmatpush.msra.mxu0 %v896
      %v898 = vand.u32 %v818, 4294901760
      %v899 = vsub.f32 %v818, %v898
      %900 = vmatmul.f32.gmra.mxu0 %v899
      %v901 = vpop.f32.mrf.mxu0
      %v902 = vadd.f32 %v876, %v901
      %903 = vdwg.mxu0
      %904 = vmatpush.msra.mxu0 0.0
      %905 = vmatpush.msra.mxu0 0.0
      %906 = vmatpush.msra.mxu0 0.0
      %907 = vmatpush.msra.mxu0 0.0
      %908 = vmatpush.msra.mxu0 0.0
      %909 = vmatpush.msra.mxu0 0.0
      %910 = vmatpush.msra.mxu0 0.0
      %911 = vmatpush.msra.mxu0 0.0
      %912 = vmatpush.msra.mxu0 0.0
      %913 = vmatpush.msra.mxu0 0.0
      %914 = vmatpush.msra.mxu0 0.0
      %915 = vmatpush.msra.mxu0 0.0
      %916 = vmatpush.msra.mxu0 0.0
      %917 = vmatpush.msra.mxu0 0.0
      %v918 = vand.u32 %v814, 4294901760
      %919 = vmatpush.msra.mxu0 %v918
      %v920 = vand.u32 %v813, 4294901760
      %921 = vmatpush.msra.mxu0 %v920
      %v922 = vand.u32 %v818, 4294901760
      %v923 = vsub.f32 %v818, %v922
      %v924 = vand.u32 %v923, 4294901760
      %925 = vmatmul.f32.gmra.mxu0 %v924
      %v926 = vpop.f32.mrf.mxu0
      %v927 = vadd.f32 %v902, %v926
      %928 = vdwg.mxu0
      %929 = vmatpush.msra.mxu0 0.0
      %930 = vmatpush.msra.mxu0 0.0
      %931 = vmatpush.msra.mxu0 0.0
      %932 = vmatpush.msra.mxu0 0.0
      %933 = vmatpush.msra.mxu0 0.0
      %934 = vmatpush.msra.mxu0 0.0
      %935 = vmatpush.msra.mxu0 0.0
      %936 = vmatpush.msra.mxu0 0.0
      %937 = vmatpush.msra.mxu0 0.0
      %938 = vmatpush.msra.mxu0 0.0
      %939 = vmatpush.msra.mxu0 0.0
      %940 = vmatpush.msra.mxu0 0.0
      %941 = vmatpush.msra.mxu0 0.0
      %942 = vmatpush.msra.mxu0 0.0
      %v943 = vand.u32 %v814, 4294901760
      %v944 = vsub.f32 %v814, %v943
      %v945 = vand.u32 %v944, 4294901760
      %946 = vmatpush.msra.mxu0 %v945
      %v947 = vand.u32 %v813, 4294901760
      %v948 = vsub.f32 %v813, %v947
      %v949 = vand.u32 %v948, 4294901760
      %950 = vmatpush.msra.mxu0 %v949
      %v951 = vand.u32 %v818, 4294901760
      %952 = vmatmul.f32.gmra.mxu0 %v951
      %v953 = vpop.f32.mrf.mxu0
      %v954 = vadd.f32 %v927, %v953
      %955 = vdwg.mxu0
      %956 = vmatpush.msra.mxu0 0.0
      %957 = vmatpush.msra.mxu0 0.0
      %958 = vmatpush.msra.mxu0 0.0
      %959 = vmatpush.msra.mxu0 0.0
      %960 = vmatpush.msra.mxu0 0.0
      %961 = vmatpush.msra.mxu0 0.0
      %962 = vmatpush.msra.mxu0 0.0
      %963 = vmatpush.msra.mxu0 0.0
      %964 = vmatpush.msra.mxu0 0.0
      %965 = vmatpush.msra.mxu0 0.0
      %966 = vmatpush.msra.mxu0 0.0
      %967 = vmatpush.msra.mxu0 0.0
      %968 = vmatpush.msra.mxu0 0.0
      %969 = vmatpush.msra.mxu0 0.0
      %v970 = vand.u32 %v814, 4294901760
      %971 = vmatpush.msra.mxu0 %v970
      %v972 = vand.u32 %v813, 4294901760
      %973 = vmatpush.msra.mxu0 %v972
      %v974 = vand.u32 %v818, 4294901760
      %975 = vmatmul.f32.gmra.mxu0 %v974
      %v976 = vpop.f32.mrf.mxu0
      %v977 = vadd.f32 %v954, %v976
      %978 = vdwg.mxu0
      %v979 = vld [vmem:[%s3 + $0x10] sm:$0xff]
      %v980 = vld [vmem:[%s3 + $0x18] sm:$0xff]
      %v981 = vld [vmem:[%s3 + $0x20] sm:$0xff]
      %v982 = vld [vmem:[%s3 + $0x28] sm:$0xff]
      %v983 = vld [vmem:[%s3 + $0x30] sm:$0xff]
      %v984 = vld [vmem:[%s3 + $0x38] sm:$0xff]
      %v985 = vld [vmem:[%s3 + $0x40] sm:$0xff]
      %v986 = vld [vmem:[%s3 + $0x48] sm:$0xff]
      %v987 = vld [vmem:[%s3 + $0x50] sm:$0xff]
      %v988 = vld [vmem:[%s3 + $0x58] sm:$0xff]
      %v989 = vld [vmem:[%s3 + $0x60] sm:$0xff]
      %v990 = vld [vmem:[%s3 + $0x68] sm:$0xff]
      %v991 = vld [vmem:[%s3 + $0x70] sm:$0xff]
      %v992 = vld [vmem:[%s3 + $0x78] sm:$0xff]
      %v993 = vld [vmem:[%s3 + $0x80] sm:$0xff]
      %v994 = vld [vmem:[%s3 + $0x88] sm:$0xff]
      %v995 = vld [vmem:[%s3 + $0x90] sm:$0xf]
      %v996 = vld [vmem:[%s3 + $0x98] sm:$0xf]
      %vm997 = vcmask 556032
      %v999 = vsel %vm997, %v977, 0
      %v1002 = vsel %vm231, %v995, 0
      %v1005 = vsel %vm231, %v996, 0
      %1007 = vmatpush.msra.mxu0 0.0
      %1008 = vmatpush.msra.mxu0 0.0
      %1009 = vmatpush.msra.mxu0 0.0
      %1010 = vmatpush.msra.mxu0 0.0
      %1011 = vmatpush.msra.mxu0 0.0
      %1012 = vmatpush.msra.mxu0 0.0
      %1013 = vmatpush.msra.mxu0 0.0
      %v1014 = vand.u32 %v1002, 4294901760
      %1015 = vmatpush.msra.mxu0 %v1014
      %v1016 = vand.u32 %v993, 4294901760
      %1017 = vmatpush.msra.mxu0 %v1016
      %v1018 = vand.u32 %v991, 4294901760
      %1019 = vmatpush.msra.mxu0 %v1018
      %v1020 = vand.u32 %v989, 4294901760
      %1021 = vmatpush.msra.mxu0 %v1020
      %v1022 = vand.u32 %v987, 4294901760
      %1023 = vmatpush.msra.mxu0 %v1022
      %v1024 = vand.u32 %v985, 4294901760
      %1025 = vmatpush.msra.mxu0 %v1024
      %v1026 = vand.u32 %v983, 4294901760
      %1027 = vmatpush.msra.mxu0 %v1026
      %v1028 = vand.u32 %v981, 4294901760
      %1029 = vmatpush.msra.mxu0 %v1028
      %v1030 = vand.u32 %v979, 4294901760
      %1031 = vmatpush.msra.mxu0 %v1030
      %v1032 = vand.u32 %v999, 4294901760
      %v1033 = vsub.f32 %v999, %v1032
      %v1034 = vand.u32 %v1033, 4294901760
      %v1035 = vsub.f32 %v1033, %v1034
      %v1036 = vand.u32 %v1035, 4294901760
      %1037 = vmatmul.f32.gmra.mxu0 %v1036
      %v1038 = vpop.f32.mrf.mxu0
      %v1039 = vadd.f32 0.0, %v1038
      %1040 = vdwg.mxu0
      %1041 = vmatpush.msra.mxu0 0.0
      %1042 = vmatpush.msra.mxu0 0.0
      %1043 = vmatpush.msra.mxu0 0.0
      %1044 = vmatpush.msra.mxu0 0.0
      %1045 = vmatpush.msra.mxu0 0.0
      %1046 = vmatpush.msra.mxu0 0.0
      %1047 = vmatpush.msra.mxu0 0.0
      %v1048 = vand.u32 %v1002, 4294901760
      %v1049 = vsub.f32 %v1002, %v1048
      %v1050 = vand.u32 %v1049, 4294901760
      %v1051 = vsub.f32 %v1049, %v1050
      %v1052 = vand.u32 %v1051, 4294901760
      %1053 = vmatpush.msra.mxu0 %v1052
      %v1054 = vand.u32 %v993, 4294901760
      %v1055 = vsub.f32 %v993, %v1054
      %v1056 = vand.u32 %v1055, 4294901760
      %v1057 = vsub.f32 %v1055, %v1056
      %v1058 = vand.u32 %v1057, 4294901760
      %1059 = vmatpush.msra.mxu0 %v1058
      %v1060 = vand.u32 %v991, 4294901760
      %v1061 = vsub.f32 %v991, %v1060
      %v1062 = vand.u32 %v1061, 4294901760
      %v1063 = vsub.f32 %v1061, %v1062
      %v1064 = vand.u32 %v1063, 4294901760
      %1065 = vmatpush.msra.mxu0 %v1064
      %v1066 = vand.u32 %v989, 4294901760
      %v1067 = vsub.f32 %v989, %v1066
      %v1068 = vand.u32 %v1067, 4294901760
      %v1069 = vsub.f32 %v1067, %v1068
      %v1070 = vand.u32 %v1069, 4294901760
      %1071 = vmatpush.msra.mxu0 %v1070
      %v1072 = vand.u32 %v987, 4294901760
      %v1073 = vsub.f32 %v987, %v1072
      %v1074 = vand.u32 %v1073, 4294901760
      %v1075 = vsub.f32 %v1073, %v1074
      %v1076 = vand.u32 %v1075, 4294901760
      %1077 = vmatpush.msra.mxu0 %v1076
      %v1078 = vand.u32 %v985, 4294901760
      %v1079 = vsub.f32 %v985, %v1078
      %v1080 = vand.u32 %v1079, 4294901760
      %v1081 = vsub.f32 %v1079, %v1080
      %v1082 = vand.u32 %v1081, 4294901760
      %1083 = vmatpush.msra.mxu0 %v1082
      %v1084 = vand.u32 %v983, 4294901760
      %v1085 = vsub.f32 %v983, %v1084
      %v1086 = vand.u32 %v1085, 4294901760
      %v1087 = vsub.f32 %v1085, %v1086
      %v1088 = vand.u32 %v1087, 4294901760
      %1089 = vmatpush.msra.mxu0 %v1088
      %v1090 = vand.u32 %v981, 4294901760
      %v1091 = vsub.f32 %v981, %v1090
      %v1092 = vand.u32 %v1091, 4294901760
      %v1093 = vsub.f32 %v1091, %v1092
      %v1094 = vand.u32 %v1093, 4294901760
      %1095 = vmatpush.msra.mxu0 %v1094
      %v1096 = vand.u32 %v979, 4294901760
      %v1097 = vsub.f32 %v979, %v1096
      %v1098 = vand.u32 %v1097, 4294901760
      %v1099 = vsub.f32 %v1097, %v1098
      %v1100 = vand.u32 %v1099, 4294901760
      %1101 = vmatpush.msra.mxu0 %v1100
      %v1102 = vand.u32 %v999, 4294901760
      %1103 = vmatmul.f32.gmra.mxu0 %v1102
      %v1104 = vpop.f32.mrf.mxu0
      %v1105 = vadd.f32 %v1039, %v1104
      %1106 = vdwg.mxu0
      %1107 = vmatpush.msra.mxu0 0.0
      %1108 = vmatpush.msra.mxu0 0.0
      %1109 = vmatpush.msra.mxu0 0.0
      %1110 = vmatpush.msra.mxu0 0.0
      %1111 = vmatpush.msra.mxu0 0.0
      %1112 = vmatpush.msra.mxu0 0.0
      %1113 = vmatpush.msra.mxu0 0.0
      %v1114 = vand.u32 %v1002, 4294901760
      %v1115 = vsub.f32 %v1002, %v1114
      %1116 = vmatpush.msra.mxu0 %v1115
      %v1117 = vand.u32 %v993, 4294901760
      %v1118 = vsub.f32 %v993, %v1117
      %1119 = vmatpush.msra.mxu0 %v1118
      %v1120 = vand.u32 %v991, 4294901760
      %v1121 = vsub.f32 %v991, %v1120
      %1122 = vmatpush.msra.mxu0 %v1121
      %v1123 = vand.u32 %v989, 4294901760
      %v1124 = vsub.f32 %v989, %v1123
      %1125 = vmatpush.msra.mxu0 %v1124
      %v1126 = vand.u32 %v987, 4294901760
      %v1127 = vsub.f32 %v987, %v1126
      %1128 = vmatpush.msra.mxu0 %v1127
      %v1129 = vand.u32 %v985, 4294901760
      %v1130 = vsub.f32 %v985, %v1129
      %1131 = vmatpush.msra.mxu0 %v1130
      %v1132 = vand.u32 %v983, 4294901760
      %v1133 = vsub.f32 %v983, %v1132
      %1134 = vmatpush.msra.mxu0 %v1133
      %v1135 = vand.u32 %v981, 4294901760
      %v1136 = vsub.f32 %v981, %v1135
      %1137 = vmatpush.msra.mxu0 %v1136
      %v1138 = vand.u32 %v979, 4294901760
      %v1139 = vsub.f32 %v979, %v1138
      %1140 = vmatpush.msra.mxu0 %v1139
      %v1141 = vand.u32 %v999, 4294901760
      %v1142 = vsub.f32 %v999, %v1141
      %1143 = vmatmul.f32.gmra.mxu0 %v1142
      %v1144 = vpop.f32.mrf.mxu0
      %v1145 = vadd.f32 %v1105, %v1144
      %1146 = vdwg.mxu0
      %1147 = vmatpush.msra.mxu0 0.0
      %1148 = vmatpush.msra.mxu0 0.0
      %1149 = vmatpush.msra.mxu0 0.0
      %1150 = vmatpush.msra.mxu0 0.0
      %1151 = vmatpush.msra.mxu0 0.0
      %1152 = vmatpush.msra.mxu0 0.0
      %1153 = vmatpush.msra.mxu0 0.0
      %v1154 = vand.u32 %v1002, 4294901760
      %1155 = vmatpush.msra.mxu0 %v1154
      %v1156 = vand.u32 %v993, 4294901760
      %1157 = vmatpush.msra.mxu0 %v1156
      %v1158 = vand.u32 %v991, 4294901760
      %1159 = vmatpush.msra.mxu0 %v1158
      %v1160 = vand.u32 %v989, 4294901760
      %1161 = vmatpush.msra.mxu0 %v1160
      %v1162 = vand.u32 %v987, 4294901760
      %1163 = vmatpush.msra.mxu0 %v1162
      %v1164 = vand.u32 %v985, 4294901760
      %1165 = vmatpush.msra.mxu0 %v1164
      %v1166 = vand.u32 %v983, 4294901760
      %1167 = vmatpush.msra.mxu0 %v1166
      %v1168 = vand.u32 %v981, 4294901760
      %1169 = vmatpush.msra.mxu0 %v1168
      %v1170 = vand.u32 %v979, 4294901760
      %1171 = vmatpush.msra.mxu0 %v1170
      %v1172 = vand.u32 %v999, 4294901760
      %v1173 = vsub.f32 %v999, %v1172
      %v1174 = vand.u32 %v1173, 4294901760
      %1175 = vmatmul.f32.gmra.mxu0 %v1174
      %v1176 = vpop.f32.mrf.mxu0
      %v1177 = vadd.f32 %v1145, %v1176
      %1178 = vdwg.mxu0
      %1179 = vmatpush.msra.mxu0 0.0
      %1180 = vmatpush.msra.mxu0 0.0
      %1181 = vmatpush.msra.mxu0 0.0
      %1182 = vmatpush.msra.mxu0 0.0
      %1183 = vmatpush.msra.mxu0 0.0
      %1184 = vmatpush.msra.mxu0 0.0
      %1185 = vmatpush.msra.mxu0 0.0
      %v1186 = vand.u32 %v1002, 4294901760
      %v1187 = vsub.f32 %v1002, %v1186
      %v1188 = vand.u32 %v1187, 4294901760
      %1189 = vmatpush.msra.mxu0 %v1188
      %v1190 = vand.u32 %v993, 4294901760
      %v1191 = vsub.f32 %v993, %v1190
      %v1192 = vand.u32 %v1191, 4294901760
      %1193 = vmatpush.msra.mxu0 %v1192
      %v1194 = vand.u32 %v991, 4294901760
      %v1195 = vsub.f32 %v991, %v1194
      %v1196 = vand.u32 %v1195, 4294901760
      %1197 = vmatpush.msra.mxu0 %v1196
      %v1198 = vand.u32 %v989, 4294901760
      %v1199 = vsub.f32 %v989, %v1198
      %v1200 = vand.u32 %v1199, 4294901760
      %1201 = vmatpush.msra.mxu0 %v1200
      %v1202 = vand.u32 %v987, 4294901760
      %v1203 = vsub.f32 %v987, %v1202
      %v1204 = vand.u32 %v1203, 4294901760
      %1205 = vmatpush.msra.mxu0 %v1204
      %v1206 = vand.u32 %v985, 4294901760
      %v1207 = vsub.f32 %v985, %v1206
      %v1208 = vand.u32 %v1207, 4294901760
      %1209 = vmatpush.msra.mxu0 %v1208
      %v1210 = vand.u32 %v983, 4294901760
      %v1211 = vsub.f32 %v983, %v1210
      %v1212 = vand.u32 %v1211, 4294901760
      %1213 = vmatpush.msra.mxu0 %v1212
      %v1214 = vand.u32 %v981, 4294901760
      %v1215 = vsub.f32 %v981, %v1214
      %v1216 = vand.u32 %v1215, 4294901760
      %1217 = vmatpush.msra.mxu0 %v1216
      %v1218 = vand.u32 %v979, 4294901760
      %v1219 = vsub.f32 %v979, %v1218
      %v1220 = vand.u32 %v1219, 4294901760
      %1221 = vmatpush.msra.mxu0 %v1220
      %v1222 = vand.u32 %v999, 4294901760
      %1223 = vmatmul.f32.gmra.mxu0 %v1222
      %v1224 = vpop.f32.mrf.mxu0
      %v1225 = vadd.f32 %v1177, %v1224
      %1226 = vdwg.mxu0
      %1227 = vmatpush.msra.mxu0 0.0
      %1228 = vmatpush.msra.mxu0 0.0
      %1229 = vmatpush.msra.mxu0 0.0
      %1230 = vmatpush.msra.mxu0 0.0
      %1231 = vmatpush.msra.mxu0 0.0
      %1232 = vmatpush.msra.mxu0 0.0
      %1233 = vmatpush.msra.mxu0 0.0
      %v1234 = vand.u32 %v1002, 4294901760
      %1235 = vmatpush.msra.mxu0 %v1234
      %v1236 = vand.u32 %v993, 4294901760
      %1237 = vmatpush.msra.mxu0 %v1236
      %v1238 = vand.u32 %v991, 4294901760
      %1239 = vmatpush.msra.mxu0 %v1238
      %v1240 = vand.u32 %v989, 4294901760
      %1241 = vmatpush.msra.mxu0 %v1240
      %v1242 = vand.u32 %v987, 4294901760
      %1243 = vmatpush.msra.mxu0 %v1242
      %v1244 = vand.u32 %v985, 4294901760
      %1245 = vmatpush.msra.mxu0 %v1244
      %v1246 = vand.u32 %v983, 4294901760
      %1247 = vmatpush.msra.mxu0 %v1246
      %v1248 = vand.u32 %v981, 4294901760
      %1249 = vmatpush.msra.mxu0 %v1248
      %v1250 = vand.u32 %v979, 4294901760
      %1251 = vmatpush.msra.mxu0 %v1250
      %v1252 = vand.u32 %v999, 4294901760
      %1253 = vmatmul.f32.gmra.mxu0 %v1252
      %v1254 = vpop.f32.mrf.mxu0
      %v1255 = vadd.f32 %v1225, %v1254
      %1256 = vdwg.mxu0
      %1257 = vmatpush.msra.mxu0 0.0
      %1258 = vmatpush.msra.mxu0 0.0
      %1259 = vmatpush.msra.mxu0 0.0
      %1260 = vmatpush.msra.mxu0 0.0
      %1261 = vmatpush.msra.mxu0 0.0
      %1262 = vmatpush.msra.mxu0 0.0
      %1263 = vmatpush.msra.mxu0 0.0
      %v1264 = vand.u32 %v1005, 4294901760
      %1265 = vmatpush.msra.mxu0 %v1264
      %v1266 = vand.u32 %v994, 4294901760
      %1267 = vmatpush.msra.mxu0 %v1266
      %v1268 = vand.u32 %v992, 4294901760
      %1269 = vmatpush.msra.mxu0 %v1268
      %v1270 = vand.u32 %v990, 4294901760
      %1271 = vmatpush.msra.mxu0 %v1270
      %v1272 = vand.u32 %v988, 4294901760
      %1273 = vmatpush.msra.mxu0 %v1272
      %v1274 = vand.u32 %v986, 4294901760
      %1275 = vmatpush.msra.mxu0 %v1274
      %v1276 = vand.u32 %v984, 4294901760
      %1277 = vmatpush.msra.mxu0 %v1276
      %v1278 = vand.u32 %v982, 4294901760
      %1279 = vmatpush.msra.mxu0 %v1278
      %v1280 = vand.u32 %v980, 4294901760
      %1281 = vmatpush.msra.mxu0 %v1280
      %v1282 = vand.u32 %v999, 4294901760
      %v1283 = vsub.f32 %v999, %v1282
      %v1284 = vand.u32 %v1283, 4294901760
      %v1285 = vsub.f32 %v1283, %v1284
      %v1286 = vand.u32 %v1285, 4294901760
      %1287 = vmatmul.f32.gmra.mxu0 %v1286
      %v1288 = vpop.f32.mrf.mxu0
      %v1289 = vadd.f32 0.0, %v1288
      %1290 = vdwg.mxu0
      %1291 = vmatpush.msra.mxu0 0.0
      %1292 = vmatpush.msra.mxu0 0.0
      %1293 = vmatpush.msra.mxu0 0.0
      %1294 = vmatpush.msra.mxu0 0.0
      %1295 = vmatpush.msra.mxu0 0.0
      %1296 = vmatpush.msra.mxu0 0.0
      %1297 = vmatpush.msra.mxu0 0.0
      %v1298 = vand.u32 %v1005, 4294901760
      %v1299 = vsub.f32 %v1005, %v1298
      %v1300 = vand.u32 %v1299, 4294901760
      %v1301 = vsub.f32 %v1299, %v1300
      %v1302 = vand.u32 %v1301, 4294901760
      %1303 = vmatpush.msra.mxu0 %v1302
      %v1304 = vand.u32 %v994, 4294901760
      %v1305 = vsub.f32 %v994, %v1304
      %v1306 = vand.u32 %v1305, 4294901760
      %v1307 = vsub.f32 %v1305, %v1306
      %v1308 = vand.u32 %v1307, 4294901760
      %1309 = vmatpush.msra.mxu0 %v1308
      %v1310 = vand.u32 %v992, 4294901760
      %v1311 = vsub.f32 %v992, %v1310
      %v1312 = vand.u32 %v1311, 4294901760
      %v1313 = vsub.f32 %v1311, %v1312
      %v1314 = vand.u32 %v1313, 4294901760
      %1315 = vmatpush.msra.mxu0 %v1314
      %v1316 = vand.u32 %v990, 4294901760
      %v1317 = vsub.f32 %v990, %v1316
      %v1318 = vand.u32 %v1317, 4294901760
      %v1319 = vsub.f32 %v1317, %v1318
      %v1320 = vand.u32 %v1319, 4294901760
      %1321 = vmatpush.msra.mxu0 %v1320
      %v1322 = vand.u32 %v988, 4294901760
      %v1323 = vsub.f32 %v988, %v1322
      %v1324 = vand.u32 %v1323, 4294901760
      %v1325 = vsub.f32 %v1323, %v1324
      %v1326 = vand.u32 %v1325, 4294901760
      %1327 = vmatpush.msra.mxu0 %v1326
      %v1328 = vand.u32 %v986, 4294901760
      %v1329 = vsub.f32 %v986, %v1328
      %v1330 = vand.u32 %v1329, 4294901760
      %v1331 = vsub.f32 %v1329, %v1330
      %v1332 = vand.u32 %v1331, 4294901760
      %1333 = vmatpush.msra.mxu0 %v1332
      %v1334 = vand.u32 %v984, 4294901760
      %v1335 = vsub.f32 %v984, %v1334
      %v1336 = vand.u32 %v1335, 4294901760
      %v1337 = vsub.f32 %v1335, %v1336
      %v1338 = vand.u32 %v1337, 4294901760
      %1339 = vmatpush.msra.mxu0 %v1338
      %v1340 = vand.u32 %v982, 4294901760
      %v1341 = vsub.f32 %v982, %v1340
      %v1342 = vand.u32 %v1341, 4294901760
      %v1343 = vsub.f32 %v1341, %v1342
      %v1344 = vand.u32 %v1343, 4294901760
      %1345 = vmatpush.msra.mxu0 %v1344
      %v1346 = vand.u32 %v980, 4294901760
      %v1347 = vsub.f32 %v980, %v1346
      %v1348 = vand.u32 %v1347, 4294901760
      %v1349 = vsub.f32 %v1347, %v1348
      %v1350 = vand.u32 %v1349, 4294901760
      %1351 = vmatpush.msra.mxu0 %v1350
      %v1352 = vand.u32 %v999, 4294901760
      %1353 = vmatmul.f32.gmra.mxu0 %v1352
      %v1354 = vpop.f32.mrf.mxu0
      %v1355 = vadd.f32 %v1289, %v1354
      %1356 = vdwg.mxu0
      %1357 = vmatpush.msra.mxu0 0.0
      %1358 = vmatpush.msra.mxu0 0.0
      %1359 = vmatpush.msra.mxu0 0.0
      %1360 = vmatpush.msra.mxu0 0.0
      %1361 = vmatpush.msra.mxu0 0.0
      %1362 = vmatpush.msra.mxu0 0.0
      %1363 = vmatpush.msra.mxu0 0.0
      %v1364 = vand.u32 %v1005, 4294901760
      %v1365 = vsub.f32 %v1005, %v1364
      %1366 = vmatpush.msra.mxu0 %v1365
      %v1367 = vand.u32 %v994, 4294901760
      %v1368 = vsub.f32 %v994, %v1367
      %1369 = vmatpush.msra.mxu0 %v1368
      %v1370 = vand.u32 %v992, 4294901760
      %v1371 = vsub.f32 %v992, %v1370
      %1372 = vmatpush.msra.mxu0 %v1371
      %v1373 = vand.u32 %v990, 4294901760
      %v1374 = vsub.f32 %v990, %v1373
      %1375 = vmatpush.msra.mxu0 %v1374
      %v1376 = vand.u32 %v988, 4294901760
      %v1377 = vsub.f32 %v988, %v1376
      %1378 = vmatpush.msra.mxu0 %v1377
      %v1379 = vand.u32 %v986, 4294901760
      %v1380 = vsub.f32 %v986, %v1379
      %1381 = vmatpush.msra.mxu0 %v1380
      %v1382 = vand.u32 %v984, 4294901760
      %v1383 = vsub.f32 %v984, %v1382
      %1384 = vmatpush.msra.mxu0 %v1383
      %v1385 = vand.u32 %v982, 4294901760
      %v1386 = vsub.f32 %v982, %v1385
      %1387 = vmatpush.msra.mxu0 %v1386
      %v1388 = vand.u32 %v980, 4294901760
      %v1389 = vsub.f32 %v980, %v1388
      %1390 = vmatpush.msra.mxu0 %v1389
      %v1391 = vand.u32 %v999, 4294901760
      %v1392 = vsub.f32 %v999, %v1391
      %1393 = vmatmul.f32.gmra.mxu0 %v1392
      %v1394 = vpop.f32.mrf.mxu0
      %v1395 = vadd.f32 %v1355, %v1394
      %1396 = vdwg.mxu0
      %1397 = vmatpush.msra.mxu0 0.0
      %1398 = vmatpush.msra.mxu0 0.0
      %1399 = vmatpush.msra.mxu0 0.0
      %1400 = vmatpush.msra.mxu0 0.0
      %1401 = vmatpush.msra.mxu0 0.0
      %1402 = vmatpush.msra.mxu0 0.0
      %1403 = vmatpush.msra.mxu0 0.0
      %v1404 = vand.u32 %v1005, 4294901760
      %1405 = vmatpush.msra.mxu0 %v1404
      %v1406 = vand.u32 %v994, 4294901760
      %1407 = vmatpush.msra.mxu0 %v1406
      %v1408 = vand.u32 %v992, 4294901760
      %1409 = vmatpush.msra.mxu0 %v1408
      %v1410 = vand.u32 %v990, 4294901760
      %1411 = vmatpush.msra.mxu0 %v1410
      %v1412 = vand.u32 %v988, 4294901760
      %1413 = vmatpush.msra.mxu0 %v1412
      %v1414 = vand.u32 %v986, 4294901760
      %1415 = vmatpush.msra.mxu0 %v1414
      %v1416 = vand.u32 %v984, 4294901760
      %1417 = vmatpush.msra.mxu0 %v1416
      %v1418 = vand.u32 %v982, 4294901760
      %1419 = vmatpush.msra.mxu0 %v1418
      %v1420 = vand.u32 %v980, 4294901760
      %1421 = vmatpush.msra.mxu0 %v1420
      %v1422 = vand.u32 %v999, 4294901760
      %v1423 = vsub.f32 %v999, %v1422
      %v1424 = vand.u32 %v1423, 4294901760
      %1425 = vmatmul.f32.gmra.mxu0 %v1424
      %v1426 = vpop.f32.mrf.mxu0
      %v1427 = vadd.f32 %v1395, %v1426
      %1428 = vdwg.mxu0
      %1429 = vmatpush.msra.mxu0 0.0
      %1430 = vmatpush.msra.mxu0 0.0
      %1431 = vmatpush.msra.mxu0 0.0
      %1432 = vmatpush.msra.mxu0 0.0
      %1433 = vmatpush.msra.mxu0 0.0
      %1434 = vmatpush.msra.mxu0 0.0
      %1435 = vmatpush.msra.mxu0 0.0
      %v1436 = vand.u32 %v1005, 4294901760
      %v1437 = vsub.f32 %v1005, %v1436
      %v1438 = vand.u32 %v1437, 4294901760
      %1439 = vmatpush.msra.mxu0 %v1438
      %v1440 = vand.u32 %v994, 4294901760
      %v1441 = vsub.f32 %v994, %v1440
      %v1442 = vand.u32 %v1441, 4294901760
      %1443 = vmatpush.msra.mxu0 %v1442
      %v1444 = vand.u32 %v992, 4294901760
      %v1445 = vsub.f32 %v992, %v1444
      %v1446 = vand.u32 %v1445, 4294901760
      %1447 = vmatpush.msra.mxu0 %v1446
      %v1448 = vand.u32 %v990, 4294901760
      %v1449 = vsub.f32 %v990, %v1448
      %v1450 = vand.u32 %v1449, 4294901760
      %1451 = vmatpush.msra.mxu0 %v1450
      %v1452 = vand.u32 %v988, 4294901760
      %v1453 = vsub.f32 %v988, %v1452
      %v1454 = vand.u32 %v1453, 4294901760
      %1455 = vmatpush.msra.mxu0 %v1454
      %v1456 = vand.u32 %v986, 4294901760
      %v1457 = vsub.f32 %v986, %v1456
      %v1458 = vand.u32 %v1457, 4294901760
      %1459 = vmatpush.msra.mxu0 %v1458
      %v1460 = vand.u32 %v984, 4294901760
      %v1461 = vsub.f32 %v984, %v1460
      %v1462 = vand.u32 %v1461, 4294901760
      %1463 = vmatpush.msra.mxu0 %v1462
      %v1464 = vand.u32 %v982, 4294901760
      %v1465 = vsub.f32 %v982, %v1464
      %v1466 = vand.u32 %v1465, 4294901760
      %1467 = vmatpush.msra.mxu0 %v1466
      %v1468 = vand.u32 %v980, 4294901760
      %v1469 = vsub.f32 %v980, %v1468
      %v1470 = vand.u32 %v1469, 4294901760
      %1471 = vmatpush.msra.mxu0 %v1470
      %v1472 = vand.u32 %v999, 4294901760
      %1473 = vmatmul.f32.gmra.mxu0 %v1472
      %v1474 = vpop.f32.mrf.mxu0
      %v1475 = vadd.f32 %v1427, %v1474
      %1476 = vdwg.mxu0
      %1477 = vmatpush.msra.mxu0 0.0
      %1478 = vmatpush.msra.mxu0 0.0
      %1479 = vmatpush.msra.mxu0 0.0
      %1480 = vmatpush.msra.mxu0 0.0
      %1481 = vmatpush.msra.mxu0 0.0
      %1482 = vmatpush.msra.mxu0 0.0
      %1483 = vmatpush.msra.mxu0 0.0
      %v1484 = vand.u32 %v1005, 4294901760
      %1485 = vmatpush.msra.mxu0 %v1484
      %v1486 = vand.u32 %v994, 4294901760
      %1487 = vmatpush.msra.mxu0 %v1486
      %v1488 = vand.u32 %v992, 4294901760
      %1489 = vmatpush.msra.mxu0 %v1488
      %v1490 = vand.u32 %v990, 4294901760
      %1491 = vmatpush.msra.mxu0 %v1490
      %v1492 = vand.u32 %v988, 4294901760
      %1493 = vmatpush.msra.mxu0 %v1492
      %v1494 = vand.u32 %v986, 4294901760
      %1495 = vmatpush.msra.mxu0 %v1494
      %v1496 = vand.u32 %v984, 4294901760
      %1497 = vmatpush.msra.mxu0 %v1496
      %v1498 = vand.u32 %v982, 4294901760
      %1499 = vmatpush.msra.mxu0 %v1498
      %v1500 = vand.u32 %v980, 4294901760
      %1501 = vmatpush.msra.mxu0 %v1500
      %v1502 = vand.u32 %v999, 4294901760
      %1503 = vmatmul.f32.gmra.mxu0 %v1502
      %v1504 = vpop.f32.mrf.mxu0
      %v1505 = vadd.f32 %v1475, %v1504
      %1506 = vdwg.mxu0
      %v1507 = vld [vmem:[%s3] sm:$0xff]
      %v1508 = vld [vmem:[%s3 + $0x8] sm:$0xff]
      %v1509 = vmul.f32 %v1255, %v1507
      %v1510 = vmul.f32 %v1505, %v1508
      %v1511 = vrot.slane %v1509, 4
      %v1512 = vadd.f32 %v1509, %v1511
      %v1513 = vrot.slane %v1512, 2
      %v1514 = vadd.f32 %v1512, %v1513
      %v1515 = vrot.slane %v1514, 1
      %v1516 = vadd.f32 %v1514, %v1515
      %v1517 = vsel %vm816, %v1510, 0.0
      %v1518 = vrot.slane %v1517, 4
      %v1519 = vadd.f32 %v1517, %v1518
      %v1520 = vrot.slane %v1519, 2
      %v1521 = vadd.f32 %v1519, %v1520
      %v1522 = vrot.slane %v1521, 1
      %v1523 = vadd.f32 %v1521, %v1522
      %v1524 = vld [vmem:[%s206] sm:$0x1]
      %v1526 = vperm.slane %v1524, 0
      %1527 = vrot.lane.b32.xlu0 %v1526, 16
      %v1528 = vpop.permute.xlu0 %1527
      %v1530 = vsel %vm816, %v1523, %v1528
      %v1531 = vld [vmem:[%s3 + $0x130] sm:$0xff]
      %v1532 = vld [vmem:[%s3 + $0x140] sm:$0xff]
      %v1533 = vld [vmem:[%s3 + $0x150] sm:$0xff]
      %v1534 = vld [vmem:[%s3 + $0x160] sm:$0xff]
      %v1535 = vld [vmem:[%s3 + $0x170] sm:$0xff]
      %v1536 = vld [vmem:[%s3 + $0x180] sm:$0xff]
      %v1537 = vld [vmem:[%s3 + $0x190] sm:$0xff]
      %v1538 = vld [vmem:[%s3 + $0x1a0] sm:$0xff]
      %v1539 = vld [vmem:[%s3 + $0x1b0] sm:$0xff]
      %v1540 = vld [vmem:[%s3 + $0x1c0] sm:$0xff]
      %v1541 = vld [vmem:[%s3 + $0x1d0] sm:$0xff]
      %v1542 = vld [vmem:[%s3 + $0x1e0] sm:$0xff]
      %v1543 = vld [vmem:[%s3 + $0x1f0] sm:$0xff]
      %v1544 = vld [vmem:[%s3 + $0x200] sm:$0xff]
      %v1545 = vld [vmem:[%s3 + $0x210] sm:$0xff]
      %v1546 = vld [vmem:[%s3 + $0x220] sm:$0xff]
      %v1547 = vld [vmem:[%s3 + $0x230] sm:$0xff]
      %v1548 = vld [vmem:[%s3 + $0x240] sm:$0xff]
      %v1549 = vld [vmem:[%s3 + $0x250] sm:$0x7f]
      %v1550 = vld [vmem:[%s3 + $0x260] ss:$0 sm:$0xff]
      %vm1551 = vcmask 187392
      %v1553 = vsel %vm1551, %v1530, 0
      %v1556 = vsel %vm495, %v1549, 0
      %v1558 = vand.u32 %v1546, 4294901760
      %1559 = vmatpush.msra.mxu0 %v1558
      %v1560 = vand.u32 %v1545, 4294901760
      %1561 = vmatpush.msra.mxu0 %v1560
      %v1562 = vand.u32 %v1544, 4294901760
      %1563 = vmatpush.msra.mxu0 %v1562
      %v1564 = vand.u32 %v1543, 4294901760
      %1565 = vmatpush.msra.mxu0 %v1564
      %v1566 = vand.u32 %v1542, 4294901760
      %1567 = vmatpush.msra.mxu0 %v1566
      %v1568 = vand.u32 %v1541, 4294901760
      %1569 = vmatpush.msra.mxu0 %v1568
      %v1570 = vand.u32 %v1540, 4294901760
      %1571 = vmatpush.msra.mxu0 %v1570
      %v1572 = vand.u32 %v1539, 4294901760
      %1573 = vmatpush.msra.mxu0 %v1572
      %v1574 = vand.u32 %v1538, 4294901760
      %1575 = vmatpush.msra.mxu0 %v1574
      %v1576 = vand.u32 %v1537, 4294901760
      %1577 = vmatpush.msra.mxu0 %v1576
      %v1578 = vand.u32 %v1536, 4294901760
      %1579 = vmatpush.msra.mxu0 %v1578
      %v1580 = vand.u32 %v1535, 4294901760
      %1581 = vmatpush.msra.mxu0 %v1580
      %v1582 = vand.u32 %v1534, 4294901760
      %1583 = vmatpush.msra.mxu0 %v1582
      %v1584 = vand.u32 %v1533, 4294901760
      %1585 = vmatpush.msra.mxu0 %v1584
      %v1586 = vand.u32 %v1532, 4294901760
      %1587 = vmatpush.msra.mxu0 %v1586
      %v1588 = vand.u32 %v1531, 4294901760
      %1589 = vmatpush.msra.mxu0 %v1588
      %v1590 = vand.u32 %v1516, 4294901760
      %v1591 = vsub.f32 %v1516, %v1590
      %v1592 = vand.u32 %v1591, 4294901760
      %v1593 = vsub.f32 %v1591, %v1592
      %v1594 = vand.u32 %v1593, 4294901760
      %1595 = vmatmul.f32.gmra.mxu0 %v1594
      %v1596 = vpop.f32.mrf.mxu0
      %v1597 = vadd.f32 %v1550, %v1596
      %1598 = vdwg.mxu0
      %v1599 = vand.u32 %v1546, 4294901760
      %v1600 = vsub.f32 %v1546, %v1599
      %v1601 = vand.u32 %v1600, 4294901760
      %v1602 = vsub.f32 %v1600, %v1601
      %v1603 = vand.u32 %v1602, 4294901760
      %1604 = vmatpush.msra.mxu0 %v1603
      %v1605 = vand.u32 %v1545, 4294901760
      %v1606 = vsub.f32 %v1545, %v1605
      %v1607 = vand.u32 %v1606, 4294901760
      %v1608 = vsub.f32 %v1606, %v1607
      %v1609 = vand.u32 %v1608, 4294901760
      %1610 = vmatpush.msra.mxu0 %v1609
      %v1611 = vand.u32 %v1544, 4294901760
      %v1612 = vsub.f32 %v1544, %v1611
      %v1613 = vand.u32 %v1612, 4294901760
      %v1614 = vsub.f32 %v1612, %v1613
      %v1615 = vand.u32 %v1614, 4294901760
      %1616 = vmatpush.msra.mxu0 %v1615
      %v1617 = vand.u32 %v1543, 4294901760
      %v1618 = vsub.f32 %v1543, %v1617
      %v1619 = vand.u32 %v1618, 4294901760
      %v1620 = vsub.f32 %v1618, %v1619
      %v1621 = vand.u32 %v1620, 4294901760
      %1622 = vmatpush.msra.mxu0 %v1621
      %v1623 = vand.u32 %v1542, 4294901760
      %v1624 = vsub.f32 %v1542, %v1623
      %v1625 = vand.u32 %v1624, 4294901760
      %v1626 = vsub.f32 %v1624, %v1625
      %v1627 = vand.u32 %v1626, 4294901760
      %1628 = vmatpush.msra.mxu0 %v1627
      %v1629 = vand.u32 %v1541, 4294901760
      %v1630 = vsub.f32 %v1541, %v1629
      %v1631 = vand.u32 %v1630, 4294901760
      %v1632 = vsub.f32 %v1630, %v1631
      %v1633 = vand.u32 %v1632, 4294901760
      %1634 = vmatpush.msra.mxu0 %v1633
      %v1635 = vand.u32 %v1540, 4294901760
      %v1636 = vsub.f32 %v1540, %v1635
      %v1637 = vand.u32 %v1636, 4294901760
      %v1638 = vsub.f32 %v1636, %v1637
      %v1639 = vand.u32 %v1638, 4294901760
      %1640 = vmatpush.msra.mxu0 %v1639
      %v1641 = vand.u32 %v1539, 4294901760
      %v1642 = vsub.f32 %v1539, %v1641
      %v1643 = vand.u32 %v1642, 4294901760
      %v1644 = vsub.f32 %v1642, %v1643
      %v1645 = vand.u32 %v1644, 4294901760
      %1646 = vmatpush.msra.mxu0 %v1645
      %v1647 = vand.u32 %v1538, 4294901760
      %v1648 = vsub.f32 %v1538, %v1647
      %v1649 = vand.u32 %v1648, 4294901760
      %v1650 = vsub.f32 %v1648, %v1649
      %v1651 = vand.u32 %v1650, 4294901760
      %1652 = vmatpush.msra.mxu0 %v1651
      %v1653 = vand.u32 %v1537, 4294901760
      %v1654 = vsub.f32 %v1537, %v1653
      %v1655 = vand.u32 %v1654, 4294901760
      %v1656 = vsub.f32 %v1654, %v1655
      %v1657 = vand.u32 %v1656, 4294901760
      %1658 = vmatpush.msra.mxu0 %v1657
      %v1659 = vand.u32 %v1536, 4294901760
      %v1660 = vsub.f32 %v1536, %v1659
      %v1661 = vand.u32 %v1660, 4294901760
      %v1662 = vsub.f32 %v1660, %v1661
      %v1663 = vand.u32 %v1662, 4294901760
      %1664 = vmatpush.msra.mxu0 %v1663
      %v1665 = vand.u32 %v1535, 4294901760
      %v1666 = vsub.f32 %v1535, %v1665
      %v1667 = vand.u32 %v1666, 4294901760
      %v1668 = vsub.f32 %v1666, %v1667
      %v1669 = vand.u32 %v1668, 4294901760
      %1670 = vmatpush.msra.mxu0 %v1669
      %v1671 = vand.u32 %v1534, 4294901760
      %v1672 = vsub.f32 %v1534, %v1671
      %v1673 = vand.u32 %v1672, 4294901760
      %v1674 = vsub.f32 %v1672, %v1673
      %v1675 = vand.u32 %v1674, 4294901760
      %1676 = vmatpush.msra.mxu0 %v1675
      %v1677 = vand.u32 %v1533, 4294901760
      %v1678 = vsub.f32 %v1533, %v1677
      %v1679 = vand.u32 %v1678, 4294901760
      %v1680 = vsub.f32 %v1678, %v1679
      %v1681 = vand.u32 %v1680, 4294901760
      %1682 = vmatpush.msra.mxu0 %v1681
      %v1683 = vand.u32 %v1532, 4294901760
      %v1684 = vsub.f32 %v1532, %v1683
      %v1685 = vand.u32 %v1684, 4294901760
      %v1686 = vsub.f32 %v1684, %v1685
      %v1687 = vand.u32 %v1686, 4294901760
      %1688 = vmatpush.msra.mxu0 %v1687
      %v1689 = vand.u32 %v1531, 4294901760
      %v1690 = vsub.f32 %v1531, %v1689
      %v1691 = vand.u32 %v1690, 4294901760
      %v1692 = vsub.f32 %v1690, %v1691
      %v1693 = vand.u32 %v1692, 4294901760
      %1694 = vmatpush.msra.mxu0 %v1693
      %v1695 = vand.u32 %v1516, 4294901760
      %1696 = vmatmul.f32.gmra.mxu0 %v1695
      %v1697 = vpop.f32.mrf.mxu0
      %v1698 = vadd.f32 %v1597, %v1697
      %1699 = vdwg.mxu0
      %v1700 = vand.u32 %v1546, 4294901760
      %v1701 = vsub.f32 %v1546, %v1700
      %1702 = vmatpush.msra.mxu0 %v1701
      %v1703 = vand.u32 %v1545, 4294901760
      %v1704 = vsub.f32 %v1545, %v1703
      %1705 = vmatpush.msra.mxu0 %v1704
      %v1706 = vand.u32 %v1544, 4294901760
      %v1707 = vsub.f32 %v1544, %v1706
      %1708 = vmatpush.msra.mxu0 %v1707
      %v1709 = vand.u32 %v1543, 4294901760
      %v1710 = vsub.f32 %v1543, %v1709
      %1711 = vmatpush.msra.mxu0 %v1710
      %v1712 = vand.u32 %v1542, 4294901760
      %v1713 = vsub.f32 %v1542, %v1712
      %1714 = vmatpush.msra.mxu0 %v1713
      %v1715 = vand.u32 %v1541, 4294901760
      %v1716 = vsub.f32 %v1541, %v1715
      %1717 = vmatpush.msra.mxu0 %v1716
      %v1718 = vand.u32 %v1540, 4294901760
      %v1719 = vsub.f32 %v1540, %v1718
      %1720 = vmatpush.msra.mxu0 %v1719
      %v1721 = vand.u32 %v1539, 4294901760
      %v1722 = vsub.f32 %v1539, %v1721
      %1723 = vmatpush.msra.mxu0 %v1722
      %v1724 = vand.u32 %v1538, 4294901760
      %v1725 = vsub.f32 %v1538, %v1724
      %1726 = vmatpush.msra.mxu0 %v1725
      %v1727 = vand.u32 %v1537, 4294901760
      %v1728 = vsub.f32 %v1537, %v1727
      %1729 = vmatpush.msra.mxu0 %v1728
      %v1730 = vand.u32 %v1536, 4294901760
      %v1731 = vsub.f32 %v1536, %v1730
      %1732 = vmatpush.msra.mxu0 %v1731
      %v1733 = vand.u32 %v1535, 4294901760
      %v1734 = vsub.f32 %v1535, %v1733
      %1735 = vmatpush.msra.mxu0 %v1734
      %v1736 = vand.u32 %v1534, 4294901760
      %v1737 = vsub.f32 %v1534, %v1736
      %1738 = vmatpush.msra.mxu0 %v1737
      %v1739 = vand.u32 %v1533, 4294901760
      %v1740 = vsub.f32 %v1533, %v1739
      %1741 = vmatpush.msra.mxu0 %v1740
      %v1742 = vand.u32 %v1532, 4294901760
      %v1743 = vsub.f32 %v1532, %v1742
      %1744 = vmatpush.msra.mxu0 %v1743
      %v1745 = vand.u32 %v1531, 4294901760
      %v1746 = vsub.f32 %v1531, %v1745
      %1747 = vmatpush.msra.mxu0 %v1746
      %v1748 = vand.u32 %v1516, 4294901760
      %v1749 = vsub.f32 %v1516, %v1748
      %1750 = vmatmul.f32.gmra.mxu0 %v1749
      %v1751 = vpop.f32.mrf.mxu0
      %v1752 = vadd.f32 %v1698, %v1751
      %1753 = vdwg.mxu0
      %v1754 = vand.u32 %v1546, 4294901760
      %1755 = vmatpush.msra.mxu0 %v1754
      %v1756 = vand.u32 %v1545, 4294901760
      %1757 = vmatpush.msra.mxu0 %v1756
      %v1758 = vand.u32 %v1544, 4294901760
      %1759 = vmatpush.msra.mxu0 %v1758
      %v1760 = vand.u32 %v1543, 4294901760
      %1761 = vmatpush.msra.mxu0 %v1760
      %v1762 = vand.u32 %v1542, 4294901760
      %1763 = vmatpush.msra.mxu0 %v1762
      %v1764 = vand.u32 %v1541, 4294901760
      %1765 = vmatpush.msra.mxu0 %v1764
      %v1766 = vand.u32 %v1540, 4294901760
      %1767 = vmatpush.msra.mxu0 %v1766
      %v1768 = vand.u32 %v1539, 4294901760
      %1769 = vmatpush.msra.mxu0 %v1768
      %v1770 = vand.u32 %v1538, 4294901760
      %1771 = vmatpush.msra.mxu0 %v1770
      %v1772 = vand.u32 %v1537, 4294901760
      %1773 = vmatpush.msra.mxu0 %v1772
      %v1774 = vand.u32 %v1536, 4294901760
      %1775 = vmatpush.msra.mxu0 %v1774
      %v1776 = vand.u32 %v1535, 4294901760
      %1777 = vmatpush.msra.mxu0 %v1776
      %v1778 = vand.u32 %v1534, 4294901760
      %1779 = vmatpush.msra.mxu0 %v1778
      %v1780 = vand.u32 %v1533, 4294901760
      %1781 = vmatpush.msra.mxu0 %v1780
      %v1782 = vand.u32 %v1532, 4294901760
      %1783 = vmatpush.msra.mxu0 %v1782
      %v1784 = vand.u32 %v1531, 4294901760
      %1785 = vmatpush.msra.mxu0 %v1784
      %v1786 = vand.u32 %v1516, 4294901760
      %v1787 = vsub.f32 %v1516, %v1786
      %v1788 = vand.u32 %v1787, 4294901760
      %1789 = vmatmul.f32.gmra.mxu0 %v1788
      %v1790 = vpop.f32.mrf.mxu0
      %v1791 = vadd.f32 %v1752, %v1790
      %1792 = vdwg.mxu0
      %v1793 = vand.u32 %v1546, 4294901760
      %v1794 = vsub.f32 %v1546, %v1793
      %v1795 = vand.u32 %v1794, 4294901760
      %1796 = vmatpush.msra.mxu0 %v1795
      %v1797 = vand.u32 %v1545, 4294901760
      %v1798 = vsub.f32 %v1545, %v1797
      %v1799 = vand.u32 %v1798, 4294901760
      %1800 = vmatpush.msra.mxu0 %v1799
      %v1801 = vand.u32 %v1544, 4294901760
      %v1802 = vsub.f32 %v1544, %v1801
      %v1803 = vand.u32 %v1802, 4294901760
      %1804 = vmatpush.msra.mxu0 %v1803
      %v1805 = vand.u32 %v1543, 4294901760
      %v1806 = vsub.f32 %v1543, %v1805
      %v1807 = vand.u32 %v1806, 4294901760
      %1808 = vmatpush.msra.mxu0 %v1807
      %v1809 = vand.u32 %v1542, 4294901760
      %v1810 = vsub.f32 %v1542, %v1809
      %v1811 = vand.u32 %v1810, 4294901760
      %1812 = vmatpush.msra.mxu0 %v1811
      %v1813 = vand.u32 %v1541, 4294901760
      %v1814 = vsub.f32 %v1541, %v1813
      %v1815 = vand.u32 %v1814, 4294901760
      %1816 = vmatpush.msra.mxu0 %v1815
      %v1817 = vand.u32 %v1540, 4294901760
      %v1818 = vsub.f32 %v1540, %v1817
      %v1819 = vand.u32 %v1818, 4294901760
      %1820 = vmatpush.msra.mxu0 %v1819
      %v1821 = vand.u32 %v1539, 4294901760
      %v1822 = vsub.f32 %v1539, %v1821
      %v1823 = vand.u32 %v1822, 4294901760
      %1824 = vmatpush.msra.mxu0 %v1823
      %v1825 = vand.u32 %v1538, 4294901760
      %v1826 = vsub.f32 %v1538, %v1825
      %v1827 = vand.u32 %v1826, 4294901760
      %1828 = vmatpush.msra.mxu0 %v1827
      %v1829 = vand.u32 %v1537, 4294901760
      %v1830 = vsub.f32 %v1537, %v1829
      %v1831 = vand.u32 %v1830, 4294901760
      %1832 = vmatpush.msra.mxu0 %v1831
      %v1833 = vand.u32 %v1536, 4294901760
      %v1834 = vsub.f32 %v1536, %v1833
      %v1835 = vand.u32 %v1834, 4294901760
      %1836 = vmatpush.msra.mxu0 %v1835
      %v1837 = vand.u32 %v1535, 4294901760
      %v1838 = vsub.f32 %v1535, %v1837
      %v1839 = vand.u32 %v1838, 4294901760
      %1840 = vmatpush.msra.mxu0 %v1839
      %v1841 = vand.u32 %v1534, 4294901760
      %v1842 = vsub.f32 %v1534, %v1841
      %v1843 = vand.u32 %v1842, 4294901760
      %1844 = vmatpush.msra.mxu0 %v1843
      %v1845 = vand.u32 %v1533, 4294901760
      %v1846 = vsub.f32 %v1533, %v1845
      %v1847 = vand.u32 %v1846, 4294901760
      %1848 = vmatpush.msra.mxu0 %v1847
      %v1849 = vand.u32 %v1532, 4294901760
      %v1850 = vsub.f32 %v1532, %v1849
      %v1851 = vand.u32 %v1850, 4294901760
      %1852 = vmatpush.msra.mxu0 %v1851
      %v1853 = vand.u32 %v1531, 4294901760
      %v1854 = vsub.f32 %v1531, %v1853
      %v1855 = vand.u32 %v1854, 4294901760
      %1856 = vmatpush.msra.mxu0 %v1855
      %v1857 = vand.u32 %v1516, 4294901760
      %1858 = vmatmul.f32.gmra.mxu0 %v1857
      %v1859 = vpop.f32.mrf.mxu0
      %v1860 = vadd.f32 %v1791, %v1859
      %1861 = vdwg.mxu0
      %v1862 = vand.u32 %v1546, 4294901760
      %1863 = vmatpush.msra.mxu0 %v1862
      %v1864 = vand.u32 %v1545, 4294901760
      %1865 = vmatpush.msra.mxu0 %v1864
      %v1866 = vand.u32 %v1544, 4294901760
      %1867 = vmatpush.msra.mxu0 %v1866
      %v1868 = vand.u32 %v1543, 4294901760
      %1869 = vmatpush.msra.mxu0 %v1868
      %v1870 = vand.u32 %v1542, 4294901760
      %1871 = vmatpush.msra.mxu0 %v1870
      %v1872 = vand.u32 %v1541, 4294901760
      %1873 = vmatpush.msra.mxu0 %v1872
      %v1874 = vand.u32 %v1540, 4294901760
      %1875 = vmatpush.msra.mxu0 %v1874
      %v1876 = vand.u32 %v1539, 4294901760
      %1877 = vmatpush.msra.mxu0 %v1876
      %v1878 = vand.u32 %v1538, 4294901760
      %1879 = vmatpush.msra.mxu0 %v1878
      %v1880 = vand.u32 %v1537, 4294901760
      %1881 = vmatpush.msra.mxu0 %v1880
      %v1882 = vand.u32 %v1536, 4294901760
      %1883 = vmatpush.msra.mxu0 %v1882
      %v1884 = vand.u32 %v1535, 4294901760
      %1885 = vmatpush.msra.mxu0 %v1884
      %v1886 = vand.u32 %v1534, 4294901760
      %1887 = vmatpush.msra.mxu0 %v1886
      %v1888 = vand.u32 %v1533, 4294901760
      %1889 = vmatpush.msra.mxu0 %v1888
      %v1890 = vand.u32 %v1532, 4294901760
      %1891 = vmatpush.msra.mxu0 %v1890
      %v1892 = vand.u32 %v1531, 4294901760
      %1893 = vmatpush.msra.mxu0 %v1892
      %v1894 = vand.u32 %v1516, 4294901760
      %1895 = vmatmul.f32.gmra.mxu0 %v1894
      %v1896 = vpop.f32.mrf.mxu0
      %v1897 = vadd.f32 %v1860, %v1896
      %1898 = vdwg.mxu0
      %1899 = vmatpush.msra.mxu0 0.0
      %1900 = vmatpush.msra.mxu0 0.0
      %1901 = vmatpush.msra.mxu0 0.0
      %1902 = vmatpush.msra.mxu0 0.0
      %1903 = vmatpush.msra.mxu0 0.0
      %1904 = vmatpush.msra.mxu0 0.0
      %1905 = vmatpush.msra.mxu0 0.0
      %1906 = vmatpush.msra.mxu0 0.0
      %1907 = vmatpush.msra.mxu0 0.0
      %1908 = vmatpush.msra.mxu0 0.0
      %1909 = vmatpush.msra.mxu0 0.0
      %1910 = vmatpush.msra.mxu0 0.0
      %1911 = vmatpush.msra.mxu0 0.0
      %v1912 = vand.u32 %v1556, 4294901760
      %1913 = vmatpush.msra.mxu0 %v1912
      %v1914 = vand.u32 %v1548, 4294901760
      %1915 = vmatpush.msra.mxu0 %v1914
      %v1916 = vand.u32 %v1547, 4294901760
      %1917 = vmatpush.msra.mxu0 %v1916
      %v1918 = vand.u32 %v1553, 4294901760
      %v1919 = vsub.f32 %v1553, %v1918
      %v1920 = vand.u32 %v1919, 4294901760
      %v1921 = vsub.f32 %v1919, %v1920
      %v1922 = vand.u32 %v1921, 4294901760
      %1923 = vmatmul.f32.gmra.mxu0 %v1922
      %v1924 = vpop.f32.mrf.mxu0
      %v1925 = vadd.f32 %v1897, %v1924
      %1926 = vdwg.mxu0
      %1927 = vmatpush.msra.mxu0 0.0
      %1928 = vmatpush.msra.mxu0 0.0
      %1929 = vmatpush.msra.mxu0 0.0
      %1930 = vmatpush.msra.mxu0 0.0
      %1931 = vmatpush.msra.mxu0 0.0
      %1932 = vmatpush.msra.mxu0 0.0
      %1933 = vmatpush.msra.mxu0 0.0
      %1934 = vmatpush.msra.mxu0 0.0
      %1935 = vmatpush.msra.mxu0 0.0
      %1936 = vmatpush.msra.mxu0 0.0
      %1937 = vmatpush.msra.mxu0 0.0
      %1938 = vmatpush.msra.mxu0 0.0
      %1939 = vmatpush.msra.mxu0 0.0
      %v1940 = vand.u32 %v1556, 4294901760
      %v1941 = vsub.f32 %v1556, %v1940
      %v1942 = vand.u32 %v1941, 4294901760
      %v1943 = vsub.f32 %v1941, %v1942
      %v1944 = vand.u32 %v1943, 4294901760
      %1945 = vmatpush.msra.mxu0 %v1944
      %v1946 = vand.u32 %v1548, 4294901760
      %v1947 = vsub.f32 %v1548, %v1946
      %v1948 = vand.u32 %v1947, 4294901760
      %v1949 = vsub.f32 %v1947, %v1948
      %v1950 = vand.u32 %v1949, 4294901760
      %1951 = vmatpush.msra.mxu0 %v1950
      %v1952 = vand.u32 %v1547, 4294901760
      %v1953 = vsub.f32 %v1547, %v1952
      %v1954 = vand.u32 %v1953, 4294901760
      %v1955 = vsub.f32 %v1953, %v1954
      %v1956 = vand.u32 %v1955, 4294901760
      %1957 = vmatpush.msra.mxu0 %v1956
      %v1958 = vand.u32 %v1553, 4294901760
      %1959 = vmatmul.f32.gmra.mxu0 %v1958
      %v1960 = vpop.f32.mrf.mxu0
      %v1961 = vadd.f32 %v1925, %v1960
      %1962 = vdwg.mxu0
      %1963 = vmatpush.msra.mxu0 0.0
      %1964 = vmatpush.msra.mxu0 0.0
      %1965 = vmatpush.msra.mxu0 0.0
      %1966 = vmatpush.msra.mxu0 0.0
      %1967 = vmatpush.msra.mxu0 0.0
      %1968 = vmatpush.msra.mxu0 0.0
      %1969 = vmatpush.msra.mxu0 0.0
      %1970 = vmatpush.msra.mxu0 0.0
      %1971 = vmatpush.msra.mxu0 0.0
      %1972 = vmatpush.msra.mxu0 0.0
      %1973 = vmatpush.msra.mxu0 0.0
      %1974 = vmatpush.msra.mxu0 0.0
      %1975 = vmatpush.msra.mxu0 0.0
      %v1976 = vand.u32 %v1556, 4294901760
      %v1977 = vsub.f32 %v1556, %v1976
      %1978 = vmatpush.msra.mxu0 %v1977
      %v1979 = vand.u32 %v1548, 4294901760
      %v1980 = vsub.f32 %v1548, %v1979
      %1981 = vmatpush.msra.mxu0 %v1980
      %v1982 = vand.u32 %v1547, 4294901760
      %v1983 = vsub.f32 %v1547, %v1982
      %1984 = vmatpush.msra.mxu0 %v1983
      %v1985 = vand.u32 %v1553, 4294901760
      %v1986 = vsub.f32 %v1553, %v1985
      %1987 = vmatmul.f32.gmra.mxu0 %v1986
      %v1988 = vpop.f32.mrf.mxu0
      %v1989 = vadd.f32 %v1961, %v1988
      %1990 = vdwg.mxu0
      %1991 = vmatpush.msra.mxu0 0.0
      %1992 = vmatpush.msra.mxu0 0.0
      %1993 = vmatpush.msra.mxu0 0.0
      %1994 = vmatpush.msra.mxu0 0.0
      %1995 = vmatpush.msra.mxu0 0.0
      %1996 = vmatpush.msra.mxu0 0.0
      %1997 = vmatpush.msra.mxu0 0.0
      %1998 = vmatpush.msra.mxu0 0.0
      %1999 = vmatpush.msra.mxu0 0.0
      %2000 = vmatpush.msra.mxu0 0.0
      %2001 = vmatpush.msra.mxu0 0.0
      %2002 = vmatpush.msra.mxu0 0.0
      %2003 = vmatpush.msra.mxu0 0.0
      %v2004 = vand.u32 %v1556, 4294901760
      %2005 = vmatpush.msra.mxu0 %v2004
      %v2006 = vand.u32 %v1548, 4294901760
      %2007 = vmatpush.msra.mxu0 %v2006
      %v2008 = vand.u32 %v1547, 4294901760
      %2009 = vmatpush.msra.mxu0 %v2008
      %v2010 = vand.u32 %v1553, 4294901760
      %v2011 = vsub.f32 %v1553, %v2010
      %v2012 = vand.u32 %v2011, 4294901760
      %2013 = vmatmul.f32.gmra.mxu0 %v2012
      %v2014 = vpop.f32.mrf.mxu0
      %v2015 = vadd.f32 %v1989, %v2014
      %2016 = vdwg.mxu0
      %2017 = vmatpush.msra.mxu0 0.0
      %2018 = vmatpush.msra.mxu0 0.0
      %2019 = vmatpush.msra.mxu0 0.0
      %2020 = vmatpush.msra.mxu0 0.0
      %2021 = vmatpush.msra.mxu0 0.0
      %2022 = vmatpush.msra.mxu0 0.0
      %2023 = vmatpush.msra.mxu0 0.0
      %2024 = vmatpush.msra.mxu0 0.0
      %2025 = vmatpush.msra.mxu0 0.0
      %2026 = vmatpush.msra.mxu0 0.0
      %2027 = vmatpush.msra.mxu0 0.0
      %2028 = vmatpush.msra.mxu0 0.0
      %2029 = vmatpush.msra.mxu0 0.0
      %v2030 = vand.u32 %v1556, 4294901760
      %v2031 = vsub.f32 %v1556, %v2030
      %v2032 = vand.u32 %v2031, 4294901760
      %2033 = vmatpush.msra.mxu0 %v2032
      %v2034 = vand.u32 %v1548, 4294901760
      %v2035 = vsub.f32 %v1548, %v2034
      %v2036 = vand.u32 %v2035, 4294901760
      %2037 = vmatpush.msra.mxu0 %v2036
      %v2038 = vand.u32 %v1547, 4294901760
      %v2039 = vsub.f32 %v1547, %v2038
      %v2040 = vand.u32 %v2039, 4294901760
      %2041 = vmatpush.msra.mxu0 %v2040
      %v2042 = vand.u32 %v1553, 4294901760
      %2043 = vmatmul.f32.gmra.mxu0 %v2042
      %v2044 = vpop.f32.mrf.mxu0
      %v2045 = vadd.f32 %v2015, %v2044
      %2046 = vdwg.mxu0
      %2047 = vmatpush.msra.mxu0 0.0
      %2048 = vmatpush.msra.mxu0 0.0
      %2049 = vmatpush.msra.mxu0 0.0
      %2050 = vmatpush.msra.mxu0 0.0
      %2051 = vmatpush.msra.mxu0 0.0
      %2052 = vmatpush.msra.mxu0 0.0
      %2053 = vmatpush.msra.mxu0 0.0
      %2054 = vmatpush.msra.mxu0 0.0
      %2055 = vmatpush.msra.mxu0 0.0
      %2056 = vmatpush.msra.mxu0 0.0
      %2057 = vmatpush.msra.mxu0 0.0
      %2058 = vmatpush.msra.mxu0 0.0
      %2059 = vmatpush.msra.mxu0 0.0
      %v2060 = vand.u32 %v1556, 4294901760
      %2061 = vmatpush.msra.mxu0 %v2060
      %v2062 = vand.u32 %v1548, 4294901760
      %2063 = vmatpush.msra.mxu0 %v2062
      %v2064 = vand.u32 %v1547, 4294901760
      %2065 = vmatpush.msra.mxu0 %v2064
      %v2066 = vand.u32 %v1553, 4294901760
      %2067 = vmatmul.f32.gmra.mxu0 %v2066
      %v2068 = vpop.f32.mrf.mxu0
      %v2069 = vadd.f32 %v2045, %v2068
      %2070 = vdwg.mxu0
      %v2071 = vmul.f32 %v2069, 0.5
      %v2072 = vmul.f32 %v2069, 0.70710677
      %v2073 = vand.u32 2147483647, %v2072
      %v2074 = vmul.f32 %v2073, 0.3275911
      %v2075 = vadd.f32 %v2074, 1.0
      %v2076 = vrcp.pop %v2075
      %v2077 = vmul.f32 %v2075, %v2076
      %v2078 = vsub.f32 1.0, %v2077
      %v2079 = vmul.f32 %v2076, %v2078
      %v2080 = vadd.f32 %v2076, %v2079
      %vm2081 = vweird.f32 %v2075
      %vm2082 = vweird.f32 %v2076
      %vm2083 = vmor %vm2081, %vm2082
      %v2084 = vsel %vm2083, %v2076, %v2080
      %v2085 = vand.u32 2147483647, %v2075
      %vm2086 = vcmp.eq.f32.partialorder %v2085, 8.507059e+37
      %v2087 = vand.u32 %v2075, 2147483648
      %v2088 = vor.u32 1.1754944e-38, %v2087
      %v2089 = vsel %vm2086, %v2088, %v2084
      %v2090 = vmul.f32 1.0, %v2089
      %v2091 = vmul.f32 %v2090, 1.0614054
      %v2092 = vadd.f32 %v2091, -1.4531521
      %v2093 = vmul.f32 %v2092, %v2090
      %v2094 = vadd.f32 %v2093, 1.4214138
      %v2095 = vmul.f32 %v2094, %v2090
      %v2096 = vadd.f32 %v2095, -0.28449672
      %v2097 = vmul.f32 %v2096, %v2090
      %v2098 = vadd.f32 %v2097, 0.2548296
      %v2099 = vmul.f32 %v2098, %v2090
      %v2100 = vsub.f32 0.0, %v2073
      %v2101 = vmul.f32 %v2100, %v2073
      %v2102 = vmul.f32 %v2101, 1.442695
      %v2103 = vpow.pop %v2102
      %v2104 = vmul.f32 %v2099, %v2103
      %v2105 = vsub.f32 1.0, %v2104
      %vm2106 = vcmp.ge.f32.partialorder %v2072, 0.0
      %v2107 = vsub.f32 0.0, %v2105
      %v2108 = vsel %vm2106, %v2105, %v2107
      %v2109 = vadd.f32 %v2108, 1.0
      %v2110 = vmul.f32 %v2071, %v2109
      %v2111 = vld [vmem:[%s3 + $0x270] sm:$0xff]
      %v2112 = vld [vmem:[%s3 + $0x280] sm:$0xff]
      %v2113 = vld [vmem:[%s3 + $0x290] sm:$0x3]
      %v2114 = vld [vmem:[%s3 + $0x2a0] ss:$0 sm:$0xff]
      %vm2115 = vcmask 146432
      %v2117 = vsel %vm2115, %v2110, 0
      %v2120 = vsel %vm551, %v2113, 0
      %2122 = vmatpush.msra.mxu0 0.0
      %2123 = vmatpush.msra.mxu0 0.0
      %2124 = vmatpush.msra.mxu0 0.0
      %2125 = vmatpush.msra.mxu0 0.0
      %2126 = vmatpush.msra.mxu0 0.0
      %2127 = vmatpush.msra.mxu0 0.0
      %2128 = vmatpush.msra.mxu0 0.0
      %2129 = vmatpush.msra.mxu0 0.0
      %2130 = vmatpush.msra.mxu0 0.0
      %2131 = vmatpush.msra.mxu0 0.0
      %2132 = vmatpush.msra.mxu0 0.0
      %2133 = vmatpush.msra.mxu0 0.0
      %2134 = vmatpush.msra.mxu0 0.0
      %v2135 = vand.u32 %v2120, 4294901760
      %2136 = vmatpush.msra.mxu0 %v2135
      %v2137 = vand.u32 %v2112, 4294901760
      %2138 = vmatpush.msra.mxu0 %v2137
      %v2139 = vand.u32 %v2111, 4294901760
      %2140 = vmatpush.msra.mxu0 %v2139
      %v2141 = vand.u32 %v2117, 4294901760
      %v2142 = vsub.f32 %v2117, %v2141
      %v2143 = vand.u32 %v2142, 4294901760
      %v2144 = vsub.f32 %v2142, %v2143
      %v2145 = vand.u32 %v2144, 4294901760
      %2146 = vmatmul.f32.gmra.mxu0 %v2145
      %v2147 = vpop.f32.mrf.mxu0
      %v2148 = vadd.f32 %v2114, %v2147
      %2149 = vdwg.mxu0
      %2150 = vmatpush.msra.mxu0 0.0
      %2151 = vmatpush.msra.mxu0 0.0
      %2152 = vmatpush.msra.mxu0 0.0
      %2153 = vmatpush.msra.mxu0 0.0
      %2154 = vmatpush.msra.mxu0 0.0
      %2155 = vmatpush.msra.mxu0 0.0
      %2156 = vmatpush.msra.mxu0 0.0
      %2157 = vmatpush.msra.mxu0 0.0
      %2158 = vmatpush.msra.mxu0 0.0
      %2159 = vmatpush.msra.mxu0 0.0
      %2160 = vmatpush.msra.mxu0 0.0
      %2161 = vmatpush.msra.mxu0 0.0
      %2162 = vmatpush.msra.mxu0 0.0
      %v2163 = vand.u32 %v2120, 4294901760
      %v2164 = vsub.f32 %v2120, %v2163
      %v2165 = vand.u32 %v2164, 4294901760
      %v2166 = vsub.f32 %v2164, %v2165
      %v2167 = vand.u32 %v2166, 4294901760
      %2168 = vmatpush.msra.mxu0 %v2167
      %v2169 = vand.u32 %v2112, 4294901760
      %v2170 = vsub.f32 %v2112, %v2169
      %v2171 = vand.u32 %v2170, 4294901760
      %v2172 = vsub.f32 %v2170, %v2171
      %v2173 = vand.u32 %v2172, 4294901760
      %2174 = vmatpush.msra.mxu0 %v2173
      %v2175 = vand.u32 %v2111, 4294901760
      %v2176 = vsub.f32 %v2111, %v2175
      %v2177 = vand.u32 %v2176, 4294901760
      %v2178 = vsub.f32 %v2176, %v2177
      %v2179 = vand.u32 %v2178, 4294901760
      %2180 = vmatpush.msra.mxu0 %v2179
      %v2181 = vand.u32 %v2117, 4294901760
      %2182 = vmatmul.f32.gmra.mxu0 %v2181
      %v2183 = vpop.f32.mrf.mxu0
      %v2184 = vadd.f32 %v2148, %v2183
      %2185 = vdwg.mxu0
      %2186 = vmatpush.msra.mxu0 0.0
      %2187 = vmatpush.msra.mxu0 0.0
      %2188 = vmatpush.msra.mxu0 0.0
      %2189 = vmatpush.msra.mxu0 0.0
      %2190 = vmatpush.msra.mxu0 0.0
      %2191 = vmatpush.msra.mxu0 0.0
      %2192 = vmatpush.msra.mxu0 0.0
      %2193 = vmatpush.msra.mxu0 0.0
      %2194 = vmatpush.msra.mxu0 0.0
      %2195 = vmatpush.msra.mxu0 0.0
      %2196 = vmatpush.msra.mxu0 0.0
      %2197 = vmatpush.msra.mxu0 0.0
      %2198 = vmatpush.msra.mxu0 0.0
      %v2199 = vand.u32 %v2120, 4294901760
      %v2200 = vsub.f32 %v2120, %v2199
      %2201 = vmatpush.msra.mxu0 %v2200
      %v2202 = vand.u32 %v2112, 4294901760
      %v2203 = vsub.f32 %v2112, %v2202
      %2204 = vmatpush.msra.mxu0 %v2203
      %v2205 = vand.u32 %v2111, 4294901760
      %v2206 = vsub.f32 %v2111, %v2205
      %2207 = vmatpush.msra.mxu0 %v2206
      %v2208 = vand.u32 %v2117, 4294901760
      %v2209 = vsub.f32 %v2117, %v2208
      %2210 = vmatmul.f32.gmra.mxu0 %v2209
      %v2211 = vpop.f32.mrf.mxu0
      %v2212 = vadd.f32 %v2184, %v2211
      %2213 = vdwg.mxu0
      %2214 = vmatpush.msra.mxu0 0.0
      %2215 = vmatpush.msra.mxu0 0.0
      %2216 = vmatpush.msra.mxu0 0.0
      %2217 = vmatpush.msra.mxu0 0.0
      %2218 = vmatpush.msra.mxu0 0.0
      %2219 = vmatpush.msra.mxu0 0.0
      %2220 = vmatpush.msra.mxu0 0.0
      %2221 = vmatpush.msra.mxu0 0.0
      %2222 = vmatpush.msra.mxu0 0.0
      %2223 = vmatpush.msra.mxu0 0.0
      %2224 = vmatpush.msra.mxu0 0.0
      %2225 = vmatpush.msra.mxu0 0.0
      %2226 = vmatpush.msra.mxu0 0.0
      %v2227 = vand.u32 %v2120, 4294901760
      %2228 = vmatpush.msra.mxu0 %v2227
      %v2229 = vand.u32 %v2112, 4294901760
      %2230 = vmatpush.msra.mxu0 %v2229
      %v2231 = vand.u32 %v2111, 4294901760
      %2232 = vmatpush.msra.mxu0 %v2231
      %v2233 = vand.u32 %v2117, 4294901760
      %v2234 = vsub.f32 %v2117, %v2233
      %v2235 = vand.u32 %v2234, 4294901760
      %2236 = vmatmul.f32.gmra.mxu0 %v2235
      %v2237 = vpop.f32.mrf.mxu0
      %v2238 = vadd.f32 %v2212, %v2237
      %2239 = vdwg.mxu0
      %2240 = vmatpush.msra.mxu0 0.0
      %2241 = vmatpush.msra.mxu0 0.0
      %2242 = vmatpush.msra.mxu0 0.0
      %2243 = vmatpush.msra.mxu0 0.0
      %2244 = vmatpush.msra.mxu0 0.0
      %2245 = vmatpush.msra.mxu0 0.0
      %2246 = vmatpush.msra.mxu0 0.0
      %2247 = vmatpush.msra.mxu0 0.0
      %2248 = vmatpush.msra.mxu0 0.0
      %2249 = vmatpush.msra.mxu0 0.0
      %2250 = vmatpush.msra.mxu0 0.0
      %2251 = vmatpush.msra.mxu0 0.0
      %2252 = vmatpush.msra.mxu0 0.0
      %v2253 = vand.u32 %v2120, 4294901760
      %v2254 = vsub.f32 %v2120, %v2253
      %v2255 = vand.u32 %v2254, 4294901760
      %2256 = vmatpush.msra.mxu0 %v2255
      %v2257 = vand.u32 %v2112, 4294901760
      %v2258 = vsub.f32 %v2112, %v2257
      %v2259 = vand.u32 %v2258, 4294901760
      %2260 = vmatpush.msra.mxu0 %v2259
      %v2261 = vand.u32 %v2111, 4294901760
      %v2262 = vsub.f32 %v2111, %v2261
      %v2263 = vand.u32 %v2262, 4294901760
      %2264 = vmatpush.msra.mxu0 %v2263
      %v2265 = vand.u32 %v2117, 4294901760
      %2266 = vmatmul.f32.gmra.mxu0 %v2265
      %v2267 = vpop.f32.mrf.mxu0
      %v2268 = vadd.f32 %v2238, %v2267
      %2269 = vdwg.mxu0
      %2270 = vmatpush.msra.mxu0 0.0
      %2271 = vmatpush.msra.mxu0 0.0
      %2272 = vmatpush.msra.mxu0 0.0
      %2273 = vmatpush.msra.mxu0 0.0
      %2274 = vmatpush.msra.mxu0 0.0
      %2275 = vmatpush.msra.mxu0 0.0
      %2276 = vmatpush.msra.mxu0 0.0
      %2277 = vmatpush.msra.mxu0 0.0
      %2278 = vmatpush.msra.mxu0 0.0
      %2279 = vmatpush.msra.mxu0 0.0
      %2280 = vmatpush.msra.mxu0 0.0
      %2281 = vmatpush.msra.mxu0 0.0
      %2282 = vmatpush.msra.mxu0 0.0
      %v2283 = vand.u32 %v2120, 4294901760
      %2284 = vmatpush.msra.mxu0 %v2283
      %v2285 = vand.u32 %v2112, 4294901760
      %2286 = vmatpush.msra.mxu0 %v2285
      %v2287 = vand.u32 %v2111, 4294901760
      %2288 = vmatpush.msra.mxu0 %v2287
      %v2289 = vand.u32 %v2117, 4294901760
      %2290 = vmatmul.f32.gmra.mxu0 %v2289
      %v2291 = vpop.f32.mrf.mxu0
      %v2292 = vadd.f32 %v2268, %v2291
      %2293 = vdwg.mxu0
      %v2294 = vmul.f32 %v2292, 0.5
      %v2295 = vmul.f32 %v2292, 0.70710677
      %v2296 = vand.u32 2147483647, %v2295
      %v2297 = vmul.f32 %v2296, 0.3275911
      %v2298 = vadd.f32 %v2297, 1.0
      %v2299 = vrcp.pop %v2298
      %v2300 = vmul.f32 %v2298, %v2299
      %v2301 = vsub.f32 1.0, %v2300
      %v2302 = vmul.f32 %v2299, %v2301
      %v2303 = vadd.f32 %v2299, %v2302
      %vm2304 = vweird.f32 %v2298
      %vm2305 = vweird.f32 %v2299
      %vm2306 = vmor %vm2304, %vm2305
      %v2307 = vsel %vm2306, %v2299, %v2303
      %v2308 = vand.u32 2147483647, %v2298
      %vm2309 = vcmp.eq.f32.partialorder %v2308, 8.507059e+37
      %v2310 = vand.u32 %v2298, 2147483648
      %v2311 = vor.u32 1.1754944e-38, %v2310
      %v2312 = vsel %vm2309, %v2311, %v2307
      %v2313 = vmul.f32 1.0, %v2312
      %v2314 = vmul.f32 %v2313, 1.0614054
      %v2315 = vadd.f32 %v2314, -1.4531521
      %v2316 = vmul.f32 %v2315, %v2313
      %v2317 = vadd.f32 %v2316, 1.4214138
      %v2318 = vmul.f32 %v2317, %v2313
      %v2319 = vadd.f32 %v2318, -0.28449672
      %v2320 = vmul.f32 %v2319, %v2313
      %v2321 = vadd.f32 %v2320, 0.2548296
      %v2322 = vmul.f32 %v2321, %v2313
      %v2323 = vsub.f32 0.0, %v2296
      %v2324 = vmul.f32 %v2323, %v2296
      %v2325 = vmul.f32 %v2324, 1.442695
      %v2326 = vpow.pop %v2325
      %v2327 = vmul.f32 %v2322, %v2326
      %v2328 = vsub.f32 1.0, %v2327
      %vm2329 = vcmp.ge.f32.partialorder %v2295, 0.0
      %v2330 = vsub.f32 0.0, %v2328
      %v2331 = vsel %vm2329, %v2328, %v2330
      %v2332 = vadd.f32 %v2331, 1.0
      %v2333 = vmul.f32 %v2294, %v2332
      %v2334 = vld [vmem:[%s3 + $0x2b0] sm:$0xff]
      %v2335 = vld [vmem:[%s3 + $0x2c0] sm:$0x1]
      %v2336 = vld [vmem:[%s3 + $0x2d0] ss:$0 sm:$0xff]
      %vm2337 = vcmask 72704
      %v2339 = vsel %vm2337, %v2333, 0
      %v2342 = vsel %vm505, %v2335, 0
      %2344 = vmatpush.msra.mxu0 0.0
      %2345 = vmatpush.msra.mxu0 0.0
      %2346 = vmatpush.msra.mxu0 0.0
      %2347 = vmatpush.msra.mxu0 0.0
      %2348 = vmatpush.msra.mxu0 0.0
      %2349 = vmatpush.msra.mxu0 0.0
      %2350 = vmatpush.msra.mxu0 0.0
      %2351 = vmatpush.msra.mxu0 0.0
      %2352 = vmatpush.msra.mxu0 0.0
      %2353 = vmatpush.msra.mxu0 0.0
      %2354 = vmatpush.msra.mxu0 0.0
      %2355 = vmatpush.msra.mxu0 0.0
      %2356 = vmatpush.msra.mxu0 0.0
      %2357 = vmatpush.msra.mxu0 0.0
      %v2358 = vand.u32 %v2342, 4294901760
      %2359 = vmatpush.msra.mxu0 %v2358
      %v2360 = vand.u32 %v2334, 4294901760
      %2361 = vmatpush.msra.mxu0 %v2360
      %v2362 = vand.u32 %v2339, 4294901760
      %v2363 = vsub.f32 %v2339, %v2362
      %v2364 = vand.u32 %v2363, 4294901760
      %v2365 = vsub.f32 %v2363, %v2364
      %v2366 = vand.u32 %v2365, 4294901760
      %2367 = vmatmul.f32.gmra.mxu0 %v2366
      %v2368 = vpop.f32.mrf.mxu0
      %v2369 = vadd.f32 %v2336, %v2368
      %2370 = vdwg.mxu0
      %2371 = vmatpush.msra.mxu0 0.0
      %2372 = vmatpush.msra.mxu0 0.0
      %2373 = vmatpush.msra.mxu0 0.0
      %2374 = vmatpush.msra.mxu0 0.0
      %2375 = vmatpush.msra.mxu0 0.0
      %2376 = vmatpush.msra.mxu0 0.0
      %2377 = vmatpush.msra.mxu0 0.0
      %2378 = vmatpush.msra.mxu0 0.0
      %2379 = vmatpush.msra.mxu0 0.0
      %2380 = vmatpush.msra.mxu0 0.0
      %2381 = vmatpush.msra.mxu0 0.0
      %2382 = vmatpush.msra.mxu0 0.0
      %2383 = vmatpush.msra.mxu0 0.0
      %2384 = vmatpush.msra.mxu0 0.0
      %v2385 = vand.u32 %v2342, 4294901760
      %v2386 = vsub.f32 %v2342, %v2385
      %v2387 = vand.u32 %v2386, 4294901760
      %v2388 = vsub.f32 %v2386, %v2387
      %v2389 = vand.u32 %v2388, 4294901760
      %2390 = vmatpush.msra.mxu0 %v2389
      %v2391 = vand.u32 %v2334, 4294901760
      %v2392 = vsub.f32 %v2334, %v2391
      %v2393 = vand.u32 %v2392, 4294901760
      %v2394 = vsub.f32 %v2392, %v2393
      %v2395 = vand.u32 %v2394, 4294901760
      %2396 = vmatpush.msra.mxu0 %v2395
      %v2397 = vand.u32 %v2339, 4294901760
      %2398 = vmatmul.f32.gmra.mxu0 %v2397
      %v2399 = vpop.f32.mrf.mxu0
      %v2400 = vadd.f32 %v2369, %v2399
      %2401 = vdwg.mxu0
      %2402 = vmatpush.msra.mxu0 0.0
      %2403 = vmatpush.msra.mxu0 0.0
      %2404 = vmatpush.msra.mxu0 0.0
      %2405 = vmatpush.msra.mxu0 0.0
      %2406 = vmatpush.msra.mxu0 0.0
      %2407 = vmatpush.msra.mxu0 0.0
      %2408 = vmatpush.msra.mxu0 0.0
      %2409 = vmatpush.msra.mxu0 0.0
      %2410 = vmatpush.msra.mxu0 0.0
      %2411 = vmatpush.msra.mxu0 0.0
      %2412 = vmatpush.msra.mxu0 0.0
      %2413 = vmatpush.msra.mxu0 0.0
      %2414 = vmatpush.msra.mxu0 0.0
      %2415 = vmatpush.msra.mxu0 0.0
      %v2416 = vand.u32 %v2342, 4294901760
      %v2417 = vsub.f32 %v2342, %v2416
      %2418 = vmatpush.msra.mxu0 %v2417
      %v2419 = vand.u32 %v2334, 4294901760
      %v2420 = vsub.f32 %v2334, %v2419
      %2421 = vmatpush.msra.mxu0 %v2420
      %v2422 = vand.u32 %v2339, 4294901760
      %v2423 = vsub.f32 %v2339, %v2422
      %2424 = vmatmul.f32.gmra.mxu0 %v2423
      %v2425 = vpop.f32.mrf.mxu0
      %v2426 = vadd.f32 %v2400, %v2425
      %2427 = vdwg.mxu0
      %2428 = vmatpush.msra.mxu0 0.0
      %2429 = vmatpush.msra.mxu0 0.0
      %2430 = vmatpush.msra.mxu0 0.0
      %2431 = vmatpush.msra.mxu0 0.0
      %2432 = vmatpush.msra.mxu0 0.0
      %2433 = vmatpush.msra.mxu0 0.0
      %2434 = vmatpush.msra.mxu0 0.0
      %2435 = vmatpush.msra.mxu0 0.0
      %2436 = vmatpush.msra.mxu0 0.0
      %2437 = vmatpush.msra.mxu0 0.0
      %2438 = vmatpush.msra.mxu0 0.0
      %2439 = vmatpush.msra.mxu0 0.0
      %2440 = vmatpush.msra.mxu0 0.0
      %2441 = vmatpush.msra.mxu0 0.0
      %v2442 = vand.u32 %v2342, 4294901760
      %2443 = vmatpush.msra.mxu0 %v2442
      %v2444 = vand.u32 %v2334, 4294901760
      %2445 = vmatpush.msra.mxu0 %v2444
      %v2446 = vand.u32 %v2339, 4294901760
      %v2447 = vsub.f32 %v2339, %v2446
      %v2448 = vand.u32 %v2447, 4294901760
      %2449 = vmatmul.f32.gmra.mxu0 %v2448
      %v2450 = vpop.f32.mrf.mxu0
      %v2451 = vadd.f32 %v2426, %v2450
      %2452 = vdwg.mxu0
      %2453 = vmatpush.msra.mxu0 0.0
      %2454 = vmatpush.msra.mxu0 0.0
      %2455 = vmatpush.msra.mxu0 0.0
      %2456 = vmatpush.msra.mxu0 0.0
      %2457 = vmatpush.msra.mxu0 0.0
      %2458 = vmatpush.msra.mxu0 0.0
      %2459 = vmatpush.msra.mxu0 0.0
      %2460 = vmatpush.msra.mxu0 0.0
      %2461 = vmatpush.msra.mxu0 0.0
      %2462 = vmatpush.msra.mxu0 0.0
      %2463 = vmatpush.msra.mxu0 0.0
      %2464 = vmatpush.msra.mxu0 0.0
      %2465 = vmatpush.msra.mxu0 0.0
      %2466 = vmatpush.msra.mxu0 0.0
      %v2467 = vand.u32 %v2342, 4294901760
      %v2468 = vsub.f32 %v2342, %v2467
      %v2469 = vand.u32 %v2468, 4294901760
      %2470 = vmatpush.msra.mxu0 %v2469
      %v2471 = vand.u32 %v2334, 4294901760
      %v2472 = vsub.f32 %v2334, %v2471
      %v2473 = vand.u32 %v2472, 4294901760
      %2474 = vmatpush.msra.mxu0 %v2473
      %v2475 = vand.u32 %v2339, 4294901760
      %2476 = vmatmul.f32.gmra.mxu0 %v2475
      %v2477 = vpop.f32.mrf.mxu0
      %v2478 = vadd.f32 %v2451, %v2477
      %2479 = vdwg.mxu0
      %2480 = vmatpush.msra.mxu0 0.0
      %2481 = vmatpush.msra.mxu0 0.0
      %2482 = vmatpush.msra.mxu0 0.0
      %2483 = vmatpush.msra.mxu0 0.0
      %2484 = vmatpush.msra.mxu0 0.0
      %2485 = vmatpush.msra.mxu0 0.0
      %2486 = vmatpush.msra.mxu0 0.0
      %2487 = vmatpush.msra.mxu0 0.0
      %2488 = vmatpush.msra.mxu0 0.0
      %2489 = vmatpush.msra.mxu0 0.0
      %2490 = vmatpush.msra.mxu0 0.0
      %2491 = vmatpush.msra.mxu0 0.0
      %2492 = vmatpush.msra.mxu0 0.0
      %2493 = vmatpush.msra.mxu0 0.0
      %v2494 = vand.u32 %v2342, 4294901760
      %2495 = vmatpush.msra.mxu0 %v2494
      %v2496 = vand.u32 %v2334, 4294901760
      %2497 = vmatpush.msra.mxu0 %v2496
      %v2498 = vand.u32 %v2339, 4294901760
      %2499 = vmatmul.f32.gmra.mxu0 %v2498
      %v2500 = vpop.f32.mrf.mxu0
      %v2501 = vadd.f32 %v2478, %v2500
      %2502 = vdwg.mxu0
      %vm2503 = vcmask 8192
      %2504 = vst.msk [vmem:[%s209] sm:$0x1] %vm2503, %v2501
      %p2505 = scmp.lt.s32.totalorder %s15, 1
      %s2506 = scalar_select %p2505, %s15, 1
      %s2507 = scalar_lea.vmem %s4, %s2506
      // Predicated region
      $region37: #{forward.1} parent=35 // pred_check
        %p2508 = pneg %p127
      $region38: #{forward.1} parent=35 // pred_check_branch
        %2510 = sbr.rel (%p2508) target = $region40
      $region39: #{forward.1} parent=35 // pred_region
        _
      $region40: #{forward.1} parent=35 // pred_fallthru
        _
    $region36: #{forward.1} parent=5 // pred_fallthru
      _
    %p2511 = scmp.le.s32.totalorder 2, %s10
    // Predicated region
    $region41: #{forward.1} parent=5 // pred_check
      %p2512 = pneg %p2511
    $region42: #{forward.1} parent=5 // pred_check_branch
      %2514 = sbr.rel (%p2512) target = $region44
    $region43: #{forward.1} parent=5 // pred_region
      %s2515 = ssub.s32 %s10, 2
      // Predicated region
      $region45: #{forward.1} parent=43 // pred_check
        %p2516 = pneg %p133
      $region46: #{forward.1} parent=43 // pred_check_branch
        %2518 = sbr.rel (%p2516) target = $region48
      $region47: #{forward.1} parent=43 // pred_region
        %p2519 = scmp.lt.s32.totalorder %s16, 1
        %s2520 = scalar_select %p2519, %s16, 1
        %s2521 = scalar_lea.vmem %s4, %s2520
      $region48: #{forward.1} parent=43 // pred_fallthru
        _
    $region44: #{forward.1} parent=5 // pred_fallthru
      _
  $region6: #{forward.1} parent=0 // loop_footer
    %s14 = sadd.s32 1, %s10
  $region7: #{forward.1} parent=0 // loop_footer_branch
    %9 = sbr.rel target = $region3
  $region8: #{forward.1} parent=0 // loop_exit
    _

</llo_original>
